<compile_context>
chip_gen: v6e
topology: v6e:2x2x1
jax: 0.10.0
libtpu: 0.0.40
codegen_flags: <defaults>
</compile_context>

<pallas_src>
import functools

import jax
import jax.numpy as jnp
from jax.experimental import pallas as pl
from jax.experimental.pallas import tpu as pltpu

# --------------------------- config (small stand-in sizes) -------------------
IMG_SIZE        = 32                    # input H = W
DOWN_F          = 4                     # VAE downsample factor -> 8x8 latent
LAT             = IMG_SIZE // DOWN_F    # 8
P_ROWS          = LAT * LAT             # 64 latent pixels per image (sublane-aligned)
K_PATCH         = 3 * DOWN_F * DOWN_F   # 48 (flattened patch)
D_HID           = 128                   # hidden width (lane-dense)
D_MLP           = 256
N_BLOCKS        = 2                     # pointwise residual blocks (ResnetBlock stand-ins)
Z_CH            = 4                     # latent channels
TIMESTEPS       = 1000
LINEAR_START    = 1e-4
LINEAR_END      = 2e-2
MAX_NOISE_LEVEL = 250
OUT_SIZE        = 16                    # stand-in for 64 (integer multiple of LAT)
SCALE_FACTOR    = 0.18215


# ------------------------------ fused Pallas kernel --------------------------
def _fused_encoder_kernel(patch_ref, eps1_ref, eps2_ref, a_ref, s_ref,
                          wp_ref, bp_ref, *rest):
    # rest = [ln_g, ln_b, w1, b1, w2, b2] * N_BLOCKS
    #        + [lnf_g, lnf_b, w_mean, b_mean, w_logvar, b_logvar]  + [o_ref]
    o_ref = rest[-1]
    wr = rest[:-1]

    def ln(x, g, b):                                   # f32 statistics
        mu = jnp.mean(x, axis=-1, keepdims=True)
        var = jnp.mean(jnp.square(x - mu), axis=-1, keepdims=True)
        return (x - mu) * jax.lax.rsqrt(var + 1e-5) * g + b

    # patch-embedding conv (kernel=stride=DOWN_F) as one MXU matmul, bf16 in / f32 acc
    h = jnp.dot(patch_ref[...].astype(jnp.bfloat16), wp_ref[...],
                preferred_element_type=jnp.float32) + bp_ref[...]

    # pointwise residual blocks (norm -> expand -> SiLU -> project -> residual)
    for i in range(N_BLOCKS):
        g_r, b_r, w1_r, b1_r, w2_r, b2_r = wr[6 * i: 6 * i + 6]
        y = ln(h, g_r[...], b_r[...])
        y = jnp.dot(y.astype(jnp.bfloat16), w1_r[...],
                    preferred_element_type=jnp.float32) + b1_r[...]
        y = y * jax.nn.sigmoid(y)                      # SiLU / swish
        y = jnp.dot(y.astype(jnp.bfloat16), w2_r[...],
                    preferred_element_type=jnp.float32) + b2_r[...]
        h = h + y

    lnf_g, lnf_b, wm_r, bm_r, wl_r, bl_r = wr[6 * N_BLOCKS:]
    y = ln(h, lnf_g[...], lnf_b[...])
    y = y * jax.nn.sigmoid(y)

    # conv_out + quant_conv stand-in: project to the 2*Z_CH moments (mean, logvar)
    mean = jnp.dot(y.astype(jnp.bfloat16), wm_r[...],
                   preferred_element_type=jnp.float32) + bm_r[...]
    logvar = jnp.dot(y.astype(jnp.bfloat16), wl_r[...],
                     preferred_element_type=jnp.float32) + bl_r[...]

    # DiagonalGaussianDistribution.sample()
    logvar = jnp.clip(logvar, -30.0, 20.0)
    z = mean + jnp.exp(0.5 * logvar) * eps1_ref[...]

    # z * scale_factor, then q_sample with per-batch schedule coefficients
    z = z * SCALE_FACTOR
    z = a_ref[...] * z + s_ref[...] * eps2_ref[...]
    o_ref[...] = z


def _encode_qsample(patches, eps1, eps2, a_rows, s_rows, weights, batch):
    def full(arr):     # whole array resident in VMEM, constant block index
        return pl.BlockSpec(arr.shape, lambda b, _n=arr.ndim: (0,) * _n)

    def row(arr):      # per-batch row slab of P_ROWS rows
        return pl.BlockSpec((P_ROWS,) + arr.shape[1:],
                            lambda b, _n=arr.ndim: (b,) + (0,) * (_n - 1))

    in_specs = ([row(patches), row(eps1), row(eps2), row(a_rows), row(s_rows)]
                + [full(w) for w in weights])
    out_spec = pl.BlockSpec((P_ROWS, Z_CH), lambda b: (b, 0))

    return pl.pallas_call(
        _fused_encoder_kernel,
        out_shape=jax.ShapeDtypeStruct((batch * P_ROWS, Z_CH), jnp.float32),
        grid=(batch,),
        in_specs=in_specs,
        out_specs=out_spec,
        compiler_params=pltpu.CompilerParams(dimension_semantics=("parallel",)),
    )(patches, eps1, eps2, a_rows, s_rows, *weights)


# ------------------------------ pure-JAX reference ---------------------------
def _reference_rows(patches, eps1, eps2, a_rows, s_rows, weights):
    def ln(x, g, b):
        mu = jnp.mean(x, axis=-1, keepdims=True)
        var = jnp.mean(jnp.square(x - mu), axis=-1, keepdims=True)
        return (x - mu) * jax.lax.rsqrt(var + 1e-5) * g + b

    wp, bp = weights[0], weights[1]
    h = jnp.dot(patches.astype(jnp.bfloat16), wp,
                preferred_element_type=jnp.float32) + bp
    idx = 2
    for _ in range(N_BLOCKS):
        g, b, w1, b1, w2, b2 = weights[idx:idx + 6]; idx += 6
        y = ln(h, g, b)
        y = jnp.dot(y.astype(jnp.bfloat16), w1, preferred_element_type=jnp.float32) + b1
        y = y * jax.nn.sigmoid(y)
        y = jnp.dot(y.astype(jnp.bfloat16), w2, preferred_element_type=jnp.float32) + b2
        h = h + y
    gf, bf, wm, bm, wl, bl = weights[idx:idx + 6]
    y = ln(h, gf, bf)
    y = y * jax.nn.sigmoid(y)
    mean = jnp.dot(y.astype(jnp.bfloat16), wm, preferred_element_type=jnp.float32) + bm
    logvar = jnp.clip(
        jnp.dot(y.astype(jnp.bfloat16), wl, preferred_element_type=jnp.float32) + bl,
        -30.0, 20.0)
    z = mean + jnp.exp(0.5 * logvar) * eps1
    z = z * SCALE_FACTOR
    return a_rows * z + s_rows * eps2


# -------------------------- parameters & schedule buffers --------------------
def init_params(key):
    cnt = [0]

    def w(shape, scale=0.05):
        cnt[0] += 1
        k = jax.random.fold_in(key, cnt[0])
        return (scale * jax.random.normal(k, shape, jnp.float32)).astype(jnp.bfloat16)

    weights = [w((K_PATCH, D_HID)),                       # patch-embed conv weight
               jnp.zeros((1, D_HID), jnp.float32)]        # patch-embed bias
    for _ in range(N_BLOCKS):
        weights += [
            jnp.ones((1, D_HID), jnp.float32),            # norm gamma
            jnp.zeros((1, D_HID), jnp.float32),           # norm beta
            w((D_HID, D_MLP)), jnp.zeros((1, D_MLP), jnp.float32),
            w((D_MLP, D_HID)), jnp.zeros((1, D_HID), jnp.float32),
        ]
    weights += [
        jnp.ones((1, D_HID), jnp.float32), jnp.zeros((1, D_HID), jnp.float32),
        w((D_HID, Z_CH)), jnp.zeros((1, Z_CH), jnp.float32),   # mean head
        w((D_HID, Z_CH)), jnp.zeros((1, Z_CH), jnp.float32),   # logvar head
    ]

    # register_schedule(beta_schedule='linear', ...) buffers
    betas = jnp.linspace(LINEAR_START ** 0.5, LINEAR_END ** 0.5, TIMESTEPS,
                         dtype=jnp.float32) ** 2
    alphas_cumprod = jnp.cumprod(1.0 - betas)
    return {
        "weights": weights,
        "sqrt_alphas_cumprod": jnp.sqrt(alphas_cumprod),
        "sqrt_one_minus_alphas_cumprod": jnp.sqrt(1.0 - alphas_cumprod),
    }


# ---------------------------------- forward -----------------------------------
def low_scale_encoder_forward(params, x, rng, use_pallas=True):
    B, C, H, W = x.shape
    k_t, k_e1, k_e2 = jax.random.split(rng, 3)

    # patchify (strided-conv input reorg; pure data movement, XLA glue)
    xp = x.reshape(B, C, LAT, DOWN_F, LAT, DOWN_F)
    xp = xp.transpose(0, 2, 4, 1, 3, 5).reshape(B * P_ROWS, K_PATCH)

    # forward() stochastic bits (torch.randint / randn_like -> jax.random)
    noise_level = jax.random.randint(k_t, (B,), 0, MAX_NOISE_LEVEL)
    eps_sample = jax.random.normal(k_e1, (B * P_ROWS, Z_CH), jnp.float32)
    eps_qsample = jax.random.normal(k_e2, (B * P_ROWS, Z_CH), jnp.float32)

    # extract_into_tensor: per-batch schedule coefficients (tiny gather)
    a_t = jnp.take(params["sqrt_alphas_cumprod"], noise_level)
    s_t = jnp.take(params["sqrt_one_minus_alphas_cumprod"], noise_level)
    a_rows = jnp.repeat(a_t, P_ROWS)[:, None]             # [B*P_ROWS, 1]
    s_rows = jnp.repeat(s_t, P_ROWS)[:, None]

    if use_pallas:
        z_rows = _encode_qsample(xp, eps_sample, eps_qsample, a_rows, s_rows,
                                 params["weights"], B)
    else:
        z_rows = _reference_rows(xp, eps_sample, eps_qsample, a_rows, s_rows,
                                 params["weights"])

    # rows -> NCHW latent
    z = z_rows.reshape(B, LAT, LAT, Z_CH).transpose(0, 3, 1, 2)

    # F.interpolate(size=out_size, mode='nearest'): integer pixel replication (glue)
    r = OUT_SIZE // LAT
    z = jnp.repeat(jnp.repeat(z, r, axis=2), r, axis=3)
    return z, noise_level


# ------------------------------------- main ------------------------------------
if __name__ == "__main__":
    key = jax.random.PRNGKey(0)
    pkey, xkey, fkey = jax.random.split(key, 3)
    params = init_params(pkey)

    x = jax.random.uniform(xkey, (2, 3, IMG_SIZE, IMG_SIZE), dtype=jnp.float32,
                           minval=-1.0, maxval=1.0)

    fwd_pallas = jax.jit(functools.partial(low_scale_encoder_forward, use_pallas=True))
    fwd_ref = jax.jit(functools.partial(low_scale_encoder_forward, use_pallas=False))

    z, noise_level = fwd_pallas(params, x, fkey)
    z = jax.block_until_ready(z)
    noise_level = jax.block_until_ready(noise_level)

    assert z.shape == (2, Z_CH, OUT_SIZE, OUT_SIZE), z.shape
    assert noise_level.shape == (2,), noise_level.shape
    assert bool(jnp.all(jnp.isfinite(z)))

    # correctness vs pure-JAX reference (same rng, same weights)
    z_ref, nl_ref = fwd_ref(params, x, fkey)
    z_ref = jax.block_until_ready(z_ref)
    assert bool(jnp.all(noise_level == nl_ref))
    assert bool(jnp.allclose(z, z_ref, atol=2e-2, rtol=2e-2))

    print("KERNEL_OK")
</pallas_src>

<mosaic_0001>
module attributes {stable_mosaic.version = 11 : i64} {
  func.func @_fused_encoder_kernel(%arg0: i32, %arg1: memref<64x48xf32, #tpu.memory_space<vmem>>, %arg2: memref<64x4xf32, #tpu.memory_space<vmem>>, %arg3: memref<64x4xf32, #tpu.memory_space<vmem>>, %arg4: memref<64x1xf32, #tpu.memory_space<vmem>>, %arg5: memref<64x1xf32, #tpu.memory_space<vmem>>, %arg6: memref<48x128xbf16, #tpu.memory_space<vmem>>, %arg7: memref<1x128xf32, #tpu.memory_space<vmem>>, %arg8: memref<1x128xf32, #tpu.memory_space<vmem>>, %arg9: memref<1x128xf32, #tpu.memory_space<vmem>>, %arg10: memref<128x256xbf16, #tpu.memory_space<vmem>>, %arg11: memref<1x256xf32, #tpu.memory_space<vmem>>, %arg12: memref<256x128xbf16, #tpu.memory_space<vmem>>, %arg13: memref<1x128xf32, #tpu.memory_space<vmem>>, %arg14: memref<1x128xf32, #tpu.memory_space<vmem>>, %arg15: memref<1x128xf32, #tpu.memory_space<vmem>>, %arg16: memref<128x256xbf16, #tpu.memory_space<vmem>>, %arg17: memref<1x256xf32, #tpu.memory_space<vmem>>, %arg18: memref<256x128xbf16, #tpu.memory_space<vmem>>, %arg19: memref<1x128xf32, #tpu.memory_space<vmem>>, %arg20: memref<1x128xf32, #tpu.memory_space<vmem>>, %arg21: memref<1x128xf32, #tpu.memory_space<vmem>>, %arg22: memref<128x4xbf16, #tpu.memory_space<vmem>>, %arg23: memref<1x4xf32, #tpu.memory_space<vmem>>, %arg24: memref<128x4xbf16, #tpu.memory_space<vmem>>, %arg25: memref<1x4xf32, #tpu.memory_space<vmem>>, %arg26: memref<64x4xf32, #tpu.memory_space<vmem>>) attributes {dimension_semantics = [#tpu.dimension_semantics<parallel>], iteration_bounds = array<i64: 2>, scalar_prefetch = 0 : i64, scratch_operands = 0 : i64, tpu.core_type = #tpu.core_type<tc>, window_params = [{transform_indices = @transform_0, window_bounds = array<i64: 64, 48>}, {transform_indices = @transform_1, window_bounds = array<i64: 64, 4>}, {transform_indices = @transform_2, window_bounds = array<i64: 64, 4>}, {transform_indices = @transform_3, window_bounds = array<i64: 64, 1>}, {transform_indices = @transform_4, window_bounds = array<i64: 64, 1>}, {pipeline_mode = #tpu.pipeline_mode<synchronous>, transform_indices = @transform_5, window_bounds = array<i64: 48, 128>}, {pipeline_mode = #tpu.pipeline_mode<synchronous>, transform_indices = @transform_6, window_bounds = array<i64: 1, 128>}, {pipeline_mode = #tpu.pipeline_mode<synchronous>, transform_indices = @transform_7, window_bounds = array<i64: 1, 128>}, {pipeline_mode = #tpu.pipeline_mode<synchronous>, transform_indices = @transform_8, window_bounds = array<i64: 1, 128>}, {pipeline_mode = #tpu.pipeline_mode<synchronous>, transform_indices = @transform_9, window_bounds = array<i64: 128, 256>}, {pipeline_mode = #tpu.pipeline_mode<synchronous>, transform_indices = @transform_10, window_bounds = array<i64: 1, 256>}, {pipeline_mode = #tpu.pipeline_mode<synchronous>, transform_indices = @transform_11, window_bounds = array<i64: 256, 128>}, {pipeline_mode = #tpu.pipeline_mode<synchronous>, transform_indices = @transform_12, window_bounds = array<i64: 1, 128>}, {pipeline_mode = #tpu.pipeline_mode<synchronous>, transform_indices = @transform_13, window_bounds = array<i64: 1, 128>}, {pipeline_mode = #tpu.pipeline_mode<synchronous>, transform_indices = @transform_14, window_bounds = array<i64: 1, 128>}, {pipeline_mode = #tpu.pipeline_mode<synchronous>, transform_indices = @transform_15, window_bounds = array<i64: 128, 256>}, {pipeline_mode = #tpu.pipeline_mode<synchronous>, transform_indices = @transform_16, window_bounds = array<i64: 1, 256>}, {pipeline_mode = #tpu.pipeline_mode<synchronous>, transform_indices = @transform_17, window_bounds = array<i64: 256, 128>}, {pipeline_mode = #tpu.pipeline_mode<synchronous>, transform_indices = @transform_18, window_bounds = array<i64: 1, 128>}, {pipeline_mode = #tpu.pipeline_mode<synchronous>, transform_indices = @transform_19, window_bounds = array<i64: 1, 128>}, {pipeline_mode = #tpu.pipeline_mode<synchronous>, transform_indices = @transform_20, window_bounds = array<i64: 1, 128>}, {pipeline_mode = #tpu.pipeline_mode<synchronous>, transform_indices = @transform_21, window_bounds = array<i64: 128, 4>}, {pipeline_mode = #tpu.pipeline_mode<synchronous>, transform_indices = @transform_22, window_bounds = array<i64: 1, 4>}, {pipeline_mode = #tpu.pipeline_mode<synchronous>, transform_indices = @transform_23, window_bounds = array<i64: 128, 4>}, {pipeline_mode = #tpu.pipeline_mode<synchronous>, transform_indices = @transform_24, window_bounds = array<i64: 1, 4>}, {transform_indices = @transform_25, window_bounds = array<i64: 64, 4>}]} {
    %c0 = arith.constant 0 : index
    %c0_0 = arith.constant 0 : index
    %0 = vector.load %arg1[%c0, %c0_0] : memref<64x48xf32, #tpu.memory_space<vmem>>, vector<64x48xf32>
    %1 = arith.truncf %0 : vector<64x48xf32> to vector<64x48xbf16>
    %c0_1 = arith.constant 0 : index
    %c0_2 = arith.constant 0 : index
    %2 = vector.load %arg6[%c0_1, %c0_2] : memref<48x128xbf16, #tpu.memory_space<vmem>>, vector<48x128xbf16>
    %cst = arith.constant dense<0.000000e+00> : vector<64x128xf32>
    %3 = tpu.matmul %1, %2, %cst {dimension_numbers = #tpu.dot_dimension_numbers<[1], [0], [0], [1], [0, 0, 1, 1], [], []>} : vector<64x48xbf16>, vector<48x128xbf16>, vector<64x128xf32> -> vector<64x128xf32>
    %c0_3 = arith.constant 0 : index
    %c0_4 = arith.constant 0 : index
    %4 = vector.load %arg7[%c0_3, %c0_4] : memref<1x128xf32, #tpu.memory_space<vmem>>, vector<1x128xf32>
    %5 = vector.broadcast %4 : vector<1x128xf32> to vector<64x128xf32>
    %6 = arith.addf %3, %5 : vector<64x128xf32>
    %c0_5 = arith.constant 0 : index
    %c0_6 = arith.constant 0 : index
    %7 = vector.load %arg8[%c0_5, %c0_6] : memref<1x128xf32, #tpu.memory_space<vmem>>, vector<1x128xf32>
    %c0_7 = arith.constant 0 : index
    %c0_8 = arith.constant 0 : index
    %8 = vector.load %arg9[%c0_7, %c0_8] : memref<1x128xf32, #tpu.memory_space<vmem>>, vector<1x128xf32>
    %cst_9 = arith.constant dense<0.000000e+00> : vector<64xf32>
    %9 = vector.multi_reduction <add>, %6, %cst_9 [1] : vector<64x128xf32> to vector<64xf32>
    %10 = vector.shape_cast %9 : vector<64xf32> to vector<64x1xf32>
    %cst_10 = arith.constant 1.280000e+02 : f32
    %11 = vector.broadcast %cst_10 : f32 to vector<64x1xf32>
    %12 = arith.divf %10, %11 : vector<64x1xf32>
    %13 = vector.broadcast %12 : vector<64x1xf32> to vector<64x128xf32>
    %14 = arith.subf %6, %13 : vector<64x128xf32>
    %15 = arith.mulf %14, %14 : vector<64x128xf32>
    %cst_11 = arith.constant dense<0.000000e+00> : vector<64xf32>
    %16 = vector.multi_reduction <add>, %15, %cst_11 [1] : vector<64x128xf32> to vector<64xf32>
    %17 = vector.shape_cast %16 : vector<64xf32> to vector<64x1xf32>
    %cst_12 = arith.constant 1.280000e+02 : f32
    %18 = vector.broadcast %cst_12 : f32 to vector<64x1xf32>
    %19 = arith.divf %17, %18 : vector<64x1xf32>
    %20 = vector.broadcast %12 : vector<64x1xf32> to vector<64x128xf32>
    %21 = arith.subf %6, %20 : vector<64x128xf32>
    %cst_13 = arith.constant 9.99999974E-6 : f32
    %22 = vector.broadcast %cst_13 : f32 to vector<64x1xf32>
    %23 = arith.addf %19, %22 : vector<64x1xf32>
    %24 = math.rsqrt %23 : vector<64x1xf32>
    %25 = vector.broadcast %24 : vector<64x1xf32> to vector<64x128xf32>
    %26 = arith.mulf %21, %25 : vector<64x128xf32>
    %27 = vector.broadcast %7 : vector<1x128xf32> to vector<64x128xf32>
    %28 = arith.mulf %26, %27 : vector<64x128xf32>
    %29 = vector.broadcast %8 : vector<1x128xf32> to vector<64x128xf32>
    %30 = arith.addf %28, %29 : vector<64x128xf32>
    %31 = arith.truncf %30 : vector<64x128xf32> to vector<64x128xbf16>
    %c0_14 = arith.constant 0 : index
    %c0_15 = arith.constant 0 : index
    %32 = vector.load %arg10[%c0_14, %c0_15] : memref<128x256xbf16, #tpu.memory_space<vmem>>, vector<128x256xbf16>
    %cst_16 = arith.constant dense<0.000000e+00> : vector<64x256xf32>
    %33 = tpu.matmul %31, %32, %cst_16 {dimension_numbers = #tpu.dot_dimension_numbers<[1], [0], [0], [1], [0, 0, 1, 1], [], []>} : vector<64x128xbf16>, vector<128x256xbf16>, vector<64x256xf32> -> vector<64x256xf32>
    %c0_17 = arith.constant 0 : index
    %c0_18 = arith.constant 0 : index
    %34 = vector.load %arg11[%c0_17, %c0_18] : memref<1x256xf32, #tpu.memory_space<vmem>>, vector<1x256xf32>
    %35 = vector.broadcast %34 : vector<1x256xf32> to vector<64x256xf32>
    %36 = arith.addf %33, %35 : vector<64x256xf32>
    %37 = arith.negf %36 : vector<64x256xf32>
    %38 = math.exp %37 : vector<64x256xf32>
    %cst_19 = arith.constant 1.000000e+00 : f32
    %39 = vector.broadcast %cst_19 : f32 to vector<64x256xf32>
    %40 = arith.addf %39, %38 : vector<64x256xf32>
    %41 = arith.divf %39, %40 : vector<64x256xf32>
    %42 = arith.mulf %36, %41 : vector<64x256xf32>
    %43 = arith.truncf %42 : vector<64x256xf32> to vector<64x256xbf16>
    %c0_20 = arith.constant 0 : index
    %c0_21 = arith.constant 0 : index
    %44 = vector.load %arg12[%c0_20, %c0_21] : memref<256x128xbf16, #tpu.memory_space<vmem>>, vector<256x128xbf16>
    %cst_22 = arith.constant dense<0.000000e+00> : vector<64x128xf32>
    %45 = tpu.matmul %43, %44, %cst_22 {dimension_numbers = #tpu.dot_dimension_numbers<[1], [0], [0], [1], [0, 0, 1, 1], [], []>} : vector<64x256xbf16>, vector<256x128xbf16>, vector<64x128xf32> -> vector<64x128xf32>
    %c0_23 = arith.constant 0 : index
    %c0_24 = arith.constant 0 : index
    %46 = vector.load %arg13[%c0_23, %c0_24] : memref<1x128xf32, #tpu.memory_space<vmem>>, vector<1x128xf32>
    %47 = vector.broadcast %46 : vector<1x128xf32> to vector<64x128xf32>
    %48 = arith.addf %45, %47 : vector<64x128xf32>
    %49 = arith.addf %6, %48 : vector<64x128xf32>
    %c0_25 = arith.constant 0 : index
    %c0_26 = arith.constant 0 : index
    %50 = vector.load %arg14[%c0_25, %c0_26] : memref<1x128xf32, #tpu.memory_space<vmem>>, vector<1x128xf32>
    %c0_27 = arith.constant 0 : index
    %c0_28 = arith.constant 0 : index
    %51 = vector.load %arg15[%c0_27, %c0_28] : memref<1x128xf32, #tpu.memory_space<vmem>>, vector<1x128xf32>
    %cst_29 = arith.constant dense<0.000000e+00> : vector<64xf32>
    %52 = vector.multi_reduction <add>, %49, %cst_29 [1] : vector<64x128xf32> to vector<64xf32>
    %53 = vector.shape_cast %52 : vector<64xf32> to vector<64x1xf32>
    %cst_30 = arith.constant 1.280000e+02 : f32
    %54 = vector.broadcast %cst_30 : f32 to vector<64x1xf32>
    %55 = arith.divf %53, %54 : vector<64x1xf32>
    %56 = vector.broadcast %55 : vector<64x1xf32> to vector<64x128xf32>
    %57 = arith.subf %49, %56 : vector<64x128xf32>
    %58 = arith.mulf %57, %57 : vector<64x128xf32>
    %cst_31 = arith.constant dense<0.000000e+00> : vector<64xf32>
    %59 = vector.multi_reduction <add>, %58, %cst_31 [1] : vector<64x128xf32> to vector<64xf32>
    %60 = vector.shape_cast %59 : vector<64xf32> to vector<64x1xf32>
    %cst_32 = arith.constant 1.280000e+02 : f32
    %61 = vector.broadcast %cst_32 : f32 to vector<64x1xf32>
    %62 = arith.divf %60, %61 : vector<64x1xf32>
    %63 = vector.broadcast %55 : vector<64x1xf32> to vector<64x128xf32>
    %64 = arith.subf %49, %63 : vector<64x128xf32>
    %cst_33 = arith.constant 9.99999974E-6 : f32
    %65 = vector.broadcast %cst_33 : f32 to vector<64x1xf32>
    %66 = arith.addf %62, %65 : vector<64x1xf32>
    %67 = math.rsqrt %66 : vector<64x1xf32>
    %68 = vector.broadcast %67 : vector<64x1xf32> to vector<64x128xf32>
    %69 = arith.mulf %64, %68 : vector<64x128xf32>
    %70 = vector.broadcast %50 : vector<1x128xf32> to vector<64x128xf32>
    %71 = arith.mulf %69, %70 : vector<64x128xf32>
    %72 = vector.broadcast %51 : vector<1x128xf32> to vector<64x128xf32>
    %73 = arith.addf %71, %72 : vector<64x128xf32>
    %74 = arith.truncf %73 : vector<64x128xf32> to vector<64x128xbf16>
    %c0_34 = arith.constant 0 : index
    %c0_35 = arith.constant 0 : index
    %75 = vector.load %arg16[%c0_34, %c0_35] : memref<128x256xbf16, #tpu.memory_space<vmem>>, vector<128x256xbf16>
    %cst_36 = arith.constant dense<0.000000e+00> : vector<64x256xf32>
    %76 = tpu.matmul %74, %75, %cst_36 {dimension_numbers = #tpu.dot_dimension_numbers<[1], [0], [0], [1], [0, 0, 1, 1], [], []>} : vector<64x128xbf16>, vector<128x256xbf16>, vector<64x256xf32> -> vector<64x256xf32>
    %c0_37 = arith.constant 0 : index
    %c0_38 = arith.constant 0 : index
    %77 = vector.load %arg17[%c0_37, %c0_38] : memref<1x256xf32, #tpu.memory_space<vmem>>, vector<1x256xf32>
    %78 = vector.broadcast %77 : vector<1x256xf32> to vector<64x256xf32>
    %79 = arith.addf %76, %78 : vector<64x256xf32>
    %80 = arith.negf %79 : vector<64x256xf32>
    %81 = math.exp %80 : vector<64x256xf32>
    %cst_39 = arith.constant 1.000000e+00 : f32
    %82 = vector.broadcast %cst_39 : f32 to vector<64x256xf32>
    %83 = arith.addf %82, %81 : vector<64x256xf32>
    %84 = arith.divf %82, %83 : vector<64x256xf32>
    %85 = arith.mulf %79, %84 : vector<64x256xf32>
    %86 = arith.truncf %85 : vector<64x256xf32> to vector<64x256xbf16>
    %c0_40 = arith.constant 0 : index
    %c0_41 = arith.constant 0 : index
    %87 = vector.load %arg18[%c0_40, %c0_41] : memref<256x128xbf16, #tpu.memory_space<vmem>>, vector<256x128xbf16>
    %cst_42 = arith.constant dense<0.000000e+00> : vector<64x128xf32>
    %88 = tpu.matmul %86, %87, %cst_42 {dimension_numbers = #tpu.dot_dimension_numbers<[1], [0], [0], [1], [0, 0, 1, 1], [], []>} : vector<64x256xbf16>, vector<256x128xbf16>, vector<64x128xf32> -> vector<64x128xf32>
    %c0_43 = arith.constant 0 : index
    %c0_44 = arith.constant 0 : index
    %89 = vector.load %arg19[%c0_43, %c0_44] : memref<1x128xf32, #tpu.memory_space<vmem>>, vector<1x128xf32>
    %90 = vector.broadcast %89 : vector<1x128xf32> to vector<64x128xf32>
    %91 = arith.addf %88, %90 : vector<64x128xf32>
    %92 = arith.addf %49, %91 : vector<64x128xf32>
    %c0_45 = arith.constant 0 : index
    %c0_46 = arith.constant 0 : index
    %93 = vector.load %arg20[%c0_45, %c0_46] : memref<1x128xf32, #tpu.memory_space<vmem>>, vector<1x128xf32>
    %c0_47 = arith.constant 0 : index
    %c0_48 = arith.constant 0 : index
    %94 = vector.load %arg21[%c0_47, %c0_48] : memref<1x128xf32, #tpu.memory_space<vmem>>, vector<1x128xf32>
    %cst_49 = arith.constant dense<0.000000e+00> : vector<64xf32>
    %95 = vector.multi_reduction <add>, %92, %cst_49 [1] : vector<64x128xf32> to vector<64xf32>
    %96 = vector.shape_cast %95 : vector<64xf32> to vector<64x1xf32>
    %cst_50 = arith.constant 1.280000e+02 : f32
    %97 = vector.broadcast %cst_50 : f32 to vector<64x1xf32>
    %98 = arith.divf %96, %97 : vector<64x1xf32>
    %99 = vector.broadcast %98 : vector<64x1xf32> to vector<64x128xf32>
    %100 = arith.subf %92, %99 : vector<64x128xf32>
    %101 = arith.mulf %100, %100 : vector<64x128xf32>
    %cst_51 = arith.constant dense<0.000000e+00> : vector<64xf32>
    %102 = vector.multi_reduction <add>, %101, %cst_51 [1] : vector<64x128xf32> to vector<64xf32>
    %103 = vector.shape_cast %102 : vector<64xf32> to vector<64x1xf32>
    %cst_52 = arith.constant 1.280000e+02 : f32
    %104 = vector.broadcast %cst_52 : f32 to vector<64x1xf32>
    %105 = arith.divf %103, %104 : vector<64x1xf32>
    %106 = vector.broadcast %98 : vector<64x1xf32> to vector<64x128xf32>
    %107 = arith.subf %92, %106 : vector<64x128xf32>
    %cst_53 = arith.constant 9.99999974E-6 : f32
    %108 = vector.broadcast %cst_53 : f32 to vector<64x1xf32>
    %109 = arith.addf %105, %108 : vector<64x1xf32>
    %110 = math.rsqrt %109 : vector<64x1xf32>
    %111 = vector.broadcast %110 : vector<64x1xf32> to vector<64x128xf32>
    %112 = arith.mulf %107, %111 : vector<64x128xf32>
    %113 = vector.broadcast %93 : vector<1x128xf32> to vector<64x128xf32>
    %114 = arith.mulf %112, %113 : vector<64x128xf32>
    %115 = vector.broadcast %94 : vector<1x128xf32> to vector<64x128xf32>
    %116 = arith.addf %114, %115 : vector<64x128xf32>
    %117 = arith.negf %116 : vector<64x128xf32>
    %118 = math.exp %117 : vector<64x128xf32>
    %cst_54 = arith.constant 1.000000e+00 : f32
    %119 = vector.broadcast %cst_54 : f32 to vector<64x128xf32>
    %120 = arith.addf %119, %118 : vector<64x128xf32>
    %121 = arith.divf %119, %120 : vector<64x128xf32>
    %122 = arith.mulf %116, %121 : vector<64x128xf32>
    %123 = arith.truncf %122 : vector<64x128xf32> to vector<64x128xbf16>
    %c0_55 = arith.constant 0 : index
    %c0_56 = arith.constant 0 : index
    %124 = vector.load %arg22[%c0_55, %c0_56] : memref<128x4xbf16, #tpu.memory_space<vmem>>, vector<128x4xbf16>
    %cst_57 = arith.constant dense<0.000000e+00> : vector<64x4xf32>
    %125 = tpu.matmul %123, %124, %cst_57 {dimension_numbers = #tpu.dot_dimension_numbers<[1], [0], [0], [1], [0, 0, 1, 1], [], []>} : vector<64x128xbf16>, vector<128x4xbf16>, vector<64x4xf32> -> vector<64x4xf32>
    %c0_58 = arith.constant 0 : index
    %c0_59 = arith.constant 0 : index
    %126 = vector.load %arg23[%c0_58, %c0_59] : memref<1x4xf32, #tpu.memory_space<vmem>>, vector<1x4xf32>
    %127 = vector.broadcast %126 : vector<1x4xf32> to vector<64x4xf32>
    %128 = arith.addf %125, %127 : vector<64x4xf32>
    %129 = arith.truncf %122 : vector<64x128xf32> to vector<64x128xbf16>
    %c0_60 = arith.constant 0 : index
    %c0_61 = arith.constant 0 : index
    %130 = vector.load %arg24[%c0_60, %c0_61] : memref<128x4xbf16, #tpu.memory_space<vmem>>, vector<128x4xbf16>
    %cst_62 = arith.constant dense<0.000000e+00> : vector<64x4xf32>
    %131 = tpu.matmul %129, %130, %cst_62 {dimension_numbers = #tpu.dot_dimension_numbers<[1], [0], [0], [1], [0, 0, 1, 1], [], []>} : vector<64x128xbf16>, vector<128x4xbf16>, vector<64x4xf32> -> vector<64x4xf32>
    %c0_63 = arith.constant 0 : index
    %c0_64 = arith.constant 0 : index
    %132 = vector.load %arg25[%c0_63, %c0_64] : memref<1x4xf32, #tpu.memory_space<vmem>>, vector<1x4xf32>
    %133 = vector.broadcast %132 : vector<1x4xf32> to vector<64x4xf32>
    %134 = arith.addf %131, %133 : vector<64x4xf32>
    %cst_65 = arith.constant -3.000000e+01 : f32
    %cst_66 = arith.constant 2.000000e+01 : f32
    %135 = vector.broadcast %cst_65 : f32 to vector<64x4xf32>
    %136 = arith.maximumf %135, %134 : vector<64x4xf32>
    %137 = vector.broadcast %cst_66 : f32 to vector<64x4xf32>
    %138 = arith.minimumf %137, %136 : vector<64x4xf32>
    %cst_67 = arith.constant 5.000000e-01 : f32
    %139 = vector.broadcast %cst_67 : f32 to vector<64x4xf32>
    %140 = arith.mulf %139, %138 : vector<64x4xf32>
    %141 = math.exp %140 : vector<64x4xf32>
    %c0_68 = arith.constant 0 : index
    %c0_69 = arith.constant 0 : index
    %142 = vector.load %arg2[%c0_68, %c0_69] : memref<64x4xf32, #tpu.memory_space<vmem>>, vector<64x4xf32>
    %143 = arith.mulf %141, %142 : vector<64x4xf32>
    %144 = arith.addf %128, %143 : vector<64x4xf32>
    %cst_70 = arith.constant 1.821500e-01 : f32
    %145 = vector.broadcast %cst_70 : f32 to vector<64x4xf32>
    %146 = arith.mulf %144, %145 : vector<64x4xf32>
    %c0_71 = arith.constant 0 : index
    %c0_72 = arith.constant 0 : index
    %147 = vector.load %arg4[%c0_71, %c0_72] : memref<64x1xf32, #tpu.memory_space<vmem>>, vector<64x1xf32>
    %148 = vector.broadcast %147 : vector<64x1xf32> to vector<64x4xf32>
    %149 = arith.mulf %148, %146 : vector<64x4xf32>
    %c0_73 = arith.constant 0 : index
    %c0_74 = arith.constant 0 : index
    %150 = vector.load %arg5[%c0_73, %c0_74] : memref<64x1xf32, #tpu.memory_space<vmem>>, vector<64x1xf32>
    %c0_75 = arith.constant 0 : index
    %c0_76 = arith.constant 0 : index
    %151 = vector.load %arg3[%c0_75, %c0_76] : memref<64x4xf32, #tpu.memory_space<vmem>>, vector<64x4xf32>
    %152 = vector.broadcast %150 : vector<64x1xf32> to vector<64x4xf32>
    %153 = arith.mulf %152, %151 : vector<64x4xf32>
    %154 = arith.addf %149, %153 : vector<64x4xf32>
    %c0_77 = arith.constant 0 : index
    %c0_78 = arith.constant 0 : index
    %155 = vector.load %arg26[%c0_77, %c0_78] : memref<64x4xf32, #tpu.memory_space<vmem>>, vector<64x4xf32>
    tpu.vector_store %arg26[%c0_77, %c0_78], %154 {strides = array<i32>} : memref<64x4xf32, #tpu.memory_space<vmem>>, vector<64x4xf32>,
    return
  }
  func.func @transform_0(%arg0: i32) -> (i32, i32) {
    %c0_i32 = arith.constant 0 : i32
    %c0_i32_0 = arith.constant 0 : i32
    return %arg0, %c0_i32 : i32, i32
  }
  func.func @transform_1(%arg0: i32) -> (i32, i32) {
    %c0_i32 = arith.constant 0 : i32
    %c0_i32_0 = arith.constant 0 : i32
    return %arg0, %c0_i32 : i32, i32
  }
  func.func @transform_2(%arg0: i32) -> (i32, i32) {
    %c0_i32 = arith.constant 0 : i32
    %c0_i32_0 = arith.constant 0 : i32
    return %arg0, %c0_i32 : i32, i32
  }
  func.func @transform_3(%arg0: i32) -> (i32, i32) {
    %c0_i32 = arith.constant 0 : i32
    %c0_i32_0 = arith.constant 0 : i32
    return %arg0, %c0_i32 : i32, i32
  }
  func.func @transform_4(%arg0: i32) -> (i32, i32) {
    %c0_i32 = arith.constant 0 : i32
    %c0_i32_0 = arith.constant 0 : i32
    return %arg0, %c0_i32 : i32, i32
  }
  func.func @transform_5(%arg0: i32) -> (i32, i32) {
    %c0_i32 = arith.constant 0 : i32
    %c0_i32_0 = arith.constant 0 : i32
    %c0_i32_1 = arith.constant 0 : i32
    return %c0_i32, %c0_i32_0 : i32, i32
  }
  func.func @transform_6(%arg0: i32) -> (i32, i32) {
    %c0_i32 = arith.constant 0 : i32
    %c0_i32_0 = arith.constant 0 : i32
    %c0_i32_1 = arith.constant 0 : i32
    return %c0_i32, %c0_i32_0 : i32, i32
  }
  func.func @transform_7(%arg0: i32) -> (i32, i32) {
    %c0_i32 = arith.constant 0 : i32
    %c0_i32_0 = arith.constant 0 : i32
    %c0_i32_1 = arith.constant 0 : i32
    return %c0_i32, %c0_i32_0 : i32, i32
  }
  func.func @transform_8(%arg0: i32) -> (i32, i32) {
    %c0_i32 = arith.constant 0 : i32
    %c0_i32_0 = arith.constant 0 : i32
    %c0_i32_1 = arith.constant 0 : i32
    return %c0_i32, %c0_i32_0 : i32, i32
  }
  func.func @transform_9(%arg0: i32) -> (i32, i32) {
    %c0_i32 = arith.constant 0 : i32
    %c0_i32_0 = arith.constant 0 : i32
    %c0_i32_1 = arith.constant 0 : i32
    return %c0_i32, %c0_i32_0 : i32, i32
  }
  func.func @transform_10(%arg0: i32) -> (i32, i32) {
    %c0_i32 = arith.constant 0 : i32
    %c0_i32_0 = arith.constant 0 : i32
    %c0_i32_1 = arith.constant 0 : i32
    return %c0_i32, %c0_i32_0 : i32, i32
  }
  func.func @transform_11(%arg0: i32) -> (i32, i32) {
    %c0_i32 = arith.constant 0 : i32
    %c0_i32_0 = arith.constant 0 : i32
    %c0_i32_1 = arith.constant 0 : i32
    return %c0_i32, %c0_i32_0 : i32, i32
  }
  func.func @transform_12(%arg0: i32) -> (i32, i32) {
    %c0_i32 = arith.constant 0 : i32
    %c0_i32_0 = arith.constant 0 : i32
    %c0_i32_1 = arith.constant 0 : i32
    return %c0_i32, %c0_i32_0 : i32, i32
  }
  func.func @transform_13(%arg0: i32) -> (i32, i32) {
    %c0_i32 = arith.constant 0 : i32
    %c0_i32_0 = arith.constant 0 : i32
    %c0_i32_1 = arith.constant 0 : i32
    return %c0_i32, %c0_i32_0 : i32, i32
  }
  func.func @transform_14(%arg0: i32) -> (i32, i32) {
    %c0_i32 = arith.constant 0 : i32
    %c0_i32_0 = arith.constant 0 : i32
    %c0_i32_1 = arith.constant 0 : i32
    return %c0_i32, %c0_i32_0 : i32, i32
  }
  func.func @transform_15(%arg0: i32) -> (i32, i32) {
    %c0_i32 = arith.constant 0 : i32
    %c0_i32_0 = arith.constant 0 : i32
    %c0_i32_1 = arith.constant 0 : i32
    return %c0_i32, %c0_i32_0 : i32, i32
  }
  func.func @transform_16(%arg0: i32) -> (i32, i32) {
    %c0_i32 = arith.constant 0 : i32
    %c0_i32_0 = arith.constant 0 : i32
    %c0_i32_1 = arith.constant 0 : i32
    return %c0_i32, %c0_i32_0 : i32, i32
  }
  func.func @transform_17(%arg0: i32) -> (i32, i32) {
    %c0_i32 = arith.constant 0 : i32
    %c0_i32_0 = arith.constant 0 : i32
    %c0_i32_1 = arith.constant 0 : i32
    return %c0_i32, %c0_i32_0 : i32, i32
  }
  func.func @transform_18(%arg0: i32) -> (i32, i32) {
    %c0_i32 = arith.constant 0 : i32
    %c0_i32_0 = arith.constant 0 : i32
    %c0_i32_1 = arith.constant 0 : i32
    return %c0_i32, %c0_i32_0 : i32, i32
  }
  func.func @transform_19(%arg0: i32) -> (i32, i32) {
    %c0_i32 = arith.constant 0 : i32
    %c0_i32_0 = arith.constant 0 : i32
    %c0_i32_1 = arith.constant 0 : i32
    return %c0_i32, %c0_i32_0 : i32, i32
  }
  func.func @transform_20(%arg0: i32) -> (i32, i32) {
    %c0_i32 = arith.constant 0 : i32
    %c0_i32_0 = arith.constant 0 : i32
    %c0_i32_1 = arith.constant 0 : i32
    return %c0_i32, %c0_i32_0 : i32, i32
  }
  func.func @transform_21(%arg0: i32) -> (i32, i32) {
    %c0_i32 = arith.constant 0 : i32
    %c0_i32_0 = arith.constant 0 : i32
    %c0_i32_1 = arith.constant 0 : i32
    return %c0_i32, %c0_i32_0 : i32, i32
  }
  func.func @transform_22(%arg0: i32) -> (i32, i32) {
    %c0_i32 = arith.constant 0 : i32
    %c0_i32_0 = arith.constant 0 : i32
    %c0_i32_1 = arith.constant 0 : i32
    return %c0_i32, %c0_i32_0 : i32, i32
  }
  func.func @transform_23(%arg0: i32) -> (i32, i32) {
    %c0_i32 = arith.constant 0 : i32
    %c0_i32_0 = arith.constant 0 : i32
    %c0_i32_1 = arith.constant 0 : i32
    return %c0_i32, %c0_i32_0 : i32, i32
  }
  func.func @transform_24(%arg0: i32) -> (i32, i32) {
    %c0_i32 = arith.constant 0 : i32
    %c0_i32_0 = arith.constant 0 : i32
    %c0_i32_1 = arith.constant 0 : i32
    return %c0_i32, %c0_i32_0 : i32, i32
  }
  func.func @transform_25(%arg0: i32) -> (i32, i32) {
    %c0_i32 = arith.constant 0 : i32
    %c0_i32_0 = arith.constant 0 : i32
    return %arg0, %c0_i32 : i32, i32
  }
}

</mosaic_0001>

<llo_original>
// kernel: low_scale_encoder_forward.3
$region0: #{low_scale_encoder_forward.3}
  #allocation0 [shape = 'u32[]', space=smem, size = 0x4, offset = 0x4, fixed_abs, tag = 'smem constant byte address 0x4 - core index']
  #allocation1 [shape = 'u32[144,128]{1,0:T(1,128)}', space=vmem, size = 0x12000, scoped, tag = 'internal scratch']
  %s0 = inlined_call_operand.vmem [shape: f32[128,48], index: 0, kind: input, shape index: {}]
  %s1 = inlined_call_operand.vmem [shape: f32[128,4], index: 1, kind: input, shape index: {}]
  %s2 = inlined_call_operand.vmem [shape: f32[128,4], index: 2, kind: input, shape index: {}]
  %s3 = inlined_call_operand.vmem [shape: f32[128,1], index: 3, kind: input, shape index: {}]
  %s4 = inlined_call_operand.vmem [shape: f32[128,1], index: 4, kind: input, shape index: {}]
  %s5 = inlined_call_operand.vmem [shape: bf16[48,128], index: 5, kind: input, shape index: {}]
  %s6 = inlined_call_operand.vmem [shape: f32[1,128], index: 6, kind: input, shape index: {}]
  %s7 = inlined_call_operand.vmem [shape: f32[1,128], index: 7, kind: input, shape index: {}]
  %s8 = inlined_call_operand.vmem [shape: f32[1,128], index: 8, kind: input, shape index: {}]
  %s9 = inlined_call_operand.vmem [shape: bf16[128,256], index: 9, kind: input, shape index: {}]
  %s10 = inlined_call_operand.vmem [shape: f32[1,256], index: 10, kind: input, shape index: {}]
  %s11 = inlined_call_operand.vmem [shape: bf16[256,128], index: 11, kind: input, shape index: {}]
  %s12 = inlined_call_operand.vmem [shape: f32[1,128], index: 12, kind: input, shape index: {}]
  %s13 = inlined_call_operand.vmem [shape: f32[1,128], index: 13, kind: input, shape index: {}]
  %s14 = inlined_call_operand.vmem [shape: f32[1,128], index: 14, kind: input, shape index: {}]
  %s15 = inlined_call_operand.vmem [shape: bf16[128,256], index: 15, kind: input, shape index: {}]
  %s16 = inlined_call_operand.vmem [shape: f32[1,256], index: 16, kind: input, shape index: {}]
  %s17 = inlined_call_operand.vmem [shape: bf16[256,128], index: 17, kind: input, shape index: {}]
  %s18 = inlined_call_operand.vmem [shape: f32[1,128], index: 18, kind: input, shape index: {}]
  %s19 = inlined_call_operand.vmem [shape: f32[1,128], index: 19, kind: input, shape index: {}]
  %s20 = inlined_call_operand.vmem [shape: f32[1,128], index: 20, kind: input, shape index: {}]
  %s21 = inlined_call_operand.vmem [shape: bf16[128,4], index: 21, kind: input, shape index: {}]
  %s22 = inlined_call_operand.vmem [shape: f32[1,4], index: 22, kind: input, shape index: {}]
  %s23 = inlined_call_operand.vmem [shape: bf16[128,4], index: 23, kind: input, shape index: {}]
  %s24 = inlined_call_operand.vmem [shape: f32[1,4], index: 24, kind: input, shape index: {}]
  %s25 = inlined_call_operand.vmem [shape: f32[128,4], index: 25, kind: output, shape index: {}]
  %s26 = sld [smem:[#allocation0]]
  $region133: #{low_scale_encoder_forward.3} parent=0
    _
  %s28 = ssub.s32 1, %s26
  %s29 = scalar_select 0, %s28, %s26
  loop: start=0, step=1, limit=4
  $region2: #{low_scale_encoder_forward.3} parent=0 // loop_pre_header
    _
  $region3: #{low_scale_encoder_forward.3} parent=0 // loop_header
    %s31 = sphi 0, %s35
    %p32 = scmp.ge.s32.totalorder %s31, 4
    %s41 = sphi 0, %s43
    %s44 = sphi 0, %s41
    %s45 = sphi 0, %s44
    %s61 = sphi 0, %s45
    %s67 = sphi 0, %s69
    %s70 = sphi 0, %s67
    %s71 = sphi 0, %s70
    %s87 = sphi 0, %s71
    %s93 = sphi 0, %s95
    %s96 = sphi 0, %s93
    %s97 = sphi 0, %s96
    %s113 = sphi 0, %s97
    %s119 = sphi 0, %s121
    %s122 = sphi 0, %s119
    %s123 = sphi 0, %s122
    %s139 = sphi 0, %s123
    %s145 = sphi 0, %s147
    %s148 = sphi 0, %s145
    %s149 = sphi 0, %s148
    %s165 = sphi 0, %s149
    %s169 = sphi 0, %s169
    %s171 = sphi 0, %s169
    %s172 = sphi 0, %s171
    %s186 = sphi 0, %s172
    %s190 = sphi 0, %s190
    %s192 = sphi 0, %s190
    %s193 = sphi 0, %s192
    %s207 = sphi 0, %s193
    %s211 = sphi 0, %s211
    %s213 = sphi 0, %s211
    %s214 = sphi 0, %s213
    %s228 = sphi 0, %s214
    %s232 = sphi 0, %s232
    %s234 = sphi 0, %s232
    %s235 = sphi 0, %s234
    %s249 = sphi 0, %s235
    %s253 = sphi 0, %s253
    %s255 = sphi 0, %s253
    %s256 = sphi 0, %s255
    %s270 = sphi 0, %s256
    %s274 = sphi 0, %s274
    %s276 = sphi 0, %s274
    %s277 = sphi 0, %s276
    %s291 = sphi 0, %s277
    %s295 = sphi 0, %s295
    %s297 = sphi 0, %s295
    %s298 = sphi 0, %s297
    %s312 = sphi 0, %s298
    %s316 = sphi 0, %s316
    %s318 = sphi 0, %s316
    %s319 = sphi 0, %s318
    %s333 = sphi 0, %s319
    %s337 = sphi 0, %s337
    %s339 = sphi 0, %s337
    %s340 = sphi 0, %s339
    %s354 = sphi 0, %s340
    %s358 = sphi 0, %s358
    %s360 = sphi 0, %s358
    %s361 = sphi 0, %s360
    %s375 = sphi 0, %s361
    %s379 = sphi 0, %s379
    %s381 = sphi 0, %s379
    %s382 = sphi 0, %s381
    %s396 = sphi 0, %s382
    %s400 = sphi 0, %s400
    %s402 = sphi 0, %s400
    %s403 = sphi 0, %s402
    %s417 = sphi 0, %s403
    %s421 = sphi 0, %s421
    %s423 = sphi 0, %s421
    %s424 = sphi 0, %s423
    %s438 = sphi 0, %s424
    %s442 = sphi 0, %s442
    %s444 = sphi 0, %s442
    %s445 = sphi 0, %s444
    %s459 = sphi 0, %s445
    %s463 = sphi 0, %s463
    %s465 = sphi 0, %s463
    %s466 = sphi 0, %s465
    %s480 = sphi 0, %s466
    %s484 = sphi 0, %s484
    %s486 = sphi 0, %s484
    %s487 = sphi 0, %s486
    %s501 = sphi 0, %s487
    %s505 = sphi 0, %s505
    %s507 = sphi 0, %s505
    %s508 = sphi 0, %s507
    %s522 = sphi 0, %s508
    %s526 = sphi 0, %s526
    %s528 = sphi 0, %s526
    %s529 = sphi 0, %s528
    %s543 = sphi 0, %s529
    %s547 = sphi 0, %s547
    %s549 = sphi 0, %s547
    %s550 = sphi 0, %s549
    %s564 = sphi 0, %s550
    %s568 = sphi 0, %s568
    %s570 = sphi 0, %s568
    %s571 = sphi 0, %s570
    %s585 = sphi 0, %s571
    %s591 = sphi 0, %s593
    %s594 = sphi 0, %s591
    %s595 = sphi 0, %s594
    %s611 = sphi 0, %s595
  $region4: #{low_scale_encoder_forward.3} parent=0 // loop_header_branch
    %34 = sbr.rel (%p32) target = $region8
  $region5: #{low_scale_encoder_forward.3} parent=0 // loop_body
    %s36 = ssub.s32 %s31, 1
    %s37 = ssub.s32 %s31, 2
    %s38 = sadd.s32 %s31, 1
    %s39 = ssub.s32 %s31, %s38
    %p40 = scmp.eq.s32.totalorder %s39, 0
    %s42 = sadd.s32 %s41, 1
    %s43 = scalar_select %p40, %s41, %s42
    %p46 = pneg %p40
    %p47 = scmp.eq.s32.totalorder %s31, 1
    %p48 = por %p46, %p47
    %p49 = scmp.ne.s32.totalorder %s41, %s44
    %p50 = scmp.eq.s32.totalorder %s31, 0
    %p51 = por %p49, %p50
    %p52 = scmp.ne.s32.totalorder %s41, %s44
    %p53 = scmp.eq.s32.totalorder %s36, 1
    %p54 = por %p52, %p53
    %p55 = scmp.ne.s32.totalorder %s44, %s45
    %p56 = scmp.eq.s32.totalorder %s36, 0
    %p57 = por %p55, %p56
    %p58 = scmp.ne.s32.totalorder %s44, %s45
    %p59 = scmp.eq.s32.totalorder %s37, 1
    %p60 = por %p58, %p59
    %p62 = scmp.ne.s32.totalorder %s45, %s61
    %p63 = scmp.eq.s32.totalorder %s37, 0
    %p64 = por %p62, %p63
    %s65 = ssub.s32 %s31, %s38
    %p66 = scmp.eq.s32.totalorder %s65, 0
    %s68 = sadd.s32 %s67, 1
    %s69 = scalar_select %p66, %s67, %s68
    %p72 = pneg %p66
    %p73 = scmp.eq.s32.totalorder %s31, 1
    %p74 = por %p72, %p73
    %p75 = scmp.ne.s32.totalorder %s67, %s70
    %p76 = scmp.eq.s32.totalorder %s31, 0
    %p77 = por %p75, %p76
    %p78 = scmp.ne.s32.totalorder %s67, %s70
    %p79 = scmp.eq.s32.totalorder %s36, 1
    %p80 = por %p78, %p79
    %p81 = scmp.ne.s32.totalorder %s70, %s71
    %p82 = scmp.eq.s32.totalorder %s36, 0
    %p83 = por %p81, %p82
    %p84 = scmp.ne.s32.totalorder %s70, %s71
    %p85 = scmp.eq.s32.totalorder %s37, 1
    %p86 = por %p84, %p85
    %p88 = scmp.ne.s32.totalorder %s71, %s87
    %p89 = scmp.eq.s32.totalorder %s37, 0
    %p90 = por %p88, %p89
    %s91 = ssub.s32 %s31, %s38
    %p92 = scmp.eq.s32.totalorder %s91, 0
    %s94 = sadd.s32 %s93, 1
    %s95 = scalar_select %p92, %s93, %s94
    %p98 = pneg %p92
    %p99 = scmp.eq.s32.totalorder %s31, 1
    %p100 = por %p98, %p99
    %p101 = scmp.ne.s32.totalorder %s93, %s96
    %p102 = scmp.eq.s32.totalorder %s31, 0
    %p103 = por %p101, %p102
    %p104 = scmp.ne.s32.totalorder %s93, %s96
    %p105 = scmp.eq.s32.totalorder %s36, 1
    %p106 = por %p104, %p105
    %p107 = scmp.ne.s32.totalorder %s96, %s97
    %p108 = scmp.eq.s32.totalorder %s36, 0
    %p109 = por %p107, %p108
    %p110 = scmp.ne.s32.totalorder %s96, %s97
    %p111 = scmp.eq.s32.totalorder %s37, 1
    %p112 = por %p110, %p111
    %p114 = scmp.ne.s32.totalorder %s97, %s113
    %p115 = scmp.eq.s32.totalorder %s37, 0
    %p116 = por %p114, %p115
    %s117 = ssub.s32 %s31, %s38
    %p118 = scmp.eq.s32.totalorder %s117, 0
    %s120 = sadd.s32 %s119, 1
    %s121 = scalar_select %p118, %s119, %s120
    %p124 = pneg %p118
    %p125 = scmp.eq.s32.totalorder %s31, 1
    %p126 = por %p124, %p125
    %p127 = scmp.ne.s32.totalorder %s119, %s122
    %p128 = scmp.eq.s32.totalorder %s31, 0
    %p129 = por %p127, %p128
    %p130 = scmp.ne.s32.totalorder %s119, %s122
    %p131 = scmp.eq.s32.totalorder %s36, 1
    %p132 = por %p130, %p131
    %p133 = scmp.ne.s32.totalorder %s122, %s123
    %p134 = scmp.eq.s32.totalorder %s36, 0
    %p135 = por %p133, %p134
    %p136 = scmp.ne.s32.totalorder %s122, %s123
    %p137 = scmp.eq.s32.totalorder %s37, 1
    %p138 = por %p136, %p137
    %p140 = scmp.ne.s32.totalorder %s123, %s139
    %p141 = scmp.eq.s32.totalorder %s37, 0
    %p142 = por %p140, %p141
    %s143 = ssub.s32 %s31, %s38
    %p144 = scmp.eq.s32.totalorder %s143, 0
    %s146 = sadd.s32 %s145, 1
    %s147 = scalar_select %p144, %s145, %s146
    %p150 = pneg %p144
    %p151 = scmp.eq.s32.totalorder %s31, 1
    %p152 = por %p150, %p151
    %p153 = scmp.ne.s32.totalorder %s145, %s148
    %p154 = scmp.eq.s32.totalorder %s31, 0
    %p155 = por %p153, %p154
    %p156 = scmp.ne.s32.totalorder %s145, %s148
    %p157 = scmp.eq.s32.totalorder %s36, 1
    %p158 = por %p156, %p157
    %p159 = scmp.ne.s32.totalorder %s148, %s149
    %p160 = scmp.eq.s32.totalorder %s36, 0
    %p161 = por %p159, %p160
    %p162 = scmp.ne.s32.totalorder %s148, %s149
    %p163 = scmp.eq.s32.totalorder %s37, 1
    %p164 = por %p162, %p163
    %p166 = scmp.ne.s32.totalorder %s149, %s165
    %p167 = scmp.eq.s32.totalorder %s37, 0
    %p168 = por %p166, %p167
    %s170 = sadd.s32 %s169, 1
    %p173 = scmp.eq.s32.totalorder %s31, 1
    %p174 = scmp.ne.s32.totalorder %s169, %s171
    %p175 = scmp.eq.s32.totalorder %s31, 0
    %p176 = por %p174, %p175
    %p177 = scmp.ne.s32.totalorder %s169, %s171
    %p178 = scmp.eq.s32.totalorder %s36, 1
    %p179 = por %p177, %p178
    %p180 = scmp.ne.s32.totalorder %s171, %s172
    %p181 = scmp.eq.s32.totalorder %s36, 0
    %p182 = por %p180, %p181
    %p183 = scmp.ne.s32.totalorder %s171, %s172
    %p184 = scmp.eq.s32.totalorder %s37, 1
    %p185 = por %p183, %p184
    %p187 = scmp.ne.s32.totalorder %s172, %s186
    %p188 = scmp.eq.s32.totalorder %s37, 0
    %p189 = por %p187, %p188
    %s191 = sadd.s32 %s190, 1
    %p194 = scmp.eq.s32.totalorder %s31, 1
    %p195 = scmp.ne.s32.totalorder %s190, %s192
    %p196 = scmp.eq.s32.totalorder %s31, 0
    %p197 = por %p195, %p196
    %p198 = scmp.ne.s32.totalorder %s190, %s192
    %p199 = scmp.eq.s32.totalorder %s36, 1
    %p200 = por %p198, %p199
    %p201 = scmp.ne.s32.totalorder %s192, %s193
    %p202 = scmp.eq.s32.totalorder %s36, 0
    %p203 = por %p201, %p202
    %p204 = scmp.ne.s32.totalorder %s192, %s193
    %p205 = scmp.eq.s32.totalorder %s37, 1
    %p206 = por %p204, %p205
    %p208 = scmp.ne.s32.totalorder %s193, %s207
    %p209 = scmp.eq.s32.totalorder %s37, 0
    %p210 = por %p208, %p209
    %s212 = sadd.s32 %s211, 1
    %p215 = scmp.eq.s32.totalorder %s31, 1
    %p216 = scmp.ne.s32.totalorder %s211, %s213
    %p217 = scmp.eq.s32.totalorder %s31, 0
    %p218 = por %p216, %p217
    %p219 = scmp.ne.s32.totalorder %s211, %s213
    %p220 = scmp.eq.s32.totalorder %s36, 1
    %p221 = por %p219, %p220
    %p222 = scmp.ne.s32.totalorder %s213, %s214
    %p223 = scmp.eq.s32.totalorder %s36, 0
    %p224 = por %p222, %p223
    %p225 = scmp.ne.s32.totalorder %s213, %s214
    %p226 = scmp.eq.s32.totalorder %s37, 1
    %p227 = por %p225, %p226
    %p229 = scmp.ne.s32.totalorder %s214, %s228
    %p230 = scmp.eq.s32.totalorder %s37, 0
    %p231 = por %p229, %p230
    %s233 = sadd.s32 %s232, 1
    %p236 = scmp.eq.s32.totalorder %s31, 1
    %p237 = scmp.ne.s32.totalorder %s232, %s234
    %p238 = scmp.eq.s32.totalorder %s31, 0
    %p239 = por %p237, %p238
    %p240 = scmp.ne.s32.totalorder %s232, %s234
    %p241 = scmp.eq.s32.totalorder %s36, 1
    %p242 = por %p240, %p241
    %p243 = scmp.ne.s32.totalorder %s234, %s235
    %p244 = scmp.eq.s32.totalorder %s36, 0
    %p245 = por %p243, %p244
    %p246 = scmp.ne.s32.totalorder %s234, %s235
    %p247 = scmp.eq.s32.totalorder %s37, 1
    %p248 = por %p246, %p247
    %p250 = scmp.ne.s32.totalorder %s235, %s249
    %p251 = scmp.eq.s32.totalorder %s37, 0
    %p252 = por %p250, %p251
    %s254 = sadd.s32 %s253, 1
    %p257 = scmp.eq.s32.totalorder %s31, 1
    %p258 = scmp.ne.s32.totalorder %s253, %s255
    %p259 = scmp.eq.s32.totalorder %s31, 0
    %p260 = por %p258, %p259
    %p261 = scmp.ne.s32.totalorder %s253, %s255
    %p262 = scmp.eq.s32.totalorder %s36, 1
    %p263 = por %p261, %p262
    %p264 = scmp.ne.s32.totalorder %s255, %s256
    %p265 = scmp.eq.s32.totalorder %s36, 0
    %p266 = por %p264, %p265
    %p267 = scmp.ne.s32.totalorder %s255, %s256
    %p268 = scmp.eq.s32.totalorder %s37, 1
    %p269 = por %p267, %p268
    %p271 = scmp.ne.s32.totalorder %s256, %s270
    %p272 = scmp.eq.s32.totalorder %s37, 0
    %p273 = por %p271, %p272
    %s275 = sadd.s32 %s274, 1
    %p278 = scmp.eq.s32.totalorder %s31, 1
    %p279 = scmp.ne.s32.totalorder %s274, %s276
    %p280 = scmp.eq.s32.totalorder %s31, 0
    %p281 = por %p279, %p280
    %p282 = scmp.ne.s32.totalorder %s274, %s276
    %p283 = scmp.eq.s32.totalorder %s36, 1
    %p284 = por %p282, %p283
    %p285 = scmp.ne.s32.totalorder %s276, %s277
    %p286 = scmp.eq.s32.totalorder %s36, 0
    %p287 = por %p285, %p286
    %p288 = scmp.ne.s32.totalorder %s276, %s277
    %p289 = scmp.eq.s32.totalorder %s37, 1
    %p290 = por %p288, %p289
    %p292 = scmp.ne.s32.totalorder %s277, %s291
    %p293 = scmp.eq.s32.totalorder %s37, 0
    %p294 = por %p292, %p293
    %s296 = sadd.s32 %s295, 1
    %p299 = scmp.eq.s32.totalorder %s31, 1
    %p300 = scmp.ne.s32.totalorder %s295, %s297
    %p301 = scmp.eq.s32.totalorder %s31, 0
    %p302 = por %p300, %p301
    %p303 = scmp.ne.s32.totalorder %s295, %s297
    %p304 = scmp.eq.s32.totalorder %s36, 1
    %p305 = por %p303, %p304
    %p306 = scmp.ne.s32.totalorder %s297, %s298
    %p307 = scmp.eq.s32.totalorder %s36, 0
    %p308 = por %p306, %p307
    %p309 = scmp.ne.s32.totalorder %s297, %s298
    %p310 = scmp.eq.s32.totalorder %s37, 1
    %p311 = por %p309, %p310
    %p313 = scmp.ne.s32.totalorder %s298, %s312
    %p314 = scmp.eq.s32.totalorder %s37, 0
    %p315 = por %p313, %p314
    %s317 = sadd.s32 %s316, 1
    %p320 = scmp.eq.s32.totalorder %s31, 1
    %p321 = scmp.ne.s32.totalorder %s316, %s318
    %p322 = scmp.eq.s32.totalorder %s31, 0
    %p323 = por %p321, %p322
    %p324 = scmp.ne.s32.totalorder %s316, %s318
    %p325 = scmp.eq.s32.totalorder %s36, 1
    %p326 = por %p324, %p325
    %p327 = scmp.ne.s32.totalorder %s318, %s319
    %p328 = scmp.eq.s32.totalorder %s36, 0
    %p329 = por %p327, %p328
    %p330 = scmp.ne.s32.totalorder %s318, %s319
    %p331 = scmp.eq.s32.totalorder %s37, 1
    %p332 = por %p330, %p331
    %p334 = scmp.ne.s32.totalorder %s319, %s333
    %p335 = scmp.eq.s32.totalorder %s37, 0
    %p336 = por %p334, %p335
    %s338 = sadd.s32 %s337, 1
    %p341 = scmp.eq.s32.totalorder %s31, 1
    %p342 = scmp.ne.s32.totalorder %s337, %s339
    %p343 = scmp.eq.s32.totalorder %s31, 0
    %p344 = por %p342, %p343
    %p345 = scmp.ne.s32.totalorder %s337, %s339
    %p346 = scmp.eq.s32.totalorder %s36, 1
    %p347 = por %p345, %p346
    %p348 = scmp.ne.s32.totalorder %s339, %s340
    %p349 = scmp.eq.s32.totalorder %s36, 0
    %p350 = por %p348, %p349
    %p351 = scmp.ne.s32.totalorder %s339, %s340
    %p352 = scmp.eq.s32.totalorder %s37, 1
    %p353 = por %p351, %p352
    %p355 = scmp.ne.s32.totalorder %s340, %s354
    %p356 = scmp.eq.s32.totalorder %s37, 0
    %p357 = por %p355, %p356
    %s359 = sadd.s32 %s358, 1
    %p362 = scmp.eq.s32.totalorder %s31, 1
    %p363 = scmp.ne.s32.totalorder %s358, %s360
    %p364 = scmp.eq.s32.totalorder %s31, 0
    %p365 = por %p363, %p364
    %p366 = scmp.ne.s32.totalorder %s358, %s360
    %p367 = scmp.eq.s32.totalorder %s36, 1
    %p368 = por %p366, %p367
    %p369 = scmp.ne.s32.totalorder %s360, %s361
    %p370 = scmp.eq.s32.totalorder %s36, 0
    %p371 = por %p369, %p370
    %p372 = scmp.ne.s32.totalorder %s360, %s361
    %p373 = scmp.eq.s32.totalorder %s37, 1
    %p374 = por %p372, %p373
    %p376 = scmp.ne.s32.totalorder %s361, %s375
    %p377 = scmp.eq.s32.totalorder %s37, 0
    %p378 = por %p376, %p377
    %s380 = sadd.s32 %s379, 1
    %p383 = scmp.eq.s32.totalorder %s31, 1
    %p384 = scmp.ne.s32.totalorder %s379, %s381
    %p385 = scmp.eq.s32.totalorder %s31, 0
    %p386 = por %p384, %p385
    %p387 = scmp.ne.s32.totalorder %s379, %s381
    %p388 = scmp.eq.s32.totalorder %s36, 1
    %p389 = por %p387, %p388
    %p390 = scmp.ne.s32.totalorder %s381, %s382
    %p391 = scmp.eq.s32.totalorder %s36, 0
    %p392 = por %p390, %p391
    %p393 = scmp.ne.s32.totalorder %s381, %s382
    %p394 = scmp.eq.s32.totalorder %s37, 1
    %p395 = por %p393, %p394
    %p397 = scmp.ne.s32.totalorder %s382, %s396
    %p398 = scmp.eq.s32.totalorder %s37, 0
    %p399 = por %p397, %p398
    %s401 = sadd.s32 %s400, 1
    %p404 = scmp.eq.s32.totalorder %s31, 1
    %p405 = scmp.ne.s32.totalorder %s400, %s402
    %p406 = scmp.eq.s32.totalorder %s31, 0
    %p407 = por %p405, %p406
    %p408 = scmp.ne.s32.totalorder %s400, %s402
    %p409 = scmp.eq.s32.totalorder %s36, 1
    %p410 = por %p408, %p409
    %p411 = scmp.ne.s32.totalorder %s402, %s403
    %p412 = scmp.eq.s32.totalorder %s36, 0
    %p413 = por %p411, %p412
    %p414 = scmp.ne.s32.totalorder %s402, %s403
    %p415 = scmp.eq.s32.totalorder %s37, 1
    %p416 = por %p414, %p415
    %p418 = scmp.ne.s32.totalorder %s403, %s417
    %p419 = scmp.eq.s32.totalorder %s37, 0
    %p420 = por %p418, %p419
    %s422 = sadd.s32 %s421, 1
    %p425 = scmp.eq.s32.totalorder %s31, 1
    %p426 = scmp.ne.s32.totalorder %s421, %s423
    %p427 = scmp.eq.s32.totalorder %s31, 0
    %p428 = por %p426, %p427
    %p429 = scmp.ne.s32.totalorder %s421, %s423
    %p430 = scmp.eq.s32.totalorder %s36, 1
    %p431 = por %p429, %p430
    %p432 = scmp.ne.s32.totalorder %s423, %s424
    %p433 = scmp.eq.s32.totalorder %s36, 0
    %p434 = por %p432, %p433
    %p435 = scmp.ne.s32.totalorder %s423, %s424
    %p436 = scmp.eq.s32.totalorder %s37, 1
    %p437 = por %p435, %p436
    %p439 = scmp.ne.s32.totalorder %s424, %s438
    %p440 = scmp.eq.s32.totalorder %s37, 0
    %p441 = por %p439, %p440
    %s443 = sadd.s32 %s442, 1
    %p446 = scmp.eq.s32.totalorder %s31, 1
    %p447 = scmp.ne.s32.totalorder %s442, %s444
    %p448 = scmp.eq.s32.totalorder %s31, 0
    %p449 = por %p447, %p448
    %p450 = scmp.ne.s32.totalorder %s442, %s444
    %p451 = scmp.eq.s32.totalorder %s36, 1
    %p452 = por %p450, %p451
    %p453 = scmp.ne.s32.totalorder %s444, %s445
    %p454 = scmp.eq.s32.totalorder %s36, 0
    %p455 = por %p453, %p454
    %p456 = scmp.ne.s32.totalorder %s444, %s445
    %p457 = scmp.eq.s32.totalorder %s37, 1
    %p458 = por %p456, %p457
    %p460 = scmp.ne.s32.totalorder %s445, %s459
    %p461 = scmp.eq.s32.totalorder %s37, 0
    %p462 = por %p460, %p461
    %s464 = sadd.s32 %s463, 1
    %p467 = scmp.eq.s32.totalorder %s31, 1
    %p468 = scmp.ne.s32.totalorder %s463, %s465
    %p469 = scmp.eq.s32.totalorder %s31, 0
    %p470 = por %p468, %p469
    %p471 = scmp.ne.s32.totalorder %s463, %s465
    %p472 = scmp.eq.s32.totalorder %s36, 1
    %p473 = por %p471, %p472
    %p474 = scmp.ne.s32.totalorder %s465, %s466
    %p475 = scmp.eq.s32.totalorder %s36, 0
    %p476 = por %p474, %p475
    %p477 = scmp.ne.s32.totalorder %s465, %s466
    %p478 = scmp.eq.s32.totalorder %s37, 1
    %p479 = por %p477, %p478
    %p481 = scmp.ne.s32.totalorder %s466, %s480
    %p482 = scmp.eq.s32.totalorder %s37, 0
    %p483 = por %p481, %p482
    %s485 = sadd.s32 %s484, 1
    %p488 = scmp.eq.s32.totalorder %s31, 1
    %p489 = scmp.ne.s32.totalorder %s484, %s486
    %p490 = scmp.eq.s32.totalorder %s31, 0
    %p491 = por %p489, %p490
    %p492 = scmp.ne.s32.totalorder %s484, %s486
    %p493 = scmp.eq.s32.totalorder %s36, 1
    %p494 = por %p492, %p493
    %p495 = scmp.ne.s32.totalorder %s486, %s487
    %p496 = scmp.eq.s32.totalorder %s36, 0
    %p497 = por %p495, %p496
    %p498 = scmp.ne.s32.totalorder %s486, %s487
    %p499 = scmp.eq.s32.totalorder %s37, 1
    %p500 = por %p498, %p499
    %p502 = scmp.ne.s32.totalorder %s487, %s501
    %p503 = scmp.eq.s32.totalorder %s37, 0
    %p504 = por %p502, %p503
    %s506 = sadd.s32 %s505, 1
    %p509 = scmp.eq.s32.totalorder %s31, 1
    %p510 = scmp.ne.s32.totalorder %s505, %s507
    %p511 = scmp.eq.s32.totalorder %s31, 0
    %p512 = por %p510, %p511
    %p513 = scmp.ne.s32.totalorder %s505, %s507
    %p514 = scmp.eq.s32.totalorder %s36, 1
    %p515 = por %p513, %p514
    %p516 = scmp.ne.s32.totalorder %s507, %s508
    %p517 = scmp.eq.s32.totalorder %s36, 0
    %p518 = por %p516, %p517
    %p519 = scmp.ne.s32.totalorder %s507, %s508
    %p520 = scmp.eq.s32.totalorder %s37, 1
    %p521 = por %p519, %p520
    %p523 = scmp.ne.s32.totalorder %s508, %s522
    %p524 = scmp.eq.s32.totalorder %s37, 0
    %p525 = por %p523, %p524
    %s527 = sadd.s32 %s526, 1
    %p530 = scmp.eq.s32.totalorder %s31, 1
    %p531 = scmp.ne.s32.totalorder %s526, %s528
    %p532 = scmp.eq.s32.totalorder %s31, 0
    %p533 = por %p531, %p532
    %p534 = scmp.ne.s32.totalorder %s526, %s528
    %p535 = scmp.eq.s32.totalorder %s36, 1
    %p536 = por %p534, %p535
    %p537 = scmp.ne.s32.totalorder %s528, %s529
    %p538 = scmp.eq.s32.totalorder %s36, 0
    %p539 = por %p537, %p538
    %p540 = scmp.ne.s32.totalorder %s528, %s529
    %p541 = scmp.eq.s32.totalorder %s37, 1
    %p542 = por %p540, %p541
    %p544 = scmp.ne.s32.totalorder %s529, %s543
    %p545 = scmp.eq.s32.totalorder %s37, 0
    %p546 = por %p544, %p545
    %s548 = sadd.s32 %s547, 1
    %p551 = scmp.eq.s32.totalorder %s31, 1
    %p552 = scmp.ne.s32.totalorder %s547, %s549
    %p553 = scmp.eq.s32.totalorder %s31, 0
    %p554 = por %p552, %p553
    %p555 = scmp.ne.s32.totalorder %s547, %s549
    %p556 = scmp.eq.s32.totalorder %s36, 1
    %p557 = por %p555, %p556
    %p558 = scmp.ne.s32.totalorder %s549, %s550
    %p559 = scmp.eq.s32.totalorder %s36, 0
    %p560 = por %p558, %p559
    %p561 = scmp.ne.s32.totalorder %s549, %s550
    %p562 = scmp.eq.s32.totalorder %s37, 1
    %p563 = por %p561, %p562
    %p565 = scmp.ne.s32.totalorder %s550, %s564
    %p566 = scmp.eq.s32.totalorder %s37, 0
    %p567 = por %p565, %p566
    %s569 = sadd.s32 %s568, 1
    %p572 = scmp.eq.s32.totalorder %s31, 1
    %p573 = scmp.ne.s32.totalorder %s568, %s570
    %p574 = scmp.eq.s32.totalorder %s31, 0
    %p575 = por %p573, %p574
    %p576 = scmp.ne.s32.totalorder %s568, %s570
    %p577 = scmp.eq.s32.totalorder %s36, 1
    %p578 = por %p576, %p577
    %p579 = scmp.ne.s32.totalorder %s570, %s571
    %p580 = scmp.eq.s32.totalorder %s36, 0
    %p581 = por %p579, %p580
    %p582 = scmp.ne.s32.totalorder %s570, %s571
    %p583 = scmp.eq.s32.totalorder %s37, 1
    %p584 = por %p582, %p583
    %p586 = scmp.ne.s32.totalorder %s571, %s585
    %p587 = scmp.eq.s32.totalorder %s37, 0
    %p588 = por %p586, %p587
    %s589 = ssub.s32 %s31, %s38
    %p590 = scmp.eq.s32.totalorder %s589, 0
    %s592 = sadd.s32 %s591, 1
    %s593 = scalar_select %p590, %s591, %s592
    %p596 = pneg %p590
    %p597 = scmp.eq.s32.totalorder %s31, 1
    %p598 = por %p596, %p597
    %p599 = scmp.ne.s32.totalorder %s591, %s594
    %p600 = scmp.eq.s32.totalorder %s31, 0
    %p601 = por %p599, %p600
    %p602 = scmp.ne.s32.totalorder %s591, %s594
    %p603 = scmp.eq.s32.totalorder %s36, 1
    %p604 = por %p602, %p603
    %p605 = scmp.ne.s32.totalorder %s594, %s595
    %p606 = scmp.eq.s32.totalorder %s36, 0
    %p607 = por %p605, %p606
    %p608 = scmp.ne.s32.totalorder %s594, %s595
    %p609 = scmp.eq.s32.totalorder %s37, 1
    %p610 = por %p608, %p609
    %p612 = scmp.ne.s32.totalorder %s595, %s611
    %p613 = scmp.eq.s32.totalorder %s37, 0
    %p614 = por %p612, %p613
    %p615 = scmp.le.s32.totalorder 1, %s31
    %p616 = scmp.lt.s32.totalorder %s31, 3
    %p617 = pnand %p615, %p616
    %p618 = pneg %p617
    // Predicated region
    $region9: #{low_scale_encoder_forward.3} parent=5 // pred_check
      _
    $region10: #{low_scale_encoder_forward.3} parent=5 // pred_check_branch
      %620 = sbr.rel (%p617) target = $region12
    $region11: #{low_scale_encoder_forward.3} parent=5 // pred_region
      %s621 = ssub.s32 %s31, 1
      // Predicated region
      $region13: #{low_scale_encoder_forward.3} parent=11 // pred_check
        %p622 = pneg %p182
      $region14: #{low_scale_encoder_forward.3} parent=11 // pred_check_branch
        %624 = sbr.rel (%p622) target = $region16
      $region15: #{low_scale_encoder_forward.3} parent=11 // pred_region
        _
      $region16: #{low_scale_encoder_forward.3} parent=11 // pred_fallthru
        _
      // Predicated region
      $region17: #{low_scale_encoder_forward.3} parent=11 // pred_check
        %p625 = pneg %p203
      $region18: #{low_scale_encoder_forward.3} parent=11 // pred_check_branch
        %627 = sbr.rel (%p625) target = $region20
      $region19: #{low_scale_encoder_forward.3} parent=11 // pred_region
        _
      $region20: #{low_scale_encoder_forward.3} parent=11 // pred_fallthru
        _
      // Predicated region
      $region21: #{low_scale_encoder_forward.3} parent=11 // pred_check
        %p628 = pneg %p224
      $region22: #{low_scale_encoder_forward.3} parent=11 // pred_check_branch
        %630 = sbr.rel (%p628) target = $region24
      $region23: #{low_scale_encoder_forward.3} parent=11 // pred_region
        _
      $region24: #{low_scale_encoder_forward.3} parent=11 // pred_fallthru
        _
      // Predicated region
      $region25: #{low_scale_encoder_forward.3} parent=11 // pred_check
        %p631 = pneg %p245
      $region26: #{low_scale_encoder_forward.3} parent=11 // pred_check_branch
        %633 = sbr.rel (%p631) target = $region28
      $region27: #{low_scale_encoder_forward.3} parent=11 // pred_region
        _
      $region28: #{low_scale_encoder_forward.3} parent=11 // pred_fallthru
        _
      // Predicated region
      $region29: #{low_scale_encoder_forward.3} parent=11 // pred_check
        %p634 = pneg %p266
      $region30: #{low_scale_encoder_forward.3} parent=11 // pred_check_branch
        %636 = sbr.rel (%p634) target = $region32
      $region31: #{low_scale_encoder_forward.3} parent=11 // pred_region
        _
      $region32: #{low_scale_encoder_forward.3} parent=11 // pred_fallthru
        _
      // Predicated region
      $region33: #{low_scale_encoder_forward.3} parent=11 // pred_check
        %p637 = pneg %p287
      $region34: #{low_scale_encoder_forward.3} parent=11 // pred_check_branch
        %639 = sbr.rel (%p637) target = $region36
      $region35: #{low_scale_encoder_forward.3} parent=11 // pred_region
        _
      $region36: #{low_scale_encoder_forward.3} parent=11 // pred_fallthru
        _
      // Predicated region
      $region37: #{low_scale_encoder_forward.3} parent=11 // pred_check
        %p640 = pneg %p308
      $region38: #{low_scale_encoder_forward.3} parent=11 // pred_check_branch
        %642 = sbr.rel (%p640) target = $region40
      $region39: #{low_scale_encoder_forward.3} parent=11 // pred_region
        _
      $region40: #{low_scale_encoder_forward.3} parent=11 // pred_fallthru
        _
      // Predicated region
      $region41: #{low_scale_encoder_forward.3} parent=11 // pred_check
        %p643 = pneg %p329
      $region42: #{low_scale_encoder_forward.3} parent=11 // pred_check_branch
        %645 = sbr.rel (%p643) target = $region44
      $region43: #{low_scale_encoder_forward.3} parent=11 // pred_region
        _
      $region44: #{low_scale_encoder_forward.3} parent=11 // pred_fallthru
        _
      // Predicated region
      $region45: #{low_scale_encoder_forward.3} parent=11 // pred_check
        %p646 = pneg %p350
      $region46: #{low_scale_encoder_forward.3} parent=11 // pred_check_branch
        %648 = sbr.rel (%p646) target = $region48
      $region47: #{low_scale_encoder_forward.3} parent=11 // pred_region
        _
      $region48: #{low_scale_encoder_forward.3} parent=11 // pred_fallthru
        _
      // Predicated region
      $region49: #{low_scale_encoder_forward.3} parent=11 // pred_check
        %p649 = pneg %p371
      $region50: #{low_scale_encoder_forward.3} parent=11 // pred_check_branch
        %651 = sbr.rel (%p649) target = $region52
      $region51: #{low_scale_encoder_forward.3} parent=11 // pred_region
        _
      $region52: #{low_scale_encoder_forward.3} parent=11 // pred_fallthru
        _
      // Predicated region
      $region53: #{low_scale_encoder_forward.3} parent=11 // pred_check
        %p652 = pneg %p392
      $region54: #{low_scale_encoder_forward.3} parent=11 // pred_check_branch
        %654 = sbr.rel (%p652) target = $region56
      $region55: #{low_scale_encoder_forward.3} parent=11 // pred_region
        _
      $region56: #{low_scale_encoder_forward.3} parent=11 // pred_fallthru
        _
      // Predicated region
      $region57: #{low_scale_encoder_forward.3} parent=11 // pred_check
        %p655 = pneg %p413
      $region58: #{low_scale_encoder_forward.3} parent=11 // pred_check_branch
        %657 = sbr.rel (%p655) target = $region60
      $region59: #{low_scale_encoder_forward.3} parent=11 // pred_region
        _
      $region60: #{low_scale_encoder_forward.3} parent=11 // pred_fallthru
        _
      // Predicated region
      $region61: #{low_scale_encoder_forward.3} parent=11 // pred_check
        %p658 = pneg %p434
      $region62: #{low_scale_encoder_forward.3} parent=11 // pred_check_branch
        %660 = sbr.rel (%p658) target = $region64
      $region63: #{low_scale_encoder_forward.3} parent=11 // pred_region
        _
      $region64: #{low_scale_encoder_forward.3} parent=11 // pred_fallthru
        _
      // Predicated region
      $region65: #{low_scale_encoder_forward.3} parent=11 // pred_check
        %p661 = pneg %p455
      $region66: #{low_scale_encoder_forward.3} parent=11 // pred_check_branch
        %663 = sbr.rel (%p661) target = $region68
      $region67: #{low_scale_encoder_forward.3} parent=11 // pred_region
        _
      $region68: #{low_scale_encoder_forward.3} parent=11 // pred_fallthru
        _
      // Predicated region
      $region69: #{low_scale_encoder_forward.3} parent=11 // pred_check
        %p664 = pneg %p476
      $region70: #{low_scale_encoder_forward.3} parent=11 // pred_check_branch
        %666 = sbr.rel (%p664) target = $region72
      $region71: #{low_scale_encoder_forward.3} parent=11 // pred_region
        _
      $region72: #{low_scale_encoder_forward.3} parent=11 // pred_fallthru
        _
      // Predicated region
      $region73: #{low_scale_encoder_forward.3} parent=11 // pred_check
        %p667 = pneg %p497
      $region74: #{low_scale_encoder_forward.3} parent=11 // pred_check_branch
        %669 = sbr.rel (%p667) target = $region76
      $region75: #{low_scale_encoder_forward.3} parent=11 // pred_region
        _
      $region76: #{low_scale_encoder_forward.3} parent=11 // pred_fallthru
        _
      // Predicated region
      $region77: #{low_scale_encoder_forward.3} parent=11 // pred_check
        %p670 = pneg %p518
      $region78: #{low_scale_encoder_forward.3} parent=11 // pred_check_branch
        %672 = sbr.rel (%p670) target = $region80
      $region79: #{low_scale_encoder_forward.3} parent=11 // pred_region
        _
      $region80: #{low_scale_encoder_forward.3} parent=11 // pred_fallthru
        _
      // Predicated region
      $region81: #{low_scale_encoder_forward.3} parent=11 // pred_check
        %p673 = pneg %p539
      $region82: #{low_scale_encoder_forward.3} parent=11 // pred_check_branch
        %675 = sbr.rel (%p673) target = $region84
      $region83: #{low_scale_encoder_forward.3} parent=11 // pred_region
        _
      $region84: #{low_scale_encoder_forward.3} parent=11 // pred_fallthru
        _
      // Predicated region
      $region85: #{low_scale_encoder_forward.3} parent=11 // pred_check
        %p676 = pneg %p560
      $region86: #{low_scale_encoder_forward.3} parent=11 // pred_check_branch
        %678 = sbr.rel (%p676) target = $region88
      $region87: #{low_scale_encoder_forward.3} parent=11 // pred_region
        _
      $region88: #{low_scale_encoder_forward.3} parent=11 // pred_fallthru
        _
      // Predicated region
      $region89: #{low_scale_encoder_forward.3} parent=11 // pred_check
        %p679 = pneg %p581
      $region90: #{low_scale_encoder_forward.3} parent=11 // pred_check_branch
        %681 = sbr.rel (%p679) target = $region92
      $region91: #{low_scale_encoder_forward.3} parent=11 // pred_region
        _
      $region92: #{low_scale_encoder_forward.3} parent=11 // pred_fallthru
        _
    $region12: #{low_scale_encoder_forward.3} parent=5 // pred_fallthru
      _
    %p682 = scmp.lt.s32.totalorder %s31, 2
    // Predicated region
    $region93: #{low_scale_encoder_forward.3} parent=5 // pred_check
      %p683 = pneg %p682
    $region94: #{low_scale_encoder_forward.3} parent=5 // pred_check_branch
      %685 = sbr.rel (%p683) target = $region96
    $region95: #{low_scale_encoder_forward.3} parent=5 // pred_region
      // Predicated region
      $region97: #{low_scale_encoder_forward.3} parent=95 // pred_check
        %p686 = pneg %p51
      $region98: #{low_scale_encoder_forward.3} parent=95 // pred_check_branch
        %688 = sbr.rel (%p686) target = $region100
      $region99: #{low_scale_encoder_forward.3} parent=95 // pred_region
        %s689 = smul.u32 8, %s31
        %p690 = scmp.lt.s32.totalorder %s689, 15
        %s691 = scalar_select %p690, %s689, 15
        %s692 = smul.addr %s691, 8
        %s693 = scalar_lea.vmem %s0, %s692
        %s694 = smul.u32 8, %s31
      $region100: #{low_scale_encoder_forward.3} parent=95 // pred_fallthru
        _
      // Predicated region
      $region101: #{low_scale_encoder_forward.3} parent=95 // pred_check
        %p695 = pneg %p77
      $region102: #{low_scale_encoder_forward.3} parent=95 // pred_check_branch
        %697 = sbr.rel (%p695) target = $region104
      $region103: #{low_scale_encoder_forward.3} parent=95 // pred_region
        %s698 = smul.u32 8, %s31
        %p699 = scmp.lt.s32.totalorder %s698, 15
        %s700 = scalar_select %p699, %s698, 15
        %s701 = smul.addr %s700, 8
        %s702 = scalar_lea.vmem %s1, %s701
        %s703 = smul.u32 8, %s31
      $region104: #{low_scale_encoder_forward.3} parent=95 // pred_fallthru
        _
      // Predicated region
      $region105: #{low_scale_encoder_forward.3} parent=95 // pred_check
        %p704 = pneg %p103
      $region106: #{low_scale_encoder_forward.3} parent=95 // pred_check_branch
        %706 = sbr.rel (%p704) target = $region108
      $region107: #{low_scale_encoder_forward.3} parent=95 // pred_region
        %s707 = smul.u32 8, %s31
        %p708 = scmp.lt.s32.totalorder %s707, 15
        %s709 = scalar_select %p708, %s707, 15
        %s710 = smul.addr %s709, 8
        %s711 = scalar_lea.vmem %s2, %s710
        %s712 = smul.u32 8, %s31
      $region108: #{low_scale_encoder_forward.3} parent=95 // pred_fallthru
        _
      // Predicated region
      $region109: #{low_scale_encoder_forward.3} parent=95 // pred_check
        %p713 = pneg %p129
      $region110: #{low_scale_encoder_forward.3} parent=95 // pred_check_branch
        %715 = sbr.rel (%p713) target = $region112
      $region111: #{low_scale_encoder_forward.3} parent=95 // pred_region
        %s716 = smul.u32 8, %s31
        %p717 = scmp.lt.s32.totalorder %s716, 15
        %s718 = scalar_select %p717, %s716, 15
        %s719 = smul.addr %s718, 8
        %s720 = scalar_lea.vmem %s3, %s719
        %s721 = smul.u32 8, %s31
      $region112: #{low_scale_encoder_forward.3} parent=95 // pred_fallthru
        _
      // Predicated region
      $region113: #{low_scale_encoder_forward.3} parent=95 // pred_check
        %p722 = pneg %p155
      $region114: #{low_scale_encoder_forward.3} parent=95 // pred_check_branch
        %724 = sbr.rel (%p722) target = $region116
      $region115: #{low_scale_encoder_forward.3} parent=95 // pred_region
        %s725 = smul.u32 8, %s31
        %p726 = scmp.lt.s32.totalorder %s725, 15
        %s727 = scalar_select %p726, %s725, 15
        %s728 = smul.addr %s727, 8
        %s729 = scalar_lea.vmem %s4, %s728
        %s730 = smul.u32 8, %s31
      $region116: #{low_scale_encoder_forward.3} parent=95 // pred_fallthru
        _
    $region96: #{low_scale_encoder_forward.3} parent=5 // pred_fallthru
      _
    %p731 = scmp.le.s32.totalorder 1, %s31
    %p732 = scmp.lt.s32.totalorder %s31, 3
    %p733 = pnand %p731, %p732
    %p734 = pneg %p733
    // Predicated region
    $region117: #{low_scale_encoder_forward.3} parent=5 // pred_check
      _
    $region118: #{low_scale_encoder_forward.3} parent=5 // pred_check_branch
      %736 = sbr.rel (%p733) target = $region120
    $region119: #{low_scale_encoder_forward.3} parent=5 // pred_region
      %s737 = ssub.s32 %s31, 1
      %s738 = smul.u32 8, %s36
      %p739 = scmp.lt.s32.totalorder %s738, 15
      %s740 = scalar_select %p739, %s738, 15
      %s741 = smul.addr %s740, 8
      %s742 = scalar_lea.vmem %s0, %s741
      %p743 = pneg %p57
      %p744 = pneg %p54
      %s745 = smul.u32 8, %s36
      %p746 = scmp.lt.s32.totalorder %s745, 15
      %s747 = scalar_select %p746, %s745, 15
      %s748 = smul.addr %s747, 8
      %s749 = scalar_lea.vmem %s1, %s748
      %p750 = pneg %p83
      %p751 = pneg %p80
      %s752 = smul.u32 8, %s36
      %p753 = scmp.lt.s32.totalorder %s752, 15
      %s754 = scalar_select %p753, %s752, 15
      %s755 = smul.addr %s754, 8
      %s756 = scalar_lea.vmem %s2, %s755
      %p757 = pneg %p109
      %p758 = pneg %p106
      %s759 = smul.u32 8, %s36
      %p760 = scmp.lt.s32.totalorder %s759, 15
      %s761 = scalar_select %p760, %s759, 15
      %s762 = smul.addr %s761, 8
      %s763 = scalar_lea.vmem %s3, %s762
      %p764 = pneg %p135
      %p765 = pneg %p132
      %s766 = smul.u32 8, %s36
      %p767 = scmp.lt.s32.totalorder %s766, 15
      %s768 = scalar_select %p767, %s766, 15
      %s769 = smul.addr %s768, 8
      %s770 = scalar_lea.vmem %s4, %s769
      %p771 = pneg %p161
      %p772 = pneg %p158
      %p773 = pneg %p182
      %p774 = pneg %p179
      %p775 = pneg %p203
      %p776 = pneg %p200
      %p777 = pneg %p224
      %p778 = pneg %p221
      %p779 = pneg %p245
      %p780 = pneg %p242
      %p781 = pneg %p266
      %p782 = pneg %p263
      %p783 = pneg %p287
      %p784 = pneg %p284
      %p785 = pneg %p308
      %p786 = pneg %p305
      %p787 = pneg %p329
      %p788 = pneg %p326
      %p789 = pneg %p350
      %p790 = pneg %p347
      %p791 = pneg %p371
      %p792 = pneg %p368
      %p793 = pneg %p392
      %p794 = pneg %p389
      %p795 = pneg %p413
      %p796 = pneg %p410
      %p797 = pneg %p434
      %p798 = pneg %p431
      %p799 = pneg %p455
      %p800 = pneg %p452
      %p801 = pneg %p476
      %p802 = pneg %p473
      %p803 = pneg %p497
      %p804 = pneg %p494
      %p805 = pneg %p518
      %p806 = pneg %p515
      %p807 = pneg %p539
      %p808 = pneg %p536
      %p809 = pneg %p560
      %p810 = pneg %p557
      %p811 = pneg %p581
      %p812 = pneg %p578
      %p813 = pneg %p607
      %p814 = pneg %p604
      %s815 = smul.u32 8, %s36
      %p816 = scmp.lt.s32.totalorder %s815, 15
      %s817 = scalar_select %p816, %s815, 15
      %s818 = smul.addr %s817, 8
      %s819 = scalar_lea.vmem %s25, %s818
      %s820 = smul.u32 8, %s36
      %p821 = scmp.lt.s32.totalorder %s820, 15
      %s822 = scalar_select %p821, %s820, 15
      %s823 = smul.addr %s822, 8
      %s824 = scalar_lea.vmem %s0, %s823
      %s825 = smul.u32 8, %s36
      %s826 = smul.u32 8, %s36
      %p827 = scmp.lt.s32.totalorder %s826, 15
      %s828 = scalar_select %p827, %s826, 15
      %s829 = smul.addr %s828, 8
      %s830 = scalar_lea.vmem %s1, %s829
      %s831 = smul.u32 8, %s36
      %s832 = smul.u32 8, %s36
      %p833 = scmp.lt.s32.totalorder %s832, 15
      %s834 = scalar_select %p833, %s832, 15
      %s835 = smul.addr %s834, 8
      %s836 = scalar_lea.vmem %s2, %s835
      %s837 = smul.u32 8, %s36
      %s838 = smul.u32 8, %s36
      %p839 = scmp.lt.s32.totalorder %s838, 15
      %s840 = scalar_select %p839, %s838, 15
      %s841 = smul.addr %s840, 8
      %s842 = scalar_lea.vmem %s3, %s841
      %s843 = smul.u32 8, %s36
      %s844 = smul.u32 8, %s36
      %p845 = scmp.lt.s32.totalorder %s844, 15
      %s846 = scalar_select %p845, %s844, 15
      %s847 = smul.addr %s846, 8
      %s848 = scalar_lea.vmem %s4, %s847
      %s849 = smul.u32 8, %s36
      %s850 = smul.u32 8, %s36
      %p851 = scmp.lt.s32.totalorder %s850, 15
      %s852 = scalar_select %p851, %s850, 15
      %s853 = smul.addr %s852, 8
      %s854 = scalar_lea.vmem %s25, %s853
      %s855 = smul.u32 8, %s36
      %v857 = vld [vmem:[%s824] sm:$0xff]
      %v858 = vld [vmem:[%s824 + $0x8] sm:$0xff]
      %v859 = vld [vmem:[%s824 + $0x10] sm:$0xff]
      %v860 = vld [vmem:[%s824 + $0x18] sm:$0xff]
      %v861 = vld [vmem:[%s824 + $0x20] sm:$0xff]
      %v862 = vld [vmem:[%s824 + $0x28] sm:$0xff]
      %v863 = vld [vmem:[%s824 + $0x30] sm:$0xff]
      %v864 = vld [vmem:[%s824 + $0x38] sm:$0xff]
      %v865 = vpack.c.bf16 %v858, %v857
      %v866 = vpack.c.bf16 %v860, %v859
      %v867 = vpack.c.bf16 %v862, %v861
      %v868 = vpack.c.bf16 %v864, %v863
      %v869 = vld [vmem:[%s5] sm:$0xf]
      %v870 = vld [vmem:[%s5 + $0x4] sm:$0xf]
      %v871 = vld [vmem:[%s5 + $0x8] sm:$0xf]
      %v872 = vld [vmem:[%s5 + $0xc] sm:$0xf]
      %v873 = vld [vmem:[%s5 + $0x10] sm:$0xf]
      %v874 = vld [vmem:[%s5 + $0x14] sm:$0xf]
      %v875 = vld [vmem:[%s6] sm:$0x1]
      %v877 = vlaneseq
      %v878 = vshrl.u32 %v877, 7
      %v879 = vsub.s32 0, %v878
      %v880 = vrot.slane %v875, %v879
      %v888 = vunpack.c.l.b16 %v869
      %v889 = vunpack.c.l.b16 %v870
      %v890 = vunpack.c.l.b16 %v871
      %v891 = vunpack.c.l.b16 %v872
      %v892 = vunpack.c.l.b16 %v873
      %v893 = vunpack.c.l.b16 %v874
      %v894 = vpack.c.b16 %v889, %v888
      %v895 = vpack.c.b16 %v891, %v890
      %v896 = vpack.c.b16 %v893, %v892
      %vm900 = vcmask 392192
      %v902 = vsel %vm900, %v865, 0
      %v905 = vsel %vm900, %v866, 0
      %v908 = vsel %vm900, %v867, 0
      %v911 = vsel %vm900, %v868, 0
      %913 = vmatprep.subr.bf16.mxu0 0
      %914 = vmatpush1.bf16.msra.mxu0 0
      %915 = vmatprep.subr.bf16.mxu0 0
      %916 = vmatpush1.bf16.msra.mxu0 0
      %917 = vmatprep.subr.bf16.mxu0 0
      %918 = vmatpush1.bf16.msra.mxu0 0
      %919 = vmatprep.subr.bf16.mxu0 0
      %920 = vmatpush1.bf16.msra.mxu0 0
      %921 = vmatprep.subr.bf16.mxu0 0
      %922 = vmatpush1.bf16.msra.mxu0 0
      %923 = vmatprep.subr.bf16.mxu0 0
      %924 = vmatpush1.bf16.msra.mxu0 %v896
      %925 = vmatprep.subr.bf16.mxu0 0
      %926 = vmatpush1.bf16.msra.mxu0 %v895
      %927 = vmatprep.subr.bf16.mxu0 0
      %928 = vmatpush1.bf16.msra.mxu0 %v894
      %929 = vmatprep.subr.bf16.mxu0 0
      %930 = vmatpush2.bf16.msra.mxu0 0
      %931 = vmatprep.subr.bf16.mxu0 0
      %932 = vmatpush2.bf16.msra.mxu0 0
      %933 = vmatprep.subr.bf16.mxu0 0
      %934 = vmatpush2.bf16.msra.mxu0 0
      %935 = vmatprep.subr.bf16.mxu0 0
      %936 = vmatpush2.bf16.msra.mxu0 0
      %937 = vmatprep.subr.bf16.mxu0 0
      %938 = vmatpush2.bf16.msra.mxu0 0
      %939 = vmatprep.subr.bf16.mxu0 0
      %940 = vmatpush2.bf16.msra.mxu0 0
      %941 = vmatprep.subr.bf16.mxu0 0
      %942 = vmatpush2.bf16.msra.mxu0 0
      %943 = vmatprep.subr.bf16.mxu0 0
      %944 = vmatpush2.bf16.msra.mxu0 0
      %945 = vmatprep.mubr.bf16.mxu0 0
      %946 = vmatmul.mubr.bf16.gmra.mxu0 %v902
      %v947 = vpop.f32.mrf.mxu0
      %v948 = vadd.f32 %v880, %v947
      %v949 = vpop.f32.mrf.mxu0
      %v950 = vpop.f32.mrf.mxu0
      %v951 = vadd.f32 %v880, %v950
      %v952 = vpop.f32.mrf.mxu0
      %953 = vmatprep.mubr.bf16.mxu0 0
      %954 = vmatmul.mubr.bf16.gmra.mxu0 %v905
      %v955 = vpop.f32.mrf.mxu0
      %v956 = vadd.f32 %v880, %v955
      %v957 = vpop.f32.mrf.mxu0
      %v958 = vpop.f32.mrf.mxu0
      %v959 = vadd.f32 %v880, %v958
      %v960 = vpop.f32.mrf.mxu0
      %961 = vmatprep.mubr.bf16.mxu0 0
      %962 = vmatmul.mubr.bf16.gmra.mxu0 %v908
      %v963 = vpop.f32.mrf.mxu0
      %v964 = vadd.f32 %v880, %v963
      %v965 = vpop.f32.mrf.mxu0
      %v966 = vpop.f32.mrf.mxu0
      %v967 = vadd.f32 %v880, %v966
      %v968 = vpop.f32.mrf.mxu0
      %969 = vmatprep.mubr.bf16.mxu0 0
      %970 = vmatmul.mubr.bf16.gmra.mxu0 %v911
      %v971 = vpop.f32.mrf.mxu0
      %v972 = vadd.f32 %v880, %v971
      %v973 = vpop.f32.mrf.mxu0
      %v974 = vpop.f32.mrf.mxu0
      %v975 = vadd.f32 %v880, %v974
      %v976 = vpop.f32.mrf.mxu0
      %977 = vdwg.mxu0
      %v978 = vld [vmem:[%s7] sm:$0x1]
      %v979 = vld [vmem:[%s8] sm:$0x1]
      %980 = vadd.xlane.f32.xlu0 %v948
      %v981 = vpop.xlane.xlu0 %980
      %982 = vadd.xlane.f32.xlu0 %v951
      %v983 = vpop.xlane.xlu0 %982
      %984 = vadd.xlane.f32.xlu0 %v956
      %v985 = vpop.xlane.xlu0 %984
      %986 = vadd.xlane.f32.xlu0 %v959
      %v987 = vpop.xlane.xlu0 %986
      %988 = vadd.xlane.f32.xlu0 %v964
      %v989 = vpop.xlane.xlu0 %988
      %990 = vadd.xlane.f32.xlu0 %v967
      %v991 = vpop.xlane.xlu0 %990
      %992 = vadd.xlane.f32.xlu0 %v972
      %v993 = vpop.xlane.xlu0 %992
      %994 = vadd.xlane.f32.xlu0 %v975
      %v995 = vpop.xlane.xlu0 %994
      %v996 = vrcp.pop 128.0
      %v997 = vmul.f32 %v981, %v996
      %v998 = vmul.f32 %v983, %v996
      %v999 = vmul.f32 %v985, %v996
      %v1000 = vmul.f32 %v987, %v996
      %v1001 = vmul.f32 %v989, %v996
      %v1002 = vmul.f32 %v991, %v996
      %v1003 = vmul.f32 %v993, %v996
      %v1004 = vmul.f32 %v995, %v996
      %v1005 = vsub.f32 %v948, %v997
      %v1006 = vsub.f32 %v951, %v998
      %v1007 = vsub.f32 %v956, %v999
      %v1008 = vsub.f32 %v959, %v1000
      %v1009 = vsub.f32 %v964, %v1001
      %v1010 = vsub.f32 %v967, %v1002
      %v1011 = vsub.f32 %v972, %v1003
      %v1012 = vsub.f32 %v975, %v1004
      %v1013 = vmul.f32 %v1005, %v1005
      %v1014 = vmul.f32 %v1006, %v1006
      %v1015 = vmul.f32 %v1007, %v1007
      %v1016 = vmul.f32 %v1008, %v1008
      %v1017 = vmul.f32 %v1009, %v1009
      %v1018 = vmul.f32 %v1010, %v1010
      %v1019 = vmul.f32 %v1011, %v1011
      %v1020 = vmul.f32 %v1012, %v1012
      %1021 = vadd.xlane.f32.xlu0 %v1013
      %v1022 = vpop.xlane.xlu0 %1021
      %1023 = vadd.xlane.f32.xlu0 %v1014
      %v1024 = vpop.xlane.xlu0 %1023
      %1025 = vadd.xlane.f32.xlu0 %v1015
      %v1026 = vpop.xlane.xlu0 %1025
      %1027 = vadd.xlane.f32.xlu0 %v1016
      %v1028 = vpop.xlane.xlu0 %1027
      %1029 = vadd.xlane.f32.xlu0 %v1017
      %v1030 = vpop.xlane.xlu0 %1029
      %1031 = vadd.xlane.f32.xlu0 %v1018
      %v1032 = vpop.xlane.xlu0 %1031
      %1033 = vadd.xlane.f32.xlu0 %v1019
      %v1034 = vpop.xlane.xlu0 %1033
      %1035 = vadd.xlane.f32.xlu0 %v1020
      %v1036 = vpop.xlane.xlu0 %1035
      %v1037 = vmul.f32 %v1022, %v996
      %v1038 = vmul.f32 %v1024, %v996
      %v1039 = vmul.f32 %v1026, %v996
      %v1040 = vmul.f32 %v1028, %v996
      %v1041 = vmul.f32 %v1030, %v996
      %v1042 = vmul.f32 %v1032, %v996
      %v1043 = vmul.f32 %v1034, %v996
      %v1044 = vmul.f32 %v1036, %v996
      %v1045 = vadd.f32 %v1037, 1e-05
      %v1046 = vadd.f32 %v1038, 1e-05
      %v1047 = vadd.f32 %v1039, 1e-05
      %v1048 = vadd.f32 %v1040, 1e-05
      %v1049 = vadd.f32 %v1041, 1e-05
      %v1050 = vadd.f32 %v1042, 1e-05
      %v1051 = vadd.f32 %v1043, 1e-05
      %v1052 = vadd.f32 %v1044, 1e-05
      %v1053 = vrsqrt.pop %v1045
      %v1054 = vrsqrt.pop %v1046
      %v1055 = vrsqrt.pop %v1047
      %v1056 = vrsqrt.pop %v1048
      %v1057 = vrsqrt.pop %v1049
      %v1058 = vrsqrt.pop %v1050
      %v1059 = vrsqrt.pop %v1051
      %v1060 = vrsqrt.pop %v1052
      %v1061 = vmul.f32 %v1005, %v1053
      %v1062 = vmul.f32 %v1006, %v1054
      %v1063 = vmul.f32 %v1007, %v1055
      %v1064 = vmul.f32 %v1008, %v1056
      %v1065 = vmul.f32 %v1009, %v1057
      %v1066 = vmul.f32 %v1010, %v1058
      %v1067 = vmul.f32 %v1011, %v1059
      %v1068 = vmul.f32 %v1012, %v1060
      %v1070 = vlaneseq
      %v1071 = vshrl.u32 %v1070, 7
      %v1072 = vsub.s32 0, %v1071
      %v1073 = vrot.slane %v978, %v1072
      %v1075 = vmul.f32 %v1061, %v1073
      %v1076 = vmul.f32 %v1062, %v1073
      %v1077 = vmul.f32 %v1063, %v1073
      %v1078 = vmul.f32 %v1064, %v1073
      %v1079 = vmul.f32 %v1065, %v1073
      %v1080 = vmul.f32 %v1066, %v1073
      %v1081 = vmul.f32 %v1067, %v1073
      %v1082 = vmul.f32 %v1068, %v1073
      %v1084 = vlaneseq
      %v1085 = vshrl.u32 %v1084, 7
      %v1086 = vsub.s32 0, %v1085
      %v1087 = vrot.slane %v979, %v1086
      %v1089 = vadd.f32 %v1075, %v1087
      %v1090 = vadd.f32 %v1076, %v1087
      %v1091 = vadd.f32 %v1077, %v1087
      %v1092 = vadd.f32 %v1078, %v1087
      %v1093 = vadd.f32 %v1079, %v1087
      %v1094 = vadd.f32 %v1080, %v1087
      %v1095 = vadd.f32 %v1081, %v1087
      %v1096 = vadd.f32 %v1082, %v1087
      %v1097 = vpack.c.bf16 %v1090, %v1089
      %v1098 = vpack.c.bf16 %v1092, %v1091
      %v1099 = vpack.c.bf16 %v1094, %v1093
      %v1100 = vpack.c.bf16 %v1096, %v1095
      %v1101 = vld [vmem:[%s9] sm:$0xff]
      %v1102 = vld [vmem:[%s9 + $0x8] sm:$0xff]
      %v1103 = vld [vmem:[%s9 + $0x10] sm:$0xff]
      %v1104 = vld [vmem:[%s9 + $0x18] sm:$0xff]
      %v1105 = vld [vmem:[%s9 + $0x20] sm:$0xff]
      %v1106 = vld [vmem:[%s9 + $0x28] sm:$0xff]
      %v1107 = vld [vmem:[%s9 + $0x30] sm:$0xff]
      %v1108 = vld [vmem:[%s9 + $0x38] sm:$0xff]
      %v1109 = vld [vmem:[%s9 + $0x40] sm:$0xff]
      %v1110 = vld [vmem:[%s9 + $0x48] sm:$0xff]
      %v1111 = vld [vmem:[%s9 + $0x50] sm:$0xff]
      %v1112 = vld [vmem:[%s9 + $0x58] sm:$0xff]
      %v1113 = vld [vmem:[%s9 + $0x60] sm:$0xff]
      %v1114 = vld [vmem:[%s9 + $0x68] sm:$0xff]
      %v1115 = vld [vmem:[%s9 + $0x70] sm:$0xff]
      %v1116 = vld [vmem:[%s9 + $0x78] sm:$0xff]
      %v1117 = vld [vmem:[%s10] sm:$0x3]
      %v1119 = vlaneseq
      %v1120 = vshrl.u32 %v1119, 7
      %v1121 = vsub.s32 0, %v1120
      %v1122 = vrot.slane %v1117, %v1121
      %v1123 = vlaneseq
      %v1124 = vshrl.u32 %v1123, 7
      %v1125 = vsub.s32 1, %v1124
      %v1126 = vrot.slane %v1117, %v1125
      %v1145 = vunpack.c.l.b16 %v1101
      %v1146 = vunpack.c.h.b16 %v1101
      %v1147 = vunpack.c.l.b16 %v1102
      %v1148 = vunpack.c.h.b16 %v1102
      %v1149 = vunpack.c.l.b16 %v1103
      %v1150 = vunpack.c.h.b16 %v1103
      %v1151 = vunpack.c.l.b16 %v1104
      %v1152 = vunpack.c.h.b16 %v1104
      %v1153 = vunpack.c.l.b16 %v1105
      %v1154 = vunpack.c.h.b16 %v1105
      %v1155 = vunpack.c.l.b16 %v1106
      %v1156 = vunpack.c.h.b16 %v1106
      %v1157 = vunpack.c.l.b16 %v1107
      %v1158 = vunpack.c.h.b16 %v1107
      %v1159 = vunpack.c.l.b16 %v1108
      %v1160 = vunpack.c.h.b16 %v1108
      %v1161 = vunpack.c.l.b16 %v1109
      %v1162 = vunpack.c.h.b16 %v1109
      %v1163 = vunpack.c.l.b16 %v1110
      %v1164 = vunpack.c.h.b16 %v1110
      %v1165 = vunpack.c.l.b16 %v1111
      %v1166 = vunpack.c.h.b16 %v1111
      %v1167 = vunpack.c.l.b16 %v1112
      %v1168 = vunpack.c.h.b16 %v1112
      %v1169 = vunpack.c.l.b16 %v1113
      %v1170 = vunpack.c.h.b16 %v1113
      %v1171 = vunpack.c.l.b16 %v1114
      %v1172 = vunpack.c.h.b16 %v1114
      %v1173 = vunpack.c.l.b16 %v1115
      %v1174 = vunpack.c.h.b16 %v1115
      %v1175 = vunpack.c.l.b16 %v1116
      %v1176 = vunpack.c.h.b16 %v1116
      %v1177 = vpack.c.b16 %v1147, %v1145
      %v1178 = vpack.c.b16 %v1148, %v1146
      %v1179 = vpack.c.b16 %v1151, %v1149
      %v1180 = vpack.c.b16 %v1152, %v1150
      %v1181 = vpack.c.b16 %v1155, %v1153
      %v1182 = vpack.c.b16 %v1156, %v1154
      %v1183 = vpack.c.b16 %v1159, %v1157
      %v1184 = vpack.c.b16 %v1160, %v1158
      %v1185 = vpack.c.b16 %v1163, %v1161
      %v1186 = vpack.c.b16 %v1164, %v1162
      %v1187 = vpack.c.b16 %v1167, %v1165
      %v1188 = vpack.c.b16 %v1168, %v1166
      %v1189 = vpack.c.b16 %v1171, %v1169
      %v1190 = vpack.c.b16 %v1172, %v1170
      %v1191 = vpack.c.b16 %v1175, %v1173
      %v1192 = vpack.c.b16 %v1176, %v1174
      %1209 = vmatprep.subr.bf16.mxu0 %v1192
      %1210 = vmatpush1.bf16.msra.mxu0 %v1191
      %1211 = vmatprep.subr.bf16.mxu0 %v1190
      %1212 = vmatpush1.bf16.msra.mxu0 %v1189
      %1213 = vmatprep.subr.bf16.mxu0 %v1188
      %1214 = vmatpush1.bf16.msra.mxu0 %v1187
      %1215 = vmatprep.subr.bf16.mxu0 %v1186
      %1216 = vmatpush1.bf16.msra.mxu0 %v1185
      %1217 = vmatprep.subr.bf16.mxu0 %v1184
      %1218 = vmatpush1.bf16.msra.mxu0 %v1183
      %1219 = vmatprep.subr.bf16.mxu0 %v1182
      %1220 = vmatpush1.bf16.msra.mxu0 %v1181
      %1221 = vmatprep.subr.bf16.mxu0 %v1180
      %1222 = vmatpush1.bf16.msra.mxu0 %v1179
      %1223 = vmatprep.subr.bf16.mxu0 %v1178
      %1224 = vmatpush1.bf16.msra.mxu0 %v1177
      %1225 = vmatprep.subr.bf16.mxu0 0
      %1226 = vmatpush2.bf16.msra.mxu0 0
      %1227 = vmatprep.subr.bf16.mxu0 0
      %1228 = vmatpush2.bf16.msra.mxu0 0
      %1229 = vmatprep.subr.bf16.mxu0 0
      %1230 = vmatpush2.bf16.msra.mxu0 0
      %1231 = vmatprep.subr.bf16.mxu0 0
      %1232 = vmatpush2.bf16.msra.mxu0 0
      %1233 = vmatprep.subr.bf16.mxu0 0
      %1234 = vmatpush2.bf16.msra.mxu0 0
      %1235 = vmatprep.subr.bf16.mxu0 0
      %1236 = vmatpush2.bf16.msra.mxu0 0
      %1237 = vmatprep.subr.bf16.mxu0 0
      %1238 = vmatpush2.bf16.msra.mxu0 0
      %1239 = vmatprep.subr.bf16.mxu0 0
      %1240 = vmatpush2.bf16.msra.mxu0 0
      %1241 = vmatprep.mubr.bf16.mxu0 0
      %1242 = vmatmul.mubr.bf16.gmra.mxu0 %v1097
      %v1243 = vpop.f32.mrf.mxu0
      %v1244 = vadd.f32 %v1122, %v1243
      %v1245 = vpop.f32.mrf.mxu0
      %v1246 = vadd.f32 %v1126, %v1245
      %v1247 = vpop.f32.mrf.mxu0
      %v1248 = vadd.f32 %v1122, %v1247
      %v1249 = vpop.f32.mrf.mxu0
      %v1250 = vadd.f32 %v1126, %v1249
      %1251 = vmatprep.mubr.bf16.mxu0 0
      %1252 = vmatmul.mubr.bf16.gmra.mxu0 %v1098
      %v1253 = vpop.f32.mrf.mxu0
      %v1254 = vadd.f32 %v1122, %v1253
      %v1255 = vpop.f32.mrf.mxu0
      %v1256 = vadd.f32 %v1126, %v1255
      %v1257 = vpop.f32.mrf.mxu0
      %v1258 = vadd.f32 %v1122, %v1257
      %v1259 = vpop.f32.mrf.mxu0
      %v1260 = vadd.f32 %v1126, %v1259
      %1261 = vmatprep.mubr.bf16.mxu0 0
      %1262 = vmatmul.mubr.bf16.gmra.mxu0 %v1099
      %v1263 = vpop.f32.mrf.mxu0
      %v1264 = vadd.f32 %v1122, %v1263
      %v1265 = vpop.f32.mrf.mxu0
      %v1266 = vadd.f32 %v1126, %v1265
      %v1267 = vpop.f32.mrf.mxu0
      %v1268 = vadd.f32 %v1122, %v1267
      %v1269 = vpop.f32.mrf.mxu0
      %v1270 = vadd.f32 %v1126, %v1269
      %1271 = vmatprep.mubr.bf16.mxu0 0
      %1272 = vmatmul.mubr.bf16.gmra.mxu0 %v1100
      %v1273 = vpop.f32.mrf.mxu0
      %v1274 = vadd.f32 %v1122, %v1273
      %v1275 = vpop.f32.mrf.mxu0
      %v1276 = vadd.f32 %v1126, %v1275
      %v1277 = vpop.f32.mrf.mxu0
      %v1278 = vadd.f32 %v1122, %v1277
      %v1279 = vpop.f32.mrf.mxu0
      %v1280 = vadd.f32 %v1126, %v1279
      %1281 = vdwg.mxu0
      %v1282 = vxor.u32 %v1244, 2147483648
      %v1283 = vxor.u32 %v1246, 2147483648
      %v1284 = vxor.u32 %v1248, 2147483648
      %v1285 = vxor.u32 %v1250, 2147483648
      %v1286 = vxor.u32 %v1254, 2147483648
      %v1287 = vxor.u32 %v1256, 2147483648
      %v1288 = vxor.u32 %v1258, 2147483648
      %v1289 = vxor.u32 %v1260, 2147483648
      %v1290 = vxor.u32 %v1264, 2147483648
      %v1291 = vxor.u32 %v1266, 2147483648
      %v1292 = vxor.u32 %v1268, 2147483648
      %v1293 = vxor.u32 %v1270, 2147483648
      %v1294 = vxor.u32 %v1274, 2147483648
      %v1295 = vxor.u32 %v1276, 2147483648
      %v1296 = vxor.u32 %v1278, 2147483648
      %v1297 = vxor.u32 %v1280, 2147483648
      %v1298 = vmul.f32 %v1282, 1.442695
      %v1299 = vpow.pop %v1298
      %v1300 = vmul.f32 %v1283, 1.442695
      %v1301 = vpow.pop %v1300
      %v1302 = vmul.f32 %v1284, 1.442695
      %v1303 = vpow.pop %v1302
      %v1304 = vmul.f32 %v1285, 1.442695
      %v1305 = vpow.pop %v1304
      %v1306 = vmul.f32 %v1286, 1.442695
      %v1307 = vpow.pop %v1306
      %v1308 = vmul.f32 %v1287, 1.442695
      %v1309 = vpow.pop %v1308
      %v1310 = vmul.f32 %v1288, 1.442695
      %v1311 = vpow.pop %v1310
      %v1312 = vmul.f32 %v1289, 1.442695
      %v1313 = vpow.pop %v1312
      %v1314 = vmul.f32 %v1290, 1.442695
      %v1315 = vpow.pop %v1314
      %v1316 = vmul.f32 %v1291, 1.442695
      %v1317 = vpow.pop %v1316
      %v1318 = vmul.f32 %v1292, 1.442695
      %v1319 = vpow.pop %v1318
      %v1320 = vmul.f32 %v1293, 1.442695
      %v1321 = vpow.pop %v1320
      %v1322 = vmul.f32 %v1294, 1.442695
      %v1323 = vpow.pop %v1322
      %v1324 = vmul.f32 %v1295, 1.442695
      %v1325 = vpow.pop %v1324
      %v1326 = vmul.f32 %v1296, 1.442695
      %v1327 = vpow.pop %v1326
      %v1328 = vmul.f32 %v1297, 1.442695
      %v1329 = vpow.pop %v1328
      %v1330 = vadd.f32 %v1299, 1.0
      %v1331 = vadd.f32 %v1301, 1.0
      %v1332 = vadd.f32 %v1303, 1.0
      %v1333 = vadd.f32 %v1305, 1.0
      %v1334 = vadd.f32 %v1307, 1.0
      %v1335 = vadd.f32 %v1309, 1.0
      %v1336 = vadd.f32 %v1311, 1.0
      %v1337 = vadd.f32 %v1313, 1.0
      %v1338 = vadd.f32 %v1315, 1.0
      %v1339 = vadd.f32 %v1317, 1.0
      %v1340 = vadd.f32 %v1319, 1.0
      %v1341 = vadd.f32 %v1321, 1.0
      %v1342 = vadd.f32 %v1323, 1.0
      %v1343 = vadd.f32 %v1325, 1.0
      %v1344 = vadd.f32 %v1327, 1.0
      %v1345 = vadd.f32 %v1329, 1.0
      %v1346 = vrcp.pop %v1330
      %v1347 = vmul.f32 1.0, %v1346
      %v1348 = vrcp.pop %v1331
      %v1349 = vmul.f32 1.0, %v1348
      %v1350 = vrcp.pop %v1332
      %v1351 = vmul.f32 1.0, %v1350
      %v1352 = vrcp.pop %v1333
      %v1353 = vmul.f32 1.0, %v1352
      %v1354 = vrcp.pop %v1334
      %v1355 = vmul.f32 1.0, %v1354
      %v1356 = vrcp.pop %v1335
      %v1357 = vmul.f32 1.0, %v1356
      %v1358 = vrcp.pop %v1336
      %v1359 = vmul.f32 1.0, %v1358
      %v1360 = vrcp.pop %v1337
      %v1361 = vmul.f32 1.0, %v1360
      %v1362 = vrcp.pop %v1338
      %v1363 = vmul.f32 1.0, %v1362
      %v1364 = vrcp.pop %v1339
      %v1365 = vmul.f32 1.0, %v1364
      %v1366 = vrcp.pop %v1340
      %v1367 = vmul.f32 1.0, %v1366
      %v1368 = vrcp.pop %v1341
      %v1369 = vmul.f32 1.0, %v1368
      %v1370 = vrcp.pop %v1342
      %v1371 = vmul.f32 1.0, %v1370
      %v1372 = vrcp.pop %v1343
      %v1373 = vmul.f32 1.0, %v1372
      %v1374 = vrcp.pop %v1344
      %v1375 = vmul.f32 1.0, %v1374
      %v1376 = vrcp.pop %v1345
      %v1377 = vmul.f32 1.0, %v1376
      %v1378 = vmul.f32 %v1244, %v1347
      %v1379 = vmul.f32 %v1246, %v1349
      %v1380 = vmul.f32 %v1248, %v1351
      %v1381 = vmul.f32 %v1250, %v1353
      %v1382 = vmul.f32 %v1254, %v1355
      %v1383 = vmul.f32 %v1256, %v1357
      %v1384 = vmul.f32 %v1258, %v1359
      %v1385 = vmul.f32 %v1260, %v1361
      %v1386 = vmul.f32 %v1264, %v1363
      %v1387 = vmul.f32 %v1266, %v1365
      %v1388 = vmul.f32 %v1268, %v1367
      %v1389 = vmul.f32 %v1270, %v1369
      %v1390 = vmul.f32 %v1274, %v1371
      %v1391 = vmul.f32 %v1276, %v1373
      %v1392 = vmul.f32 %v1278, %v1375
      %v1393 = vmul.f32 %v1280, %v1377
      %v1394 = vpack.c.bf16 %v1380, %v1378
      %v1395 = vpack.c.bf16 %v1381, %v1379
      %v1396 = vpack.c.bf16 %v1384, %v1382
      %v1397 = vpack.c.bf16 %v1385, %v1383
      %v1398 = vpack.c.bf16 %v1388, %v1386
      %v1399 = vpack.c.bf16 %v1389, %v1387
      %v1400 = vpack.c.bf16 %v1392, %v1390
      %v1401 = vpack.c.bf16 %v1393, %v1391
      %v1402 = vld [vmem:[%s11] sm:$0xf]
      %v1403 = vld [vmem:[%s11 + $0x4] sm:$0xf]
      %v1404 = vld [vmem:[%s11 + $0x8] sm:$0xf]
      %v1405 = vld [vmem:[%s11 + $0xc] sm:$0xf]
      %v1406 = vld [vmem:[%s11 + $0x10] sm:$0xf]
      %v1407 = vld [vmem:[%s11 + $0x14] sm:$0xf]
      %v1408 = vld [vmem:[%s11 + $0x18] sm:$0xf]
      %v1409 = vld [vmem:[%s11 + $0x1c] sm:$0xf]
      %v1410 = vld [vmem:[%s11 + $0x20] sm:$0xf]
      %v1411 = vld [vmem:[%s11 + $0x24] sm:$0xf]
      %v1412 = vld [vmem:[%s11 + $0x28] sm:$0xf]
      %v1413 = vld [vmem:[%s11 + $0x2c] sm:$0xf]
      %v1414 = vld [vmem:[%s11 + $0x30] sm:$0xf]
      %v1415 = vld [vmem:[%s11 + $0x34] sm:$0xf]
      %v1416 = vld [vmem:[%s11 + $0x38] sm:$0xf]
      %v1417 = vld [vmem:[%s11 + $0x3c] sm:$0xf]
      %v1418 = vld [vmem:[%s11 + $0x40] sm:$0xf]
      %v1419 = vld [vmem:[%s11 + $0x44] sm:$0xf]
      %v1420 = vld [vmem:[%s11 + $0x48] sm:$0xf]
      %v1421 = vld [vmem:[%s11 + $0x4c] sm:$0xf]
      %v1422 = vld [vmem:[%s11 + $0x50] sm:$0xf]
      %v1423 = vld [vmem:[%s11 + $0x54] sm:$0xf]
      %v1424 = vld [vmem:[%s11 + $0x58] sm:$0xf]
      %v1425 = vld [vmem:[%s11 + $0x5c] sm:$0xf]
      %v1426 = vld [vmem:[%s11 + $0x60] sm:$0xf]
      %v1427 = vld [vmem:[%s11 + $0x64] sm:$0xf]
      %v1428 = vld [vmem:[%s11 + $0x68] sm:$0xf]
      %v1429 = vld [vmem:[%s11 + $0x6c] sm:$0xf]
      %v1430 = vld [vmem:[%s11 + $0x70] sm:$0xf]
      %v1431 = vld [vmem:[%s11 + $0x74] sm:$0xf]
      %v1432 = vld [vmem:[%s11 + $0x78] sm:$0xf]
      %v1433 = vld [vmem:[%s11 + $0x7c] sm:$0xf]
      %v1434 = vld [vmem:[%s12] sm:$0x1]
      %v1436 = vlaneseq
      %v1437 = vshrl.u32 %v1436, 7
      %v1438 = vsub.s32 0, %v1437
      %v1439 = vrot.slane %v1434, %v1438
      %v1473 = vunpack.c.l.b16 %v1402
      %v1474 = vunpack.c.l.b16 %v1403
      %v1475 = vunpack.c.l.b16 %v1404
      %v1476 = vunpack.c.l.b16 %v1405
      %v1477 = vunpack.c.l.b16 %v1406
      %v1478 = vunpack.c.l.b16 %v1407
      %v1479 = vunpack.c.l.b16 %v1408
      %v1480 = vunpack.c.l.b16 %v1409
      %v1481 = vunpack.c.l.b16 %v1410
      %v1482 = vunpack.c.l.b16 %v1411
      %v1483 = vunpack.c.l.b16 %v1412
      %v1484 = vunpack.c.l.b16 %v1413
      %v1485 = vunpack.c.l.b16 %v1414
      %v1486 = vunpack.c.l.b16 %v1415
      %v1487 = vunpack.c.l.b16 %v1416
      %v1488 = vunpack.c.l.b16 %v1417
      %v1489 = vunpack.c.l.b16 %v1418
      %v1490 = vunpack.c.l.b16 %v1419
      %v1491 = vunpack.c.l.b16 %v1420
      %v1492 = vunpack.c.l.b16 %v1421
      %v1493 = vunpack.c.l.b16 %v1422
      %v1494 = vunpack.c.l.b16 %v1423
      %v1495 = vunpack.c.l.b16 %v1424
      %v1496 = vunpack.c.l.b16 %v1425
      %v1497 = vunpack.c.l.b16 %v1426
      %v1498 = vunpack.c.l.b16 %v1427
      %v1499 = vunpack.c.l.b16 %v1428
      %v1500 = vunpack.c.l.b16 %v1429
      %v1501 = vunpack.c.l.b16 %v1430
      %v1502 = vunpack.c.l.b16 %v1431
      %v1503 = vunpack.c.l.b16 %v1432
      %v1504 = vunpack.c.l.b16 %v1433
      %v1505 = vpack.c.b16 %v1474, %v1473
      %v1506 = vpack.c.b16 %v1476, %v1475
      %v1507 = vpack.c.b16 %v1478, %v1477
      %v1508 = vpack.c.b16 %v1480, %v1479
      %v1509 = vpack.c.b16 %v1482, %v1481
      %v1510 = vpack.c.b16 %v1484, %v1483
      %v1511 = vpack.c.b16 %v1486, %v1485
      %v1512 = vpack.c.b16 %v1488, %v1487
      %v1513 = vpack.c.b16 %v1490, %v1489
      %v1514 = vpack.c.b16 %v1492, %v1491
      %v1515 = vpack.c.b16 %v1494, %v1493
      %v1516 = vpack.c.b16 %v1496, %v1495
      %v1517 = vpack.c.b16 %v1498, %v1497
      %v1518 = vpack.c.b16 %v1500, %v1499
      %v1519 = vpack.c.b16 %v1502, %v1501
      %v1520 = vpack.c.b16 %v1504, %v1503
      %1537 = vmatprep.subr.bf16.mxu0 0
      %1538 = vmatpush1.bf16.msra.mxu0 %v1512
      %1539 = vmatprep.subr.bf16.mxu0 0
      %1540 = vmatpush1.bf16.msra.mxu0 %v1511
      %1541 = vmatprep.subr.bf16.mxu0 0
      %1542 = vmatpush1.bf16.msra.mxu0 %v1510
      %1543 = vmatprep.subr.bf16.mxu0 0
      %1544 = vmatpush1.bf16.msra.mxu0 %v1509
      %1545 = vmatprep.subr.bf16.mxu0 0
      %1546 = vmatpush1.bf16.msra.mxu0 %v1508
      %1547 = vmatprep.subr.bf16.mxu0 0
      %1548 = vmatpush1.bf16.msra.mxu0 %v1507
      %1549 = vmatprep.subr.bf16.mxu0 0
      %1550 = vmatpush1.bf16.msra.mxu0 %v1506
      %1551 = vmatprep.subr.bf16.mxu0 0
      %1552 = vmatpush1.bf16.msra.mxu0 %v1505
      %1553 = vmatprep.subr.bf16.mxu0 0
      %1554 = vmatpush2.bf16.msra.mxu0 %v1520
      %1555 = vmatprep.subr.bf16.mxu0 0
      %1556 = vmatpush2.bf16.msra.mxu0 %v1519
      %1557 = vmatprep.subr.bf16.mxu0 0
      %1558 = vmatpush2.bf16.msra.mxu0 %v1518
      %1559 = vmatprep.subr.bf16.mxu0 0
      %1560 = vmatpush2.bf16.msra.mxu0 %v1517
      %1561 = vmatprep.subr.bf16.mxu0 0
      %1562 = vmatpush2.bf16.msra.mxu0 %v1516
      %1563 = vmatprep.subr.bf16.mxu0 0
      %1564 = vmatpush2.bf16.msra.mxu0 %v1515
      %1565 = vmatprep.subr.bf16.mxu0 0
      %1566 = vmatpush2.bf16.msra.mxu0 %v1514
      %1567 = vmatprep.subr.bf16.mxu0 0
      %1568 = vmatpush2.bf16.msra.mxu0 %v1513
      %1569 = vmatprep.mubr.bf16.mxu0 %v1395
      %1570 = vmatmul.mubr.bf16.gmra.mxu0 %v1394
      %v1571 = vpop.f32.mrf.mxu0
      %v1572 = vadd.f32 %v1439, %v1571
      %v1573 = vpop.f32.mrf.mxu0
      %v1574 = vpop.f32.mrf.mxu0
      %v1575 = vadd.f32 %v1439, %v1574
      %v1576 = vpop.f32.mrf.mxu0
      %1577 = vmatprep.mubr.bf16.mxu0 %v1397
      %1578 = vmatmul.mubr.bf16.gmra.mxu0 %v1396
      %v1579 = vpop.f32.mrf.mxu0
      %v1580 = vadd.f32 %v1439, %v1579
      %v1581 = vpop.f32.mrf.mxu0
      %v1582 = vpop.f32.mrf.mxu0
      %v1583 = vadd.f32 %v1439, %v1582
      %v1584 = vpop.f32.mrf.mxu0
      %1585 = vmatprep.mubr.bf16.mxu0 %v1399
      %1586 = vmatmul.mubr.bf16.gmra.mxu0 %v1398
      %v1587 = vpop.f32.mrf.mxu0
      %v1588 = vadd.f32 %v1439, %v1587
      %v1589 = vpop.f32.mrf.mxu0
      %v1590 = vpop.f32.mrf.mxu0
      %v1591 = vadd.f32 %v1439, %v1590
      %v1592 = vpop.f32.mrf.mxu0
      %1593 = vmatprep.mubr.bf16.mxu0 %v1401
      %1594 = vmatmul.mubr.bf16.gmra.mxu0 %v1400
      %v1595 = vpop.f32.mrf.mxu0
      %v1596 = vadd.f32 %v1439, %v1595
      %v1597 = vpop.f32.mrf.mxu0
      %v1598 = vpop.f32.mrf.mxu0
      %v1599 = vadd.f32 %v1439, %v1598
      %v1600 = vpop.f32.mrf.mxu0
      %1601 = vdwg.mxu0
      %v1602 = vadd.f32 %v948, %v1572
      %v1603 = vadd.f32 %v951, %v1575
      %v1604 = vadd.f32 %v956, %v1580
      %v1605 = vadd.f32 %v959, %v1583
      %v1606 = vadd.f32 %v964, %v1588
      %v1607 = vadd.f32 %v967, %v1591
      %v1608 = vadd.f32 %v972, %v1596
      %v1609 = vadd.f32 %v975, %v1599
      %v1610 = vld [vmem:[%s13] sm:$0x1]
      %v1611 = vld [vmem:[%s14] sm:$0x1]
      %1612 = vadd.xlane.f32.xlu0 %v1602
      %v1613 = vpop.xlane.xlu0 %1612
      %1614 = vadd.xlane.f32.xlu0 %v1603
      %v1615 = vpop.xlane.xlu0 %1614
      %1616 = vadd.xlane.f32.xlu0 %v1604
      %v1617 = vpop.xlane.xlu0 %1616
      %1618 = vadd.xlane.f32.xlu0 %v1605
      %v1619 = vpop.xlane.xlu0 %1618
      %1620 = vadd.xlane.f32.xlu0 %v1606
      %v1621 = vpop.xlane.xlu0 %1620
      %1622 = vadd.xlane.f32.xlu0 %v1607
      %v1623 = vpop.xlane.xlu0 %1622
      %1624 = vadd.xlane.f32.xlu0 %v1608
      %v1625 = vpop.xlane.xlu0 %1624
      %1626 = vadd.xlane.f32.xlu0 %v1609
      %v1627 = vpop.xlane.xlu0 %1626
      %v1628 = vmul.f32 %v1613, %v996
      %v1629 = vmul.f32 %v1615, %v996
      %v1630 = vmul.f32 %v1617, %v996
      %v1631 = vmul.f32 %v1619, %v996
      %v1632 = vmul.f32 %v1621, %v996
      %v1633 = vmul.f32 %v1623, %v996
      %v1634 = vmul.f32 %v1625, %v996
      %v1635 = vmul.f32 %v1627, %v996
      %v1636 = vsub.f32 %v1602, %v1628
      %v1637 = vsub.f32 %v1603, %v1629
      %v1638 = vsub.f32 %v1604, %v1630
      %v1639 = vsub.f32 %v1605, %v1631
      %v1640 = vsub.f32 %v1606, %v1632
      %v1641 = vsub.f32 %v1607, %v1633
      %v1642 = vsub.f32 %v1608, %v1634
      %v1643 = vsub.f32 %v1609, %v1635
      %v1644 = vmul.f32 %v1636, %v1636
      %v1645 = vmul.f32 %v1637, %v1637
      %v1646 = vmul.f32 %v1638, %v1638
      %v1647 = vmul.f32 %v1639, %v1639
      %v1648 = vmul.f32 %v1640, %v1640
      %v1649 = vmul.f32 %v1641, %v1641
      %v1650 = vmul.f32 %v1642, %v1642
      %v1651 = vmul.f32 %v1643, %v1643
      %1652 = vadd.xlane.f32.xlu0 %v1644
      %v1653 = vpop.xlane.xlu0 %1652
      %1654 = vadd.xlane.f32.xlu0 %v1645
      %v1655 = vpop.xlane.xlu0 %1654
      %1656 = vadd.xlane.f32.xlu0 %v1646
      %v1657 = vpop.xlane.xlu0 %1656
      %1658 = vadd.xlane.f32.xlu0 %v1647
      %v1659 = vpop.xlane.xlu0 %1658
      %1660 = vadd.xlane.f32.xlu0 %v1648
      %v1661 = vpop.xlane.xlu0 %1660
      %1662 = vadd.xlane.f32.xlu0 %v1649
      %v1663 = vpop.xlane.xlu0 %1662
      %1664 = vadd.xlane.f32.xlu0 %v1650
      %v1665 = vpop.xlane.xlu0 %1664
      %1666 = vadd.xlane.f32.xlu0 %v1651
      %v1667 = vpop.xlane.xlu0 %1666
      %v1668 = vmul.f32 %v1653, %v996
      %v1669 = vmul.f32 %v1655, %v996
      %v1670 = vmul.f32 %v1657, %v996
      %v1671 = vmul.f32 %v1659, %v996
      %v1672 = vmul.f32 %v1661, %v996
      %v1673 = vmul.f32 %v1663, %v996
      %v1674 = vmul.f32 %v1665, %v996
      %v1675 = vmul.f32 %v1667, %v996
      %v1676 = vadd.f32 %v1668, 1e-05
      %v1677 = vadd.f32 %v1669, 1e-05
      %v1678 = vadd.f32 %v1670, 1e-05
      %v1679 = vadd.f32 %v1671, 1e-05
      %v1680 = vadd.f32 %v1672, 1e-05
      %v1681 = vadd.f32 %v1673, 1e-05
      %v1682 = vadd.f32 %v1674, 1e-05
      %v1683 = vadd.f32 %v1675, 1e-05
      %v1684 = vrsqrt.pop %v1676
      %v1685 = vrsqrt.pop %v1677
      %v1686 = vrsqrt.pop %v1678
      %v1687 = vrsqrt.pop %v1679
      %v1688 = vrsqrt.pop %v1680
      %v1689 = vrsqrt.pop %v1681
      %v1690 = vrsqrt.pop %v1682
      %v1691 = vrsqrt.pop %v1683
      %v1692 = vmul.f32 %v1636, %v1684
      %v1693 = vmul.f32 %v1637, %v1685
      %v1694 = vmul.f32 %v1638, %v1686
      %v1695 = vmul.f32 %v1639, %v1687
      %v1696 = vmul.f32 %v1640, %v1688
      %v1697 = vmul.f32 %v1641, %v1689
      %v1698 = vmul.f32 %v1642, %v1690
      %v1699 = vmul.f32 %v1643, %v1691
      %v1701 = vlaneseq
      %v1702 = vshrl.u32 %v1701, 7
      %v1703 = vsub.s32 0, %v1702
      %v1704 = vrot.slane %v1610, %v1703
      %v1706 = vmul.f32 %v1692, %v1704
      %v1707 = vmul.f32 %v1693, %v1704
      %v1708 = vmul.f32 %v1694, %v1704
      %v1709 = vmul.f32 %v1695, %v1704
      %v1710 = vmul.f32 %v1696, %v1704
      %v1711 = vmul.f32 %v1697, %v1704
      %v1712 = vmul.f32 %v1698, %v1704
      %v1713 = vmul.f32 %v1699, %v1704
      %v1715 = vlaneseq
      %v1716 = vshrl.u32 %v1715, 7
      %v1717 = vsub.s32 0, %v1716
      %v1718 = vrot.slane %v1611, %v1717
      %v1720 = vadd.f32 %v1706, %v1718
      %v1721 = vadd.f32 %v1707, %v1718
      %v1722 = vadd.f32 %v1708, %v1718
      %v1723 = vadd.f32 %v1709, %v1718
      %v1724 = vadd.f32 %v1710, %v1718
      %v1725 = vadd.f32 %v1711, %v1718
      %v1726 = vadd.f32 %v1712, %v1718
      %v1727 = vadd.f32 %v1713, %v1718
      %v1728 = vpack.c.bf16 %v1721, %v1720
      %v1729 = vpack.c.bf16 %v1723, %v1722
      %v1730 = vpack.c.bf16 %v1725, %v1724
      %v1731 = vpack.c.bf16 %v1727, %v1726
      %v1732 = vld [vmem:[%s15] sm:$0xff]
      %v1733 = vld [vmem:[%s15 + $0x8] sm:$0xff]
      %v1734 = vld [vmem:[%s15 + $0x10] sm:$0xff]
      %v1735 = vld [vmem:[%s15 + $0x18] sm:$0xff]
      %v1736 = vld [vmem:[%s15 + $0x20] sm:$0xff]
      %v1737 = vld [vmem:[%s15 + $0x28] sm:$0xff]
      %v1738 = vld [vmem:[%s15 + $0x30] sm:$0xff]
      %v1739 = vld [vmem:[%s15 + $0x38] sm:$0xff]
      %v1740 = vld [vmem:[%s15 + $0x40] sm:$0xff]
      %v1741 = vld [vmem:[%s15 + $0x48] sm:$0xff]
      %v1742 = vld [vmem:[%s15 + $0x50] sm:$0xff]
      %v1743 = vld [vmem:[%s15 + $0x58] sm:$0xff]
      %v1744 = vld [vmem:[%s15 + $0x60] sm:$0xff]
      %v1745 = vld [vmem:[%s15 + $0x68] sm:$0xff]
      %v1746 = vld [vmem:[%s15 + $0x70] sm:$0xff]
      %v1747 = vld [vmem:[%s15 + $0x78] sm:$0xff]
      %v1748 = vld [vmem:[%s16] sm:$0x3]
      %v1750 = vlaneseq
      %v1751 = vshrl.u32 %v1750, 7
      %v1752 = vsub.s32 0, %v1751
      %v1753 = vrot.slane %v1748, %v1752
      %v1754 = vlaneseq
      %v1755 = vshrl.u32 %v1754, 7
      %v1756 = vsub.s32 1, %v1755
      %v1757 = vrot.slane %v1748, %v1756
      %v1776 = vunpack.c.l.b16 %v1732
      %v1777 = vunpack.c.h.b16 %v1732
      %v1778 = vunpack.c.l.b16 %v1733
      %v1779 = vunpack.c.h.b16 %v1733
      %v1780 = vunpack.c.l.b16 %v1734
      %v1781 = vunpack.c.h.b16 %v1734
      %v1782 = vunpack.c.l.b16 %v1735
      %v1783 = vunpack.c.h.b16 %v1735
      %v1784 = vunpack.c.l.b16 %v1736
      %v1785 = vunpack.c.h.b16 %v1736
      %v1786 = vunpack.c.l.b16 %v1737
      %v1787 = vunpack.c.h.b16 %v1737
      %v1788 = vunpack.c.l.b16 %v1738
      %v1789 = vunpack.c.h.b16 %v1738
      %v1790 = vunpack.c.l.b16 %v1739
      %v1791 = vunpack.c.h.b16 %v1739
      %v1792 = vunpack.c.l.b16 %v1740
      %v1793 = vunpack.c.h.b16 %v1740
      %v1794 = vunpack.c.l.b16 %v1741
      %v1795 = vunpack.c.h.b16 %v1741
      %v1796 = vunpack.c.l.b16 %v1742
      %v1797 = vunpack.c.h.b16 %v1742
      %v1798 = vunpack.c.l.b16 %v1743
      %v1799 = vunpack.c.h.b16 %v1743
      %v1800 = vunpack.c.l.b16 %v1744
      %v1801 = vunpack.c.h.b16 %v1744
      %v1802 = vunpack.c.l.b16 %v1745
      %v1803 = vunpack.c.h.b16 %v1745
      %v1804 = vunpack.c.l.b16 %v1746
      %v1805 = vunpack.c.h.b16 %v1746
      %v1806 = vunpack.c.l.b16 %v1747
      %v1807 = vunpack.c.h.b16 %v1747
      %v1808 = vpack.c.b16 %v1778, %v1776
      %v1809 = vpack.c.b16 %v1779, %v1777
      %v1810 = vpack.c.b16 %v1782, %v1780
      %v1811 = vpack.c.b16 %v1783, %v1781
      %v1812 = vpack.c.b16 %v1786, %v1784
      %v1813 = vpack.c.b16 %v1787, %v1785
      %v1814 = vpack.c.b16 %v1790, %v1788
      %v1815 = vpack.c.b16 %v1791, %v1789
      %v1816 = vpack.c.b16 %v1794, %v1792
      %v1817 = vpack.c.b16 %v1795, %v1793
      %v1818 = vpack.c.b16 %v1798, %v1796
      %v1819 = vpack.c.b16 %v1799, %v1797
      %v1820 = vpack.c.b16 %v1802, %v1800
      %v1821 = vpack.c.b16 %v1803, %v1801
      %v1822 = vpack.c.b16 %v1806, %v1804
      %v1823 = vpack.c.b16 %v1807, %v1805
      %1840 = vmatprep.subr.bf16.mxu0 %v1823
      %1841 = vmatpush1.bf16.msra.mxu0 %v1822
      %1842 = vmatprep.subr.bf16.mxu0 %v1821
      %1843 = vmatpush1.bf16.msra.mxu0 %v1820
      %1844 = vmatprep.subr.bf16.mxu0 %v1819
      %1845 = vmatpush1.bf16.msra.mxu0 %v1818
      %1846 = vmatprep.subr.bf16.mxu0 %v1817
      %1847 = vmatpush1.bf16.msra.mxu0 %v1816
      %1848 = vmatprep.subr.bf16.mxu0 %v1815
      %1849 = vmatpush1.bf16.msra.mxu0 %v1814
      %1850 = vmatprep.subr.bf16.mxu0 %v1813
      %1851 = vmatpush1.bf16.msra.mxu0 %v1812
      %1852 = vmatprep.subr.bf16.mxu0 %v1811
      %1853 = vmatpush1.bf16.msra.mxu0 %v1810
      %1854 = vmatprep.subr.bf16.mxu0 %v1809
      %1855 = vmatpush1.bf16.msra.mxu0 %v1808
      %1856 = vmatprep.subr.bf16.mxu0 0
      %1857 = vmatpush2.bf16.msra.mxu0 0
      %1858 = vmatprep.subr.bf16.mxu0 0
      %1859 = vmatpush2.bf16.msra.mxu0 0
      %1860 = vmatprep.subr.bf16.mxu0 0
      %1861 = vmatpush2.bf16.msra.mxu0 0
      %1862 = vmatprep.subr.bf16.mxu0 0
      %1863 = vmatpush2.bf16.msra.mxu0 0
      %1864 = vmatprep.subr.bf16.mxu0 0
      %1865 = vmatpush2.bf16.msra.mxu0 0
      %1866 = vmatprep.subr.bf16.mxu0 0
      %1867 = vmatpush2.bf16.msra.mxu0 0
      %1868 = vmatprep.subr.bf16.mxu0 0
      %1869 = vmatpush2.bf16.msra.mxu0 0
      %1870 = vmatprep.subr.bf16.mxu0 0
      %1871 = vmatpush2.bf16.msra.mxu0 0
      %1872 = vmatprep.mubr.bf16.mxu0 0
      %1873 = vmatmul.mubr.bf16.gmra.mxu0 %v1728
      %v1874 = vpop.f32.mrf.mxu0
      %v1875 = vadd.f32 %v1753, %v1874
      %v1876 = vpop.f32.mrf.mxu0
      %v1877 = vadd.f32 %v1757, %v1876
      %v1878 = vpop.f32.mrf.mxu0
      %v1879 = vadd.f32 %v1753, %v1878
      %v1880 = vpop.f32.mrf.mxu0
      %v1881 = vadd.f32 %v1757, %v1880
      %1882 = vmatprep.mubr.bf16.mxu0 0
      %1883 = vmatmul.mubr.bf16.gmra.mxu0 %v1729
      %v1884 = vpop.f32.mrf.mxu0
      %v1885 = vadd.f32 %v1753, %v1884
      %v1886 = vpop.f32.mrf.mxu0
      %v1887 = vadd.f32 %v1757, %v1886
      %v1888 = vpop.f32.mrf.mxu0
      %v1889 = vadd.f32 %v1753, %v1888
      %v1890 = vpop.f32.mrf.mxu0
      %v1891 = vadd.f32 %v1757, %v1890
      %1892 = vmatprep.mubr.bf16.mxu0 0
      %1893 = vmatmul.mubr.bf16.gmra.mxu0 %v1730
      %v1894 = vpop.f32.mrf.mxu0
      %v1895 = vadd.f32 %v1753, %v1894
      %v1896 = vpop.f32.mrf.mxu0
      %v1897 = vadd.f32 %v1757, %v1896
      %v1898 = vpop.f32.mrf.mxu0
      %v1899 = vadd.f32 %v1753, %v1898
      %v1900 = vpop.f32.mrf.mxu0
      %v1901 = vadd.f32 %v1757, %v1900
      %1902 = vmatprep.mubr.bf16.mxu0 0
      %1903 = vmatmul.mubr.bf16.gmra.mxu0 %v1731
      %v1904 = vpop.f32.mrf.mxu0
      %v1905 = vadd.f32 %v1753, %v1904
      %v1906 = vpop.f32.mrf.mxu0
      %v1907 = vadd.f32 %v1757, %v1906
      %v1908 = vpop.f32.mrf.mxu0
      %v1909 = vadd.f32 %v1753, %v1908
      %v1910 = vpop.f32.mrf.mxu0
      %v1911 = vadd.f32 %v1757, %v1910
      %1912 = vdwg.mxu0
      %v1913 = vxor.u32 %v1875, 2147483648
      %v1914 = vxor.u32 %v1877, 2147483648
      %v1915 = vxor.u32 %v1879, 2147483648
      %v1916 = vxor.u32 %v1881, 2147483648
      %v1917 = vxor.u32 %v1885, 2147483648
      %v1918 = vxor.u32 %v1887, 2147483648
      %v1919 = vxor.u32 %v1889, 2147483648
      %v1920 = vxor.u32 %v1891, 2147483648
      %v1921 = vxor.u32 %v1895, 2147483648
      %v1922 = vxor.u32 %v1897, 2147483648
      %v1923 = vxor.u32 %v1899, 2147483648
      %v1924 = vxor.u32 %v1901, 2147483648
      %v1925 = vxor.u32 %v1905, 2147483648
      %v1926 = vxor.u32 %v1907, 2147483648
      %v1927 = vxor.u32 %v1909, 2147483648
      %v1928 = vxor.u32 %v1911, 2147483648
      %v1929 = vmul.f32 %v1913, 1.442695
      %v1930 = vpow.pop %v1929
      %v1931 = vmul.f32 %v1914, 1.442695
      %v1932 = vpow.pop %v1931
      %v1933 = vmul.f32 %v1915, 1.442695
      %v1934 = vpow.pop %v1933
      %v1935 = vmul.f32 %v1916, 1.442695
      %v1936 = vpow.pop %v1935
      %v1937 = vmul.f32 %v1917, 1.442695
      %v1938 = vpow.pop %v1937
      %v1939 = vmul.f32 %v1918, 1.442695
      %v1940 = vpow.pop %v1939
      %v1941 = vmul.f32 %v1919, 1.442695
      %v1942 = vpow.pop %v1941
      %v1943 = vmul.f32 %v1920, 1.442695
      %v1944 = vpow.pop %v1943
      %v1945 = vmul.f32 %v1921, 1.442695
      %v1946 = vpow.pop %v1945
      %v1947 = vmul.f32 %v1922, 1.442695
      %v1948 = vpow.pop %v1947
      %v1949 = vmul.f32 %v1923, 1.442695
      %v1950 = vpow.pop %v1949
      %v1951 = vmul.f32 %v1924, 1.442695
      %v1952 = vpow.pop %v1951
      %v1953 = vmul.f32 %v1925, 1.442695
      %v1954 = vpow.pop %v1953
      %v1955 = vmul.f32 %v1926, 1.442695
      %v1956 = vpow.pop %v1955
      %v1957 = vmul.f32 %v1927, 1.442695
      %v1958 = vpow.pop %v1957
      %v1959 = vmul.f32 %v1928, 1.442695
      %v1960 = vpow.pop %v1959
      %v1961 = vadd.f32 %v1930, 1.0
      %v1962 = vadd.f32 %v1932, 1.0
      %v1963 = vadd.f32 %v1934, 1.0
      %v1964 = vadd.f32 %v1936, 1.0
      %v1965 = vadd.f32 %v1938, 1.0
      %v1966 = vadd.f32 %v1940, 1.0
      %v1967 = vadd.f32 %v1942, 1.0
      %v1968 = vadd.f32 %v1944, 1.0
      %v1969 = vadd.f32 %v1946, 1.0
      %v1970 = vadd.f32 %v1948, 1.0
      %v1971 = vadd.f32 %v1950, 1.0
      %v1972 = vadd.f32 %v1952, 1.0
      %v1973 = vadd.f32 %v1954, 1.0
      %v1974 = vadd.f32 %v1956, 1.0
      %v1975 = vadd.f32 %v1958, 1.0
      %v1976 = vadd.f32 %v1960, 1.0
      %v1977 = vrcp.pop %v1961
      %v1978 = vmul.f32 1.0, %v1977
      %v1979 = vrcp.pop %v1962
      %v1980 = vmul.f32 1.0, %v1979
      %v1981 = vrcp.pop %v1963
      %v1982 = vmul.f32 1.0, %v1981
      %v1983 = vrcp.pop %v1964
      %v1984 = vmul.f32 1.0, %v1983
      %v1985 = vrcp.pop %v1965
      %v1986 = vmul.f32 1.0, %v1985
      %v1987 = vrcp.pop %v1966
      %v1988 = vmul.f32 1.0, %v1987
      %v1989 = vrcp.pop %v1967
      %v1990 = vmul.f32 1.0, %v1989
      %v1991 = vrcp.pop %v1968
      %v1992 = vmul.f32 1.0, %v1991
      %v1993 = vrcp.pop %v1969
      %v1994 = vmul.f32 1.0, %v1993
      %v1995 = vrcp.pop %v1970
      %v1996 = vmul.f32 1.0, %v1995
      %v1997 = vrcp.pop %v1971
      %v1998 = vmul.f32 1.0, %v1997
      %v1999 = vrcp.pop %v1972
      %v2000 = vmul.f32 1.0, %v1999
      %v2001 = vrcp.pop %v1973
      %v2002 = vmul.f32 1.0, %v2001
      %v2003 = vrcp.pop %v1974
      %v2004 = vmul.f32 1.0, %v2003
      %v2005 = vrcp.pop %v1975
      %v2006 = vmul.f32 1.0, %v2005
      %v2007 = vrcp.pop %v1976
      %v2008 = vmul.f32 1.0, %v2007
      %v2009 = vmul.f32 %v1875, %v1978
      %v2010 = vmul.f32 %v1877, %v1980
      %v2011 = vmul.f32 %v1879, %v1982
      %v2012 = vmul.f32 %v1881, %v1984
      %v2013 = vmul.f32 %v1885, %v1986
      %v2014 = vmul.f32 %v1887, %v1988
      %v2015 = vmul.f32 %v1889, %v1990
      %v2016 = vmul.f32 %v1891, %v1992
      %v2017 = vmul.f32 %v1895, %v1994
      %v2018 = vmul.f32 %v1897, %v1996
      %v2019 = vmul.f32 %v1899, %v1998
      %v2020 = vmul.f32 %v1901, %v2000
      %v2021 = vmul.f32 %v1905, %v2002
      %v2022 = vmul.f32 %v1907, %v2004
      %v2023 = vmul.f32 %v1909, %v2006
      %v2024 = vmul.f32 %v1911, %v2008
      %v2025 = vpack.c.bf16 %v2011, %v2009
      %v2026 = vpack.c.bf16 %v2012, %v2010
      %v2027 = vpack.c.bf16 %v2015, %v2013
      %v2028 = vpack.c.bf16 %v2016, %v2014
      %v2029 = vpack.c.bf16 %v2019, %v2017
      %v2030 = vpack.c.bf16 %v2020, %v2018
      %v2031 = vpack.c.bf16 %v2023, %v2021
      %v2032 = vpack.c.bf16 %v2024, %v2022
      %v2033 = vld [vmem:[%s17] sm:$0xf]
      %v2034 = vld [vmem:[%s17 + $0x4] sm:$0xf]
      %v2035 = vld [vmem:[%s17 + $0x8] sm:$0xf]
      %v2036 = vld [vmem:[%s17 + $0xc] sm:$0xf]
      %v2037 = vld [vmem:[%s17 + $0x10] sm:$0xf]
      %v2038 = vld [vmem:[%s17 + $0x14] sm:$0xf]
      %v2039 = vld [vmem:[%s17 + $0x18] sm:$0xf]
      %v2040 = vld [vmem:[%s17 + $0x1c] sm:$0xf]
      %v2041 = vld [vmem:[%s17 + $0x20] sm:$0xf]
      %v2042 = vld [vmem:[%s17 + $0x24] sm:$0xf]
      %v2043 = vld [vmem:[%s17 + $0x28] sm:$0xf]
      %v2044 = vld [vmem:[%s17 + $0x2c] sm:$0xf]
      %v2045 = vld [vmem:[%s17 + $0x30] sm:$0xf]
      %v2046 = vld [vmem:[%s17 + $0x34] sm:$0xf]
      %v2047 = vld [vmem:[%s17 + $0x38] sm:$0xf]
      %v2048 = vld [vmem:[%s17 + $0x3c] sm:$0xf]
      %v2049 = vld [vmem:[%s17 + $0x40] sm:$0xf]
      %v2050 = vld [vmem:[%s17 + $0x44] sm:$0xf]
      %v2051 = vld [vmem:[%s17 + $0x48] sm:$0xf]
      %v2052 = vld [vmem:[%s17 + $0x4c] sm:$0xf]
      %v2053 = vld [vmem:[%s17 + $0x50] sm:$0xf]
      %v2054 = vld [vmem:[%s17 + $0x54] sm:$0xf]
      %v2055 = vld [vmem:[%s17 + $0x58] sm:$0xf]
      %v2056 = vld [vmem:[%s17 + $0x5c] sm:$0xf]
      %v2057 = vld [vmem:[%s17 + $0x60] sm:$0xf]
      %v2058 = vld [vmem:[%s17 + $0x64] sm:$0xf]
      %v2059 = vld [vmem:[%s17 + $0x68] sm:$0xf]
      %v2060 = vld [vmem:[%s17 + $0x6c] sm:$0xf]
      %v2061 = vld [vmem:[%s17 + $0x70] sm:$0xf]
      %v2062 = vld [vmem:[%s17 + $0x74] sm:$0xf]
      %v2063 = vld [vmem:[%s17 + $0x78] sm:$0xf]
      %v2064 = vld [vmem:[%s17 + $0x7c] sm:$0xf]
      %v2065 = vld [vmem:[%s18] sm:$0x1]
      %v2067 = vlaneseq
      %v2068 = vshrl.u32 %v2067, 7
      %v2069 = vsub.s32 0, %v2068
      %v2070 = vrot.slane %v2065, %v2069
      %v2104 = vunpack.c.l.b16 %v2033
      %v2105 = vunpack.c.l.b16 %v2034
      %v2106 = vunpack.c.l.b16 %v2035
      %v2107 = vunpack.c.l.b16 %v2036
      %v2108 = vunpack.c.l.b16 %v2037
      %v2109 = vunpack.c.l.b16 %v2038
      %v2110 = vunpack.c.l.b16 %v2039
      %v2111 = vunpack.c.l.b16 %v2040
      %v2112 = vunpack.c.l.b16 %v2041
      %v2113 = vunpack.c.l.b16 %v2042
      %v2114 = vunpack.c.l.b16 %v2043
      %v2115 = vunpack.c.l.b16 %v2044
      %v2116 = vunpack.c.l.b16 %v2045
      %v2117 = vunpack.c.l.b16 %v2046
      %v2118 = vunpack.c.l.b16 %v2047
      %v2119 = vunpack.c.l.b16 %v2048
      %v2120 = vunpack.c.l.b16 %v2049
      %v2121 = vunpack.c.l.b16 %v2050
      %v2122 = vunpack.c.l.b16 %v2051
      %v2123 = vunpack.c.l.b16 %v2052
      %v2124 = vunpack.c.l.b16 %v2053
      %v2125 = vunpack.c.l.b16 %v2054
      %v2126 = vunpack.c.l.b16 %v2055
      %v2127 = vunpack.c.l.b16 %v2056
      %v2128 = vunpack.c.l.b16 %v2057
      %v2129 = vunpack.c.l.b16 %v2058
      %v2130 = vunpack.c.l.b16 %v2059
      %v2131 = vunpack.c.l.b16 %v2060
      %v2132 = vunpack.c.l.b16 %v2061
      %v2133 = vunpack.c.l.b16 %v2062
      %v2134 = vunpack.c.l.b16 %v2063
      %v2135 = vunpack.c.l.b16 %v2064
      %v2136 = vpack.c.b16 %v2105, %v2104
      %v2137 = vpack.c.b16 %v2107, %v2106
      %v2138 = vpack.c.b16 %v2109, %v2108
      %v2139 = vpack.c.b16 %v2111, %v2110
      %v2140 = vpack.c.b16 %v2113, %v2112
      %v2141 = vpack.c.b16 %v2115, %v2114
      %v2142 = vpack.c.b16 %v2117, %v2116
      %v2143 = vpack.c.b16 %v2119, %v2118
      %v2144 = vpack.c.b16 %v2121, %v2120
      %v2145 = vpack.c.b16 %v2123, %v2122
      %v2146 = vpack.c.b16 %v2125, %v2124
      %v2147 = vpack.c.b16 %v2127, %v2126
      %v2148 = vpack.c.b16 %v2129, %v2128
      %v2149 = vpack.c.b16 %v2131, %v2130
      %v2150 = vpack.c.b16 %v2133, %v2132
      %v2151 = vpack.c.b16 %v2135, %v2134
      %2168 = vmatprep.subr.bf16.mxu0 0
      %2169 = vmatpush1.bf16.msra.mxu0 %v2143
      %2170 = vmatprep.subr.bf16.mxu0 0
      %2171 = vmatpush1.bf16.msra.mxu0 %v2142
      %2172 = vmatprep.subr.bf16.mxu0 0
      %2173 = vmatpush1.bf16.msra.mxu0 %v2141
      %2174 = vmatprep.subr.bf16.mxu0 0
      %2175 = vmatpush1.bf16.msra.mxu0 %v2140
      %2176 = vmatprep.subr.bf16.mxu0 0
      %2177 = vmatpush1.bf16.msra.mxu0 %v2139
      %2178 = vmatprep.subr.bf16.mxu0 0
      %2179 = vmatpush1.bf16.msra.mxu0 %v2138
      %2180 = vmatprep.subr.bf16.mxu0 0
      %2181 = vmatpush1.bf16.msra.mxu0 %v2137
      %2182 = vmatprep.subr.bf16.mxu0 0
      %2183 = vmatpush1.bf16.msra.mxu0 %v2136
      %2184 = vmatprep.subr.bf16.mxu0 0
      %2185 = vmatpush2.bf16.msra.mxu0 %v2151
      %2186 = vmatprep.subr.bf16.mxu0 0
      %2187 = vmatpush2.bf16.msra.mxu0 %v2150
      %2188 = vmatprep.subr.bf16.mxu0 0
      %2189 = vmatpush2.bf16.msra.mxu0 %v2149
      %2190 = vmatprep.subr.bf16.mxu0 0
      %2191 = vmatpush2.bf16.msra.mxu0 %v2148
      %2192 = vmatprep.subr.bf16.mxu0 0
      %2193 = vmatpush2.bf16.msra.mxu0 %v2147
      %2194 = vmatprep.subr.bf16.mxu0 0
      %2195 = vmatpush2.bf16.msra.mxu0 %v2146
      %2196 = vmatprep.subr.bf16.mxu0 0
      %2197 = vmatpush2.bf16.msra.mxu0 %v2145
      %2198 = vmatprep.subr.bf16.mxu0 0
      %2199 = vmatpush2.bf16.msra.mxu0 %v2144
      %2200 = vmatprep.mubr.bf16.mxu0 %v2026
      %2201 = vmatmul.mubr.bf16.gmra.mxu0 %v2025
      %v2202 = vpop.f32.mrf.mxu0
      %v2203 = vadd.f32 %v2070, %v2202
      %v2204 = vpop.f32.mrf.mxu0
      %v2205 = vpop.f32.mrf.mxu0
      %v2206 = vadd.f32 %v2070, %v2205
      %v2207 = vpop.f32.mrf.mxu0
      %2208 = vmatprep.mubr.bf16.mxu0 %v2028
      %2209 = vmatmul.mubr.bf16.gmra.mxu0 %v2027
      %v2210 = vpop.f32.mrf.mxu0
      %v2211 = vadd.f32 %v2070, %v2210
      %v2212 = vpop.f32.mrf.mxu0
      %v2213 = vpop.f32.mrf.mxu0
      %v2214 = vadd.f32 %v2070, %v2213
      %v2215 = vpop.f32.mrf.mxu0
      %2216 = vmatprep.mubr.bf16.mxu0 %v2030
      %2217 = vmatmul.mubr.bf16.gmra.mxu0 %v2029
      %v2218 = vpop.f32.mrf.mxu0
      %v2219 = vadd.f32 %v2070, %v2218
      %v2220 = vpop.f32.mrf.mxu0
      %v2221 = vpop.f32.mrf.mxu0
      %v2222 = vadd.f32 %v2070, %v2221
      %v2223 = vpop.f32.mrf.mxu0
      %2224 = vmatprep.mubr.bf16.mxu0 %v2032
      %2225 = vmatmul.mubr.bf16.gmra.mxu0 %v2031
      %v2226 = vpop.f32.mrf.mxu0
      %v2227 = vadd.f32 %v2070, %v2226
      %v2228 = vpop.f32.mrf.mxu0
      %v2229 = vpop.f32.mrf.mxu0
      %v2230 = vadd.f32 %v2070, %v2229
      %v2231 = vpop.f32.mrf.mxu0
      %2232 = vdwg.mxu0
      %v2233 = vadd.f32 %v1602, %v2203
      %v2234 = vadd.f32 %v1603, %v2206
      %v2235 = vadd.f32 %v1604, %v2211
      %v2236 = vadd.f32 %v1605, %v2214
      %v2237 = vadd.f32 %v1606, %v2219
      %v2238 = vadd.f32 %v1607, %v2222
      %v2239 = vadd.f32 %v1608, %v2227
      %v2240 = vadd.f32 %v1609, %v2230
      %v2241 = vld [vmem:[%s19] sm:$0x1]
      %v2242 = vld [vmem:[%s20] sm:$0x1]
      %2243 = vadd.xlane.f32.xlu0 %v2233
      %v2244 = vpop.xlane.xlu0 %2243
      %2245 = vadd.xlane.f32.xlu0 %v2234
      %v2246 = vpop.xlane.xlu0 %2245
      %2247 = vadd.xlane.f32.xlu0 %v2235
      %v2248 = vpop.xlane.xlu0 %2247
      %2249 = vadd.xlane.f32.xlu0 %v2236
      %v2250 = vpop.xlane.xlu0 %2249
      %2251 = vadd.xlane.f32.xlu0 %v2237
      %v2252 = vpop.xlane.xlu0 %2251
      %2253 = vadd.xlane.f32.xlu0 %v2238
      %v2254 = vpop.xlane.xlu0 %2253
      %2255 = vadd.xlane.f32.xlu0 %v2239
      %v2256 = vpop.xlane.xlu0 %2255
      %2257 = vadd.xlane.f32.xlu0 %v2240
      %v2258 = vpop.xlane.xlu0 %2257
      %v2259 = vmul.f32 %v2244, %v996
      %v2260 = vmul.f32 %v2246, %v996
      %v2261 = vmul.f32 %v2248, %v996
      %v2262 = vmul.f32 %v2250, %v996
      %v2263 = vmul.f32 %v2252, %v996
      %v2264 = vmul.f32 %v2254, %v996
      %v2265 = vmul.f32 %v2256, %v996
      %v2266 = vmul.f32 %v2258, %v996
      %v2267 = vsub.f32 %v2233, %v2259
      %v2268 = vsub.f32 %v2234, %v2260
      %v2269 = vsub.f32 %v2235, %v2261
      %v2270 = vsub.f32 %v2236, %v2262
      %v2271 = vsub.f32 %v2237, %v2263
      %v2272 = vsub.f32 %v2238, %v2264
      %v2273 = vsub.f32 %v2239, %v2265
      %v2274 = vsub.f32 %v2240, %v2266
      %v2275 = vmul.f32 %v2267, %v2267
      %v2276 = vmul.f32 %v2268, %v2268
      %v2277 = vmul.f32 %v2269, %v2269
      %v2278 = vmul.f32 %v2270, %v2270
      %v2279 = vmul.f32 %v2271, %v2271
      %v2280 = vmul.f32 %v2272, %v2272
      %v2281 = vmul.f32 %v2273, %v2273
      %v2282 = vmul.f32 %v2274, %v2274
      %2283 = vadd.xlane.f32.xlu0 %v2275
      %v2284 = vpop.xlane.xlu0 %2283
      %2285 = vadd.xlane.f32.xlu0 %v2276
      %v2286 = vpop.xlane.xlu0 %2285
      %2287 = vadd.xlane.f32.xlu0 %v2277
      %v2288 = vpop.xlane.xlu0 %2287
      %2289 = vadd.xlane.f32.xlu0 %v2278
      %v2290 = vpop.xlane.xlu0 %2289
      %2291 = vadd.xlane.f32.xlu0 %v2279
      %v2292 = vpop.xlane.xlu0 %2291
      %2293 = vadd.xlane.f32.xlu0 %v2280
      %v2294 = vpop.xlane.xlu0 %2293
      %2295 = vadd.xlane.f32.xlu0 %v2281
      %v2296 = vpop.xlane.xlu0 %2295
      %2297 = vadd.xlane.f32.xlu0 %v2282
      %v2298 = vpop.xlane.xlu0 %2297
      %v2299 = vmul.f32 %v2284, %v996
      %v2300 = vmul.f32 %v2286, %v996
      %v2301 = vmul.f32 %v2288, %v996
      %v2302 = vmul.f32 %v2290, %v996
      %v2303 = vmul.f32 %v2292, %v996
      %v2304 = vmul.f32 %v2294, %v996
      %v2305 = vmul.f32 %v2296, %v996
      %v2306 = vmul.f32 %v2298, %v996
      %v2307 = vadd.f32 %v2299, 1e-05
      %v2308 = vadd.f32 %v2300, 1e-05
      %v2309 = vadd.f32 %v2301, 1e-05
      %v2310 = vadd.f32 %v2302, 1e-05
      %v2311 = vadd.f32 %v2303, 1e-05
      %v2312 = vadd.f32 %v2304, 1e-05
      %v2313 = vadd.f32 %v2305, 1e-05
      %v2314 = vadd.f32 %v2306, 1e-05
      %v2315 = vrsqrt.pop %v2307
      %v2316 = vrsqrt.pop %v2308
      %v2317 = vrsqrt.pop %v2309
      %v2318 = vrsqrt.pop %v2310
      %v2319 = vrsqrt.pop %v2311
      %v2320 = vrsqrt.pop %v2312
      %v2321 = vrsqrt.pop %v2313
      %v2322 = vrsqrt.pop %v2314
      %v2323 = vmul.f32 %v2267, %v2315
      %v2324 = vmul.f32 %v2268, %v2316
      %v2325 = vmul.f32 %v2269, %v2317
      %v2326 = vmul.f32 %v2270, %v2318
      %v2327 = vmul.f32 %v2271, %v2319
      %v2328 = vmul.f32 %v2272, %v2320
      %v2329 = vmul.f32 %v2273, %v2321
      %v2330 = vmul.f32 %v2274, %v2322
      %v2332 = vlaneseq
      %v2333 = vshrl.u32 %v2332, 7
      %v2334 = vsub.s32 0, %v2333
      %v2335 = vrot.slane %v2241, %v2334
      %v2337 = vmul.f32 %v2323, %v2335
      %v2338 = vmul.f32 %v2324, %v2335
      %v2339 = vmul.f32 %v2325, %v2335
      %v2340 = vmul.f32 %v2326, %v2335
      %v2341 = vmul.f32 %v2327, %v2335
      %v2342 = vmul.f32 %v2328, %v2335
      %v2343 = vmul.f32 %v2329, %v2335
      %v2344 = vmul.f32 %v2330, %v2335
      %v2346 = vlaneseq
      %v2347 = vshrl.u32 %v2346, 7
      %v2348 = vsub.s32 0, %v2347
      %v2349 = vrot.slane %v2242, %v2348
      %v2351 = vadd.f32 %v2337, %v2349
      %v2352 = vadd.f32 %v2338, %v2349
      %v2353 = vadd.f32 %v2339, %v2349
      %v2354 = vadd.f32 %v2340, %v2349
      %v2355 = vadd.f32 %v2341, %v2349
      %v2356 = vadd.f32 %v2342, %v2349
      %v2357 = vadd.f32 %v2343, %v2349
      %v2358 = vadd.f32 %v2344, %v2349
      %v2359 = vxor.u32 %v2351, 2147483648
      %v2360 = vxor.u32 %v2352, 2147483648
      %v2361 = vxor.u32 %v2353, 2147483648
      %v2362 = vxor.u32 %v2354, 2147483648
      %v2363 = vxor.u32 %v2355, 2147483648
      %v2364 = vxor.u32 %v2356, 2147483648
      %v2365 = vxor.u32 %v2357, 2147483648
      %v2366 = vxor.u32 %v2358, 2147483648
      %v2367 = vmul.f32 %v2359, 1.442695
      %v2368 = vpow.pop %v2367
      %v2369 = vmul.f32 %v2360, 1.442695
      %v2370 = vpow.pop %v2369
      %v2371 = vmul.f32 %v2361, 1.442695
      %v2372 = vpow.pop %v2371
      %v2373 = vmul.f32 %v2362, 1.442695
      %v2374 = vpow.pop %v2373
      %v2375 = vmul.f32 %v2363, 1.442695
      %v2376 = vpow.pop %v2375
      %v2377 = vmul.f32 %v2364, 1.442695
      %v2378 = vpow.pop %v2377
      %v2379 = vmul.f32 %v2365, 1.442695
      %v2380 = vpow.pop %v2379
      %v2381 = vmul.f32 %v2366, 1.442695
      %v2382 = vpow.pop %v2381
      %v2383 = vadd.f32 %v2368, 1.0
      %v2384 = vadd.f32 %v2370, 1.0
      %v2385 = vadd.f32 %v2372, 1.0
      %v2386 = vadd.f32 %v2374, 1.0
      %v2387 = vadd.f32 %v2376, 1.0
      %v2388 = vadd.f32 %v2378, 1.0
      %v2389 = vadd.f32 %v2380, 1.0
      %v2390 = vadd.f32 %v2382, 1.0
      %v2391 = vrcp.pop %v2383
      %v2392 = vmul.f32 1.0, %v2391
      %v2393 = vrcp.pop %v2384
      %v2394 = vmul.f32 1.0, %v2393
      %v2395 = vrcp.pop %v2385
      %v2396 = vmul.f32 1.0, %v2395
      %v2397 = vrcp.pop %v2386
      %v2398 = vmul.f32 1.0, %v2397
      %v2399 = vrcp.pop %v2387
      %v2400 = vmul.f32 1.0, %v2399
      %v2401 = vrcp.pop %v2388
      %v2402 = vmul.f32 1.0, %v2401
      %v2403 = vrcp.pop %v2389
      %v2404 = vmul.f32 1.0, %v2403
      %v2405 = vrcp.pop %v2390
      %v2406 = vmul.f32 1.0, %v2405
      %v2407 = vmul.f32 %v2351, %v2392
      %v2408 = vmul.f32 %v2352, %v2394
      %v2409 = vmul.f32 %v2353, %v2396
      %v2410 = vmul.f32 %v2354, %v2398
      %v2411 = vmul.f32 %v2355, %v2400
      %v2412 = vmul.f32 %v2356, %v2402
      %v2413 = vmul.f32 %v2357, %v2404
      %v2414 = vmul.f32 %v2358, %v2406
      %v2415 = vpack.c.bf16 %v2408, %v2407
      %v2416 = vpack.c.bf16 %v2410, %v2409
      %v2417 = vpack.c.bf16 %v2412, %v2411
      %v2418 = vpack.c.bf16 %v2414, %v2413
      %v2419 = vld [vmem:[%s21] sm:$0xf]
      %v2420 = vld [vmem:[%s21 + $0x4] sm:$0xf]
      %v2421 = vld [vmem:[%s21 + $0x8] sm:$0xf]
      %v2422 = vld [vmem:[%s21 + $0xc] sm:$0xf]
      %v2423 = vld [vmem:[%s21 + $0x10] sm:$0xf]
      %v2424 = vld [vmem:[%s21 + $0x14] sm:$0xf]
      %v2425 = vld [vmem:[%s21 + $0x18] sm:$0xf]
      %v2426 = vld [vmem:[%s21 + $0x1c] sm:$0xf]
      %v2427 = vld [vmem:[%s21 + $0x20] sm:$0xf]
      %v2428 = vld [vmem:[%s21 + $0x24] sm:$0xf]
      %v2429 = vld [vmem:[%s21 + $0x28] sm:$0xf]
      %v2430 = vld [vmem:[%s21 + $0x2c] sm:$0xf]
      %v2431 = vld [vmem:[%s21 + $0x30] sm:$0xf]
      %v2432 = vld [vmem:[%s21 + $0x34] sm:$0xf]
      %v2433 = vld [vmem:[%s21 + $0x38] sm:$0xf]
      %v2434 = vld [vmem:[%s21 + $0x3c] sm:$0xf]
      %v2435 = vld [vmem:[%s22] sm:$0x1]
      %v2437 = vlaneseq
      %v2438 = vshrl.u32 %v2437, 7
      %v2439 = vsub.s32 0, %v2438
      %v2440 = vrot.slane %v2435, %v2439
      %v2458 = vunpack.c.l.b16 %v2419
      %v2459 = vunpack.c.l.b16 %v2420
      %v2460 = vunpack.c.l.b16 %v2421
      %v2461 = vunpack.c.l.b16 %v2422
      %v2462 = vunpack.c.l.b16 %v2423
      %v2463 = vunpack.c.l.b16 %v2424
      %v2464 = vunpack.c.l.b16 %v2425
      %v2465 = vunpack.c.l.b16 %v2426
      %v2466 = vunpack.c.l.b16 %v2427
      %v2467 = vunpack.c.l.b16 %v2428
      %v2468 = vunpack.c.l.b16 %v2429
      %v2469 = vunpack.c.l.b16 %v2430
      %v2470 = vunpack.c.l.b16 %v2431
      %v2471 = vunpack.c.l.b16 %v2432
      %v2472 = vunpack.c.l.b16 %v2433
      %v2473 = vunpack.c.l.b16 %v2434
      %v2474 = vpack.c.b16 %v2459, %v2458
      %v2475 = vpack.c.b16 %v2461, %v2460
      %v2476 = vpack.c.b16 %v2463, %v2462
      %v2477 = vpack.c.b16 %v2465, %v2464
      %v2478 = vpack.c.b16 %v2467, %v2466
      %v2479 = vpack.c.b16 %v2469, %v2468
      %v2480 = vpack.c.b16 %v2471, %v2470
      %v2481 = vpack.c.b16 %v2473, %v2472
      %2490 = vmatprep.subr.bf16.mxu0 0
      %2491 = vmatpush1.bf16.msra.mxu0 %v2481
      %2492 = vmatprep.subr.bf16.mxu0 0
      %2493 = vmatpush1.bf16.msra.mxu0 %v2480
      %2494 = vmatprep.subr.bf16.mxu0 0
      %2495 = vmatpush1.bf16.msra.mxu0 %v2479
      %2496 = vmatprep.subr.bf16.mxu0 0
      %2497 = vmatpush1.bf16.msra.mxu0 %v2478
      %2498 = vmatprep.subr.bf16.mxu0 0
      %2499 = vmatpush1.bf16.msra.mxu0 %v2477
      %2500 = vmatprep.subr.bf16.mxu0 0
      %2501 = vmatpush1.bf16.msra.mxu0 %v2476
      %2502 = vmatprep.subr.bf16.mxu0 0
      %2503 = vmatpush1.bf16.msra.mxu0 %v2475
      %2504 = vmatprep.subr.bf16.mxu0 0
      %2505 = vmatpush1.bf16.msra.mxu0 %v2474
      %2506 = vmatprep.subr.bf16.mxu0 0
      %2507 = vmatpush2.bf16.msra.mxu0 0
      %2508 = vmatprep.subr.bf16.mxu0 0
      %2509 = vmatpush2.bf16.msra.mxu0 0
      %2510 = vmatprep.subr.bf16.mxu0 0
      %2511 = vmatpush2.bf16.msra.mxu0 0
      %2512 = vmatprep.subr.bf16.mxu0 0
      %2513 = vmatpush2.bf16.msra.mxu0 0
      %2514 = vmatprep.subr.bf16.mxu0 0
      %2515 = vmatpush2.bf16.msra.mxu0 0
      %2516 = vmatprep.subr.bf16.mxu0 0
      %2517 = vmatpush2.bf16.msra.mxu0 0
      %2518 = vmatprep.subr.bf16.mxu0 0
      %2519 = vmatpush2.bf16.msra.mxu0 0
      %2520 = vmatprep.subr.bf16.mxu0 0
      %2521 = vmatpush2.bf16.msra.mxu0 0
      %2522 = vmatprep.mubr.bf16.mxu0 0
      %2523 = vmatmul.mubr.bf16.gmra.mxu0 %v2415
      %v2524 = vpop.f32.mrf.mxu0
      %v2525 = vadd.f32 %v2440, %v2524
      %v2526 = vpop.f32.mrf.mxu0
      %v2527 = vpop.f32.mrf.mxu0
      %v2528 = vadd.f32 %v2440, %v2527
      %v2529 = vpop.f32.mrf.mxu0
      %2530 = vmatprep.mubr.bf16.mxu0 0
      %2531 = vmatmul.mubr.bf16.gmra.mxu0 %v2416
      %v2532 = vpop.f32.mrf.mxu0
      %v2533 = vadd.f32 %v2440, %v2532
      %v2534 = vpop.f32.mrf.mxu0
      %v2535 = vpop.f32.mrf.mxu0
      %v2536 = vadd.f32 %v2440, %v2535
      %v2537 = vpop.f32.mrf.mxu0
      %2538 = vmatprep.mubr.bf16.mxu0 0
      %2539 = vmatmul.mubr.bf16.gmra.mxu0 %v2417
      %v2540 = vpop.f32.mrf.mxu0
      %v2541 = vadd.f32 %v2440, %v2540
      %v2542 = vpop.f32.mrf.mxu0
      %v2543 = vpop.f32.mrf.mxu0
      %v2544 = vadd.f32 %v2440, %v2543
      %v2545 = vpop.f32.mrf.mxu0
      %2546 = vmatprep.mubr.bf16.mxu0 0
      %2547 = vmatmul.mubr.bf16.gmra.mxu0 %v2418
      %v2548 = vpop.f32.mrf.mxu0
      %v2549 = vadd.f32 %v2440, %v2548
      %v2550 = vpop.f32.mrf.mxu0
      %v2551 = vpop.f32.mrf.mxu0
      %v2552 = vadd.f32 %v2440, %v2551
      %v2553 = vpop.f32.mrf.mxu0
      %2554 = vdwg.mxu0
      %v2555 = vld [vmem:[%s23] sm:$0xf]
      %v2556 = vld [vmem:[%s23 + $0x4] sm:$0xf]
      %v2557 = vld [vmem:[%s23 + $0x8] sm:$0xf]
      %v2558 = vld [vmem:[%s23 + $0xc] sm:$0xf]
      %v2559 = vld [vmem:[%s23 + $0x10] sm:$0xf]
      %v2560 = vld [vmem:[%s23 + $0x14] sm:$0xf]
      %v2561 = vld [vmem:[%s23 + $0x18] sm:$0xf]
      %v2562 = vld [vmem:[%s23 + $0x1c] sm:$0xf]
      %v2563 = vld [vmem:[%s23 + $0x20] sm:$0xf]
      %v2564 = vld [vmem:[%s23 + $0x24] sm:$0xf]
      %v2565 = vld [vmem:[%s23 + $0x28] sm:$0xf]
      %v2566 = vld [vmem:[%s23 + $0x2c] sm:$0xf]
      %v2567 = vld [vmem:[%s23 + $0x30] sm:$0xf]
      %v2568 = vld [vmem:[%s23 + $0x34] sm:$0xf]
      %v2569 = vld [vmem:[%s23 + $0x38] sm:$0xf]
      %v2570 = vld [vmem:[%s23 + $0x3c] sm:$0xf]
      %v2571 = vld [vmem:[%s24] sm:$0x1]
      %v2573 = vlaneseq
      %v2574 = vshrl.u32 %v2573, 7
      %v2575 = vsub.s32 0, %v2574
      %v2576 = vrot.slane %v2571, %v2575
      %v2594 = vunpack.c.l.b16 %v2555
      %v2595 = vunpack.c.l.b16 %v2556
      %v2596 = vunpack.c.l.b16 %v2557
      %v2597 = vunpack.c.l.b16 %v2558
      %v2598 = vunpack.c.l.b16 %v2559
      %v2599 = vunpack.c.l.b16 %v2560
      %v2600 = vunpack.c.l.b16 %v2561
      %v2601 = vunpack.c.l.b16 %v2562
      %v2602 = vunpack.c.l.b16 %v2563
      %v2603 = vunpack.c.l.b16 %v2564
      %v2604 = vunpack.c.l.b16 %v2565
      %v2605 = vunpack.c.l.b16 %v2566
      %v2606 = vunpack.c.l.b16 %v2567
      %v2607 = vunpack.c.l.b16 %v2568
      %v2608 = vunpack.c.l.b16 %v2569
      %v2609 = vunpack.c.l.b16 %v2570
      %v2610 = vpack.c.b16 %v2595, %v2594
      %v2611 = vpack.c.b16 %v2597, %v2596
      %v2612 = vpack.c.b16 %v2599, %v2598
      %v2613 = vpack.c.b16 %v2601, %v2600
      %v2614 = vpack.c.b16 %v2603, %v2602
      %v2615 = vpack.c.b16 %v2605, %v2604
      %v2616 = vpack.c.b16 %v2607, %v2606
      %v2617 = vpack.c.b16 %v2609, %v2608
      %2626 = vmatprep.subr.bf16.mxu0 0
      %2627 = vmatpush1.bf16.msra.mxu0 %v2617
      %2628 = vmatprep.subr.bf16.mxu0 0
      %2629 = vmatpush1.bf16.msra.mxu0 %v2616
      %2630 = vmatprep.subr.bf16.mxu0 0
      %2631 = vmatpush1.bf16.msra.mxu0 %v2615
      %2632 = vmatprep.subr.bf16.mxu0 0
      %2633 = vmatpush1.bf16.msra.mxu0 %v2614
      %2634 = vmatprep.subr.bf16.mxu0 0
      %2635 = vmatpush1.bf16.msra.mxu0 %v2613
      %2636 = vmatprep.subr.bf16.mxu0 0
      %2637 = vmatpush1.bf16.msra.mxu0 %v2612
      %2638 = vmatprep.subr.bf16.mxu0 0
      %2639 = vmatpush1.bf16.msra.mxu0 %v2611
      %2640 = vmatprep.subr.bf16.mxu0 0
      %2641 = vmatpush1.bf16.msra.mxu0 %v2610
      %2642 = vmatprep.subr.bf16.mxu0 0
      %2643 = vmatpush2.bf16.msra.mxu0 0
      %2644 = vmatprep.subr.bf16.mxu0 0
      %2645 = vmatpush2.bf16.msra.mxu0 0
      %2646 = vmatprep.subr.bf16.mxu0 0
      %2647 = vmatpush2.bf16.msra.mxu0 0
      %2648 = vmatprep.subr.bf16.mxu0 0
      %2649 = vmatpush2.bf16.msra.mxu0 0
      %2650 = vmatprep.subr.bf16.mxu0 0
      %2651 = vmatpush2.bf16.msra.mxu0 0
      %2652 = vmatprep.subr.bf16.mxu0 0
      %2653 = vmatpush2.bf16.msra.mxu0 0
      %2654 = vmatprep.subr.bf16.mxu0 0
      %2655 = vmatpush2.bf16.msra.mxu0 0
      %2656 = vmatprep.subr.bf16.mxu0 0
      %2657 = vmatpush2.bf16.msra.mxu0 0
      %2658 = vmatprep.mubr.bf16.mxu0 0
      %2659 = vmatmul.mubr.bf16.gmra.mxu0 %v2415
      %v2660 = vpop.f32.mrf.mxu0
      %v2661 = vadd.f32 %v2576, %v2660
      %v2662 = vpop.f32.mrf.mxu0
      %v2663 = vpop.f32.mrf.mxu0
      %v2664 = vadd.f32 %v2576, %v2663
      %v2665 = vpop.f32.mrf.mxu0
      %2666 = vmatprep.mubr.bf16.mxu0 0
      %2667 = vmatmul.mubr.bf16.gmra.mxu0 %v2416
      %v2668 = vpop.f32.mrf.mxu0
      %v2669 = vadd.f32 %v2576, %v2668
      %v2670 = vpop.f32.mrf.mxu0
      %v2671 = vpop.f32.mrf.mxu0
      %v2672 = vadd.f32 %v2576, %v2671
      %v2673 = vpop.f32.mrf.mxu0
      %2674 = vmatprep.mubr.bf16.mxu0 0
      %2675 = vmatmul.mubr.bf16.gmra.mxu0 %v2417
      %v2676 = vpop.f32.mrf.mxu0
      %v2677 = vadd.f32 %v2576, %v2676
      %v2678 = vpop.f32.mrf.mxu0
      %v2679 = vpop.f32.mrf.mxu0
      %v2680 = vadd.f32 %v2576, %v2679
      %v2681 = vpop.f32.mrf.mxu0
      %2682 = vmatprep.mubr.bf16.mxu0 0
      %2683 = vmatmul.mubr.bf16.gmra.mxu0 %v2418
      %v2684 = vpop.f32.mrf.mxu0
      %v2685 = vadd.f32 %v2576, %v2684
      %v2686 = vpop.f32.mrf.mxu0
      %v2687 = vpop.f32.mrf.mxu0
      %v2688 = vadd.f32 %v2576, %v2687
      %v2689 = vpop.f32.mrf.mxu0
      %2690 = vdwg.mxu0
      %v2691 = vmax.f32 %v2661, -30.0
      %v2692 = vmax.f32 %v2664, -30.0
      %v2693 = vmax.f32 %v2669, -30.0
      %v2694 = vmax.f32 %v2672, -30.0
      %v2695 = vmax.f32 %v2677, -30.0
      %v2696 = vmax.f32 %v2680, -30.0
      %v2697 = vmax.f32 %v2685, -30.0
      %v2698 = vmax.f32 %v2688, -30.0
      %v2699 = vmin.f32 %v2691, 20.0
      %v2700 = vmin.f32 %v2692, 20.0
      %v2701 = vmin.f32 %v2693, 20.0
      %v2702 = vmin.f32 %v2694, 20.0
      %v2703 = vmin.f32 %v2695, 20.0
      %v2704 = vmin.f32 %v2696, 20.0
      %v2705 = vmin.f32 %v2697, 20.0
      %v2706 = vmin.f32 %v2698, 20.0
      %v2707 = vmul.f32 %v2699, 0.5
      %v2708 = vmul.f32 %v2700, 0.5
      %v2709 = vmul.f32 %v2701, 0.5
      %v2710 = vmul.f32 %v2702, 0.5
      %v2711 = vmul.f32 %v2703, 0.5
      %v2712 = vmul.f32 %v2704, 0.5
      %v2713 = vmul.f32 %v2705, 0.5
      %v2714 = vmul.f32 %v2706, 0.5
      %v2715 = vmul.f32 %v2707, 1.442695
      %v2716 = vpow.pop %v2715
      %v2717 = vmul.f32 %v2708, 1.442695
      %v2718 = vpow.pop %v2717
      %v2719 = vmul.f32 %v2709, 1.442695
      %v2720 = vpow.pop %v2719
      %v2721 = vmul.f32 %v2710, 1.442695
      %v2722 = vpow.pop %v2721
      %v2723 = vmul.f32 %v2711, 1.442695
      %v2724 = vpow.pop %v2723
      %v2725 = vmul.f32 %v2712, 1.442695
      %v2726 = vpow.pop %v2725
      %v2727 = vmul.f32 %v2713, 1.442695
      %v2728 = vpow.pop %v2727
      %v2729 = vmul.f32 %v2714, 1.442695
      %v2730 = vpow.pop %v2729
      %v2731 = vld [vmem:[%s830] sm:$0xff]
      %v2732 = vld [vmem:[%s830 + $0x8] sm:$0xff]
      %v2733 = vld [vmem:[%s830 + $0x10] sm:$0xff]
      %v2734 = vld [vmem:[%s830 + $0x18] sm:$0xff]
      %v2735 = vld [vmem:[%s830 + $0x20] sm:$0xff]
      %v2736 = vld [vmem:[%s830 + $0x28] sm:$0xff]
      %v2737 = vld [vmem:[%s830 + $0x30] sm:$0xff]
      %v2738 = vld [vmem:[%s830 + $0x38] sm:$0xff]
      %v2739 = vmul.f32 %v2716, %v2731
      %v2740 = vmul.f32 %v2718, %v2732
      %v2741 = vmul.f32 %v2720, %v2733
      %v2742 = vmul.f32 %v2722, %v2734
      %v2743 = vmul.f32 %v2724, %v2735
      %v2744 = vmul.f32 %v2726, %v2736
      %v2745 = vmul.f32 %v2728, %v2737
      %v2746 = vmul.f32 %v2730, %v2738
      %v2747 = vadd.f32 %v2525, %v2739
      %v2748 = vadd.f32 %v2528, %v2740
      %v2749 = vadd.f32 %v2533, %v2741
      %v2750 = vadd.f32 %v2536, %v2742
      %v2751 = vadd.f32 %v2541, %v2743
      %v2752 = vadd.f32 %v2544, %v2744
      %v2753 = vadd.f32 %v2549, %v2745
      %v2754 = vadd.f32 %v2552, %v2746
      %v2755 = vmul.f32 %v2747, 0.18215
      %v2756 = vmul.f32 %v2748, 0.18215
      %v2757 = vmul.f32 %v2749, 0.18215
      %v2758 = vmul.f32 %v2750, 0.18215
      %v2759 = vmul.f32 %v2751, 0.18215
      %v2760 = vmul.f32 %v2752, 0.18215
      %v2761 = vmul.f32 %v2753, 0.18215
      %v2762 = vmul.f32 %v2754, 0.18215
      %v2763 = vld [vmem:[%s842] sm:$0xff]
      %v2764 = vld [vmem:[%s842 + $0x8] sm:$0xff]
      %v2765 = vld [vmem:[%s842 + $0x10] sm:$0xff]
      %v2766 = vld [vmem:[%s842 + $0x18] sm:$0xff]
      %v2767 = vld [vmem:[%s842 + $0x20] sm:$0xff]
      %v2768 = vld [vmem:[%s842 + $0x28] sm:$0xff]
      %v2769 = vld [vmem:[%s842 + $0x30] sm:$0xff]
      %v2770 = vld [vmem:[%s842 + $0x38] sm:$0xff]
      %2772 = vset.pattern.permute.xlu0 0
      %2773 = vperm.xlu0 %2772, %v2763
      %v2774 = vpop.permute.xlu0 %2773
      %2777 = vset.pattern.permute.xlu0 0
      %2778 = vperm.xlu0 %2777, %v2764
      %v2779 = vpop.permute.xlu0 %2778
      %2782 = vset.pattern.permute.xlu0 0
      %2783 = vperm.xlu0 %2782, %v2765
      %v2784 = vpop.permute.xlu0 %2783
      %2787 = vset.pattern.permute.xlu0 0
      %2788 = vperm.xlu0 %2787, %v2766
      %v2789 = vpop.permute.xlu0 %2788
      %2792 = vset.pattern.permute.xlu0 0
      %2793 = vperm.xlu0 %2792, %v2767
      %v2794 = vpop.permute.xlu0 %2793
      %2797 = vset.pattern.permute.xlu0 0
      %2798 = vperm.xlu0 %2797, %v2768
      %v2799 = vpop.permute.xlu0 %2798
      %2802 = vset.pattern.permute.xlu0 0
      %2803 = vperm.xlu0 %2802, %v2769
      %v2804 = vpop.permute.xlu0 %2803
      %2807 = vset.pattern.permute.xlu0 0
      %2808 = vperm.xlu0 %2807, %v2770
      %v2809 = vpop.permute.xlu0 %2808
      %v2811 = vmul.f32 %v2774, %v2755
      %v2812 = vmul.f32 %v2779, %v2756
      %v2813 = vmul.f32 %v2784, %v2757
      %v2814 = vmul.f32 %v2789, %v2758
      %v2815 = vmul.f32 %v2794, %v2759
      %v2816 = vmul.f32 %v2799, %v2760
      %v2817 = vmul.f32 %v2804, %v2761
      %v2818 = vmul.f32 %v2809, %v2762
      %v2819 = vld [vmem:[%s848] sm:$0xff]
      %v2820 = vld [vmem:[%s848 + $0x8] sm:$0xff]
      %v2821 = vld [vmem:[%s848 + $0x10] sm:$0xff]
      %v2822 = vld [vmem:[%s848 + $0x18] sm:$0xff]
      %v2823 = vld [vmem:[%s848 + $0x20] sm:$0xff]
      %v2824 = vld [vmem:[%s848 + $0x28] sm:$0xff]
      %v2825 = vld [vmem:[%s848 + $0x30] sm:$0xff]
      %v2826 = vld [vmem:[%s848 + $0x38] sm:$0xff]
      %v2827 = vld [vmem:[%s836] sm:$0xff]
      %v2828 = vld [vmem:[%s836 + $0x8] sm:$0xff]
      %v2829 = vld [vmem:[%s836 + $0x10] sm:$0xff]
      %v2830 = vld [vmem:[%s836 + $0x18] sm:$0xff]
      %v2831 = vld [vmem:[%s836 + $0x20] sm:$0xff]
      %v2832 = vld [vmem:[%s836 + $0x28] sm:$0xff]
      %v2833 = vld [vmem:[%s836 + $0x30] sm:$0xff]
      %v2834 = vld [vmem:[%s836 + $0x38] sm:$0xff]
      %2836 = vset.pattern.permute.xlu0 0
      %2837 = vperm.xlu0 %2836, %v2819
      %v2838 = vpop.permute.xlu0 %2837
      %2841 = vset.pattern.permute.xlu0 0
      %2842 = vperm.xlu0 %2841, %v2820
      %v2843 = vpop.permute.xlu0 %2842
      %2846 = vset.pattern.permute.xlu0 0
      %2847 = vperm.xlu0 %2846, %v2821
      %v2848 = vpop.permute.xlu0 %2847
      %2851 = vset.pattern.permute.xlu0 0
      %2852 = vperm.xlu0 %2851, %v2822
      %v2853 = vpop.permute.xlu0 %2852
      %2856 = vset.pattern.permute.xlu0 0
      %2857 = vperm.xlu0 %2856, %v2823
      %v2858 = vpop.permute.xlu0 %2857
      %2861 = vset.pattern.permute.xlu0 0
      %2862 = vperm.xlu0 %2861, %v2824
      %v2863 = vpop.permute.xlu0 %2862
      %2866 = vset.pattern.permute.xlu0 0
      %2867 = vperm.xlu0 %2866, %v2825
      %v2868 = vpop.permute.xlu0 %2867
      %2871 = vset.pattern.permute.xlu0 0
      %2872 = vperm.xlu0 %2871, %v2826
      %v2873 = vpop.permute.xlu0 %2872
      %v2875 = vmul.f32 %v2838, %v2827
      %v2876 = vmul.f32 %v2843, %v2828
      %v2877 = vmul.f32 %v2848, %v2829
      %v2878 = vmul.f32 %v2853, %v2830
      %v2879 = vmul.f32 %v2858, %v2831
      %v2880 = vmul.f32 %v2863, %v2832
      %v2881 = vmul.f32 %v2868, %v2833
      %v2882 = vmul.f32 %v2873, %v2834
      %v2883 = vadd.f32 %v2811, %v2875
      %v2884 = vadd.f32 %v2812, %v2876
      %v2885 = vadd.f32 %v2813, %v2877
      %v2886 = vadd.f32 %v2814, %v2878
      %v2887 = vadd.f32 %v2815, %v2879
      %v2888 = vadd.f32 %v2816, %v2880
      %v2889 = vadd.f32 %v2817, %v2881
      %v2890 = vadd.f32 %v2818, %v2882
      %vm2891 = vcmask 31744
      %2892 = vst.msk [vmem:[%s854] sm:$0xff] %vm2891, %v2883
      %2893 = vst.msk [vmem:[%s854 + $0x8] sm:$0xff] %vm2891, %v2884
      %2894 = vst.msk [vmem:[%s854 + $0x10] sm:$0xff] %vm2891, %v2885
      %2895 = vst.msk [vmem:[%s854 + $0x18] sm:$0xff] %vm2891, %v2886
      %2896 = vst.msk [vmem:[%s854 + $0x20] sm:$0xff] %vm2891, %v2887
      %2897 = vst.msk [vmem:[%s854 + $0x28] sm:$0xff] %vm2891, %v2888
      %2898 = vst.msk [vmem:[%s854 + $0x30] sm:$0xff] %vm2891, %v2889
      %2899 = vst.msk [vmem:[%s854 + $0x38] sm:$0xff] %vm2891, %v2890
      %s2900 = smul.u32 8, %s36
      %p2901 = scmp.lt.s32.totalorder %s2900, 15
      %s2902 = scalar_select %p2901, %s2900, 15
      %s2903 = smul.addr %s2902, 8
      %s2904 = scalar_lea.vmem %s25, %s2903
      // Predicated region
      $region121: #{low_scale_encoder_forward.3} parent=119 // pred_check
        %p2905 = pneg %p604
      $region122: #{low_scale_encoder_forward.3} parent=119 // pred_check_branch
        %2907 = sbr.rel (%p2905) target = $region124
      $region123: #{low_scale_encoder_forward.3} parent=119 // pred_region
        %s2908 = smul.u32 8, %s36
      $region124: #{low_scale_encoder_forward.3} parent=119 // pred_fallthru
        _
    $region120: #{low_scale_encoder_forward.3} parent=5 // pred_fallthru
      _
    %p2909 = scmp.le.s32.totalorder 2, %s31
    // Predicated region
    $region125: #{low_scale_encoder_forward.3} parent=5 // pred_check
      %p2910 = pneg %p2909
    $region126: #{low_scale_encoder_forward.3} parent=5 // pred_check_branch
      %2912 = sbr.rel (%p2910) target = $region128
    $region127: #{low_scale_encoder_forward.3} parent=5 // pred_region
      %s2913 = ssub.s32 %s31, 2
      // Predicated region
      $region129: #{low_scale_encoder_forward.3} parent=127 // pred_check
        %p2914 = pneg %p610
      $region130: #{low_scale_encoder_forward.3} parent=127 // pred_check_branch
        %2916 = sbr.rel (%p2914) target = $region132
      $region131: #{low_scale_encoder_forward.3} parent=127 // pred_region
        %s2917 = smul.u32 8, %s37
        %p2918 = scmp.lt.s32.totalorder %s2917, 15
        %s2919 = scalar_select %p2918, %s2917, 15
        %s2920 = smul.addr %s2919, 8
        %s2921 = scalar_lea.vmem %s25, %s2920
      $region132: #{low_scale_encoder_forward.3} parent=127 // pred_fallthru
        _
    $region128: #{low_scale_encoder_forward.3} parent=5 // pred_fallthru
      _
  $region6: #{low_scale_encoder_forward.3} parent=0 // loop_footer
    %s35 = sadd.s32 1, %s31
  $region7: #{low_scale_encoder_forward.3} parent=0 // loop_footer_branch
    %30 = sbr.rel target = $region3
  $region8: #{low_scale_encoder_forward.3} parent=0 // loop_exit
    _

</llo_original>
